<compile_context>
chip_gen: v6e
topology: v6e:2x2x1
jax: 0.10.0
libtpu: 0.0.40
codegen_flags: <defaults>
</compile_context>

<pallas_src>
import jax
import jax.numpy as jnp
from jax import lax
from jax.experimental import pallas as pl
from jax.experimental.pallas import tpu as pltpu


_VMEM = pl.BlockSpec(memory_space=pltpu.MemorySpace.VMEM)


# ----------------------------------------------------------------------------
# Fused whole-network kernel factory
# ----------------------------------------------------------------------------
def _make_birnn_kernel(num_layers, T, B, H, E, out_dim, unroll):
    """Build a kernel:  x_emb, per-layer weights, dec_w, dec_b  ->  logits (B, out_dim).

    Per-layer operands:
      layer 0   : w_ih (E, 8H), whh_cat (H, 8H), b (1, 8H)
      layer l>0 : w_ih_f (H, 8H), w_ih_b (H, 8H), whh_cat (H, 8H), b (1, 8H)
    whh_cat = [w_hh_fwd | w_hh_bwd] on lanes; gate order is PyTorch's i, f, g, o.
    """
    G = 4 * H
    n_buf = 0 if num_layers == 1 else (1 if num_layers == 2 else 2)

    def kernel(*refs):
        refs = list(refs)
        pos = 0
        x_ref = refs[pos]; pos += 1
        layer_refs = []
        for l in range(num_layers):
            if l == 0:
                wih = (refs[pos],); pos += 1
            else:
                wih = (refs[pos], refs[pos + 1]); pos += 2
            whh_ref = refs[pos]; b_ref = refs[pos + 1]; pos += 2
            layer_refs.append((wih, whh_ref, b_ref))
        dec_w_ref = refs[pos]; dec_b_ref = refs[pos + 1]; pos += 2
        o_ref = refs[pos]; pos += 1
        gx_sc = refs[pos]; pos += 1
        ybufs = []
        for _ in range(n_buf):
            ybufs.append((refs[pos], refs[pos + 1])); pos += 2

        def cell(gates, c):
            # gates: (2B, 4H) with rows [fwd; bwd], cols [i | f | g | o]
            sif = jax.nn.sigmoid(gates[:, 0:2 * H])          # i, f lanes only
            g = jnp.tanh(gates[:, 2 * H:3 * H])
            o = jax.nn.sigmoid(gates[:, 3 * H:4 * H])
            c_new = sif[:, H:2 * H] * c + sif[:, 0:H] * g
            return o * jnp.tanh(c_new), c_new

        prev = None   # None => this layer reads the embedding input
        for l in range(num_layers):
            is_last = (l == num_layers - 1)
            wih, whh_ref, b_ref = layer_refs[l]

            # -- Hoisted input projection for BOTH directions (bias folded in). --
            if prev is None:
                x2d = x_ref[...].reshape(T * B, E)
                gx = jnp.dot(x2d, wih[0][...], preferred_element_type=jnp.float32)
            else:
                yf_in, yb_in = prev
                gx = (jnp.dot(yf_in[...].reshape(T * B, H), wih[0][...],
                              preferred_element_type=jnp.float32)
                      + jnp.dot(yb_in[...].reshape(T * B, H), wih[1][...],
                                preferred_element_type=jnp.float32))
            gx_sc[...] = (gx + b_ref[...]).reshape(T, B, 2 * G)

            whh = whh_ref[...]                               # (H, 8H), hoisted

            out_bufs = None if is_last else ybufs[l % max(n_buf, 1)]

            def write_step(t, hc, out_bufs=out_bufs):
                if out_bufs is not None:
                    yf_o, yb_o = out_bufs
                    yf_o[t] = hc[:B]                         # fwd output at time t
                    yb_o[T - 1 - t] = hc[B:]                 # bwd output at T-1-t

            def gates_from(gx_f, gx_b, hh):
                gf = gx_f[:, :G]                             # fwd gate pre-acts
                gb = gx_b[:, G:]                             # bwd gate pre-acts
                if hh is not None:
                    gf = gf + hh[:B, :G]
                    gb = gb + hh[B:, G:]
                return jnp.concatenate([gf, gb], axis=0)     # (2B, 4H)

            # -- Peeled t == 0 step: h = c = 0, so no recurrent matmul needed. --
            gates0 = gates_from(gx_sc[0], gx_sc[T - 1], None)
            hc0, c0 = cell(gates0, jnp.zeros((2 * B, H), jnp.float32))
            write_step(0, hc0)

            def step(t, carry, whh=whh, write_step=write_step,
                     gates_from=gates_from):
                hc, c = carry
                # One fused matmul for both directions.
                hh = jnp.dot(hc, whh, preferred_element_type=jnp.float32)   # (2B, 8H)
                gates = gates_from(gx_sc[t], gx_sc[T - 1 - t], hh)
                hc, c = cell(gates, c)
                write_step(t, hc)
                return (hc, c)

            hc_last, _ = lax.fori_loop(1, T, step, (hc0, c0), unroll=unroll)

            if is_last:
                # encoding = [y_f[0], y_b[0], y_f[T-1], y_b[T-1]]
                enc = jnp.concatenate(
                    [hc0[:B], hc_last[B:], hc_last[:B], hc0[B:]], axis=-1)  # (B, 4H)
                o_ref[...] = (jnp.dot(enc, dec_w_ref[...],
                                      preferred_element_type=jnp.float32)
                              + dec_b_ref[...])
            else:
                prev = out_bufs

    return kernel


# ----------------------------------------------------------------------------
# Wrapper
# ----------------------------------------------------------------------------
def birnn_forward(params, inputs):
    """inputs: (batch, seq) int32 token ids -> logits (batch, 2)."""
    B0, T = inputs.shape
    B = max(8, ((B0 + 7) // 8) * 8)            # pad batch to a full sublane tile
    if B != B0:
        inputs = jnp.pad(inputs, ((0, B - B0), (0, 0)))

    idx = inputs.T                                       # (T, B)
    x = jnp.take(params["embedding"], idx, axis=0)       # (T, B, E)  glue gather
    E = x.shape[-1]

    layers = params["lstm"]
    num_layers = len(layers)
    H = layers[0]["w_hh_f"].shape[0]
    dec_w, dec_b = params["dec_w"], params["dec_b"]
    out_dim = dec_w.shape[1]

    # Flatten operands (weights repacked so the kernel never concatenates activations).
    operands = [x]
    for l, p in enumerate(layers):
        if l == 0:
            operands.append(p["w_ih"])                                   # (E, 8H)
        else:
            operands.append(p["w_ih"][:H])                               # fwd-half rows
            operands.append(p["w_ih"][H:])                               # bwd-half rows
        operands.append(jnp.concatenate([p["w_hh_f"], p["w_hh_b"]], axis=1))  # (H, 8H)
        operands.append(p["b"])                                          # (1, 8H)
    operands += [dec_w, dec_b]

    n_buf = 0 if num_layers == 1 else (1 if num_layers == 2 else 2)
    scratch = [pltpu.VMEM((T, B, 8 * H), jnp.float32)]                   # hoisted gx
    for _ in range(n_buf):
        scratch += [pltpu.VMEM((T, B, H), jnp.float32),                  # y_fwd
                    pltpu.VMEM((T, B, H), jnp.float32)]                  # y_bwd

    # VMEM budget: resident operands + output + scratch, with headroom, capped at
    # v7x's 64 MiB physical VMEM.
    total_bytes = sum(int(op.size) * 4 for op in operands) + B * out_dim * 4
    total_bytes += T * B * 8 * H * 4 + n_buf * 2 * T * B * H * 4
    vmem_limit = int(min(64 * 2**20, max(32 * 2**20, 2 * total_bytes + (2 << 20))))

    unroll = True if T <= 16 else 8
    kernel = _make_birnn_kernel(num_layers, T, B, H, E, out_dim, unroll)

    logits = pl.pallas_call(
        kernel,
        out_shape=jax.ShapeDtypeStruct((B, out_dim), jnp.float32),
        in_specs=[_VMEM] * len(operands),
        out_specs=_VMEM,
        scratch_shapes=scratch,
        compiler_params=pltpu.CompilerParams(vmem_limit_bytes=vmem_limit),
    )(*operands)
    return logits[:B0]


# ----------------------------------------------------------------------------
# Pure-JAX reference (same math) for a correctness check
# ----------------------------------------------------------------------------
def _lstm_dir_ref(x, w_ih, w_hh, b):
    T, B, _ = x.shape
    H = w_hh.shape[0]

    def step(carry, x_t):
        h, c = carry
        gates = x_t @ w_ih + h @ w_hh + b
        i_g = jax.nn.sigmoid(gates[:, 0 * H:1 * H])
        f_g = jax.nn.sigmoid(gates[:, 1 * H:2 * H])
        g_g = jnp.tanh(gates[:, 2 * H:3 * H])
        o_g = jax.nn.sigmoid(gates[:, 3 * H:4 * H])
        c = f_g * c + i_g * g_g
        h = o_g * jnp.tanh(c)
        return (h, c), h

    init = (jnp.zeros((B, H), jnp.float32), jnp.zeros((B, H), jnp.float32))
    _, ys = lax.scan(step, init, x)
    return ys


def birnn_forward_ref(params, inputs):
    idx = inputs.T
    x = jnp.take(params["embedding"], idx, axis=0)
    for p in params["lstm"]:
        H = p["w_hh_f"].shape[0]
        G = 4 * H
        y_f = _lstm_dir_ref(x, p["w_ih"][:, :G], p["w_hh_f"], p["b"][:, :G])
        y_b = _lstm_dir_ref(x[::-1], p["w_ih"][:, G:], p["w_hh_b"], p["b"][:, G:])[::-1]
        x = jnp.concatenate([y_f, y_b], axis=-1)
    encoding = jnp.concatenate([x[0], x[-1]], axis=-1)
    return encoding @ params["dec_w"] + params["dec_b"]


# ----------------------------------------------------------------------------
# Deterministic parameter init (shapes follow nn.Embedding / nn.LSTM / nn.Linear)
# ----------------------------------------------------------------------------
def init_params(key, vocab_size, embed_size, num_hiddens, num_layers):
    H = num_hiddens
    scale = 1.0 / jnp.sqrt(jnp.float32(H))
    keys = jax.random.split(key, 2 + num_layers)

    def u(k, shape):
        return jax.random.uniform(k, shape, jnp.float32, -scale, scale)

    params = {
        "embedding": jax.random.normal(keys[0], (vocab_size, embed_size), jnp.float32) * 0.1,
        "lstm": [],
    }
    for layer in range(num_layers):
        in_size = embed_size if layer == 0 else 2 * H
        lk = jax.random.split(keys[2 + layer], 8)
        # torch weight_ih: (4H, I) -> stored transposed (I, 4H); same for w_hh.
        w_ih_f = u(lk[0], (in_size, 4 * H))
        w_hh_f = u(lk[1], (H, 4 * H))
        b_f = u(lk[2], (1, 4 * H)) + u(lk[3], (1, 4 * H))   # b_ih + b_hh
        w_ih_b = u(lk[4], (in_size, 4 * H))
        w_hh_b = u(lk[5], (H, 4 * H))
        b_b = u(lk[6], (1, 4 * H)) + u(lk[7], (1, 4 * H))
        params["lstm"].append({
            "w_ih": jnp.concatenate([w_ih_f, w_ih_b], axis=1),   # (I, 8H)  [fwd | bwd]
            "w_hh_f": w_hh_f,
            "w_hh_b": w_hh_b,
            "b": jnp.concatenate([b_f, b_b], axis=1),            # (1, 8H)
        })

    dk = jax.random.split(keys[1], 2)
    params["dec_w"] = u(dk[0], (4 * H, 2))
    params["dec_b"] = u(dk[1], (1, 2))
    return params


# ----------------------------------------------------------------------------
if __name__ == "__main__":
    vocab_size = 50
    embed_size = 32
    num_hiddens = 32
    num_layers = 2
    batch, seq_len = 2, 8

    key = jax.random.PRNGKey(0)
    pkey, ikey = jax.random.split(key)
    params = init_params(pkey, vocab_size, embed_size, num_hiddens, num_layers)

    # inputs: (batch, seq) token ids, as given to BiRNN.forward
    inputs = jax.random.randint(ikey, (batch, seq_len), 0, vocab_size, dtype=jnp.int32)

    out = jax.block_until_ready(birnn_forward(params, inputs))
    assert out.shape == (batch, 2), out.shape

    ref = jax.block_until_ready(birnn_forward_ref(params, inputs))
    assert jnp.allclose(out, ref, atol=1e-3, rtol=1e-3), (out, ref)

    print("KERNEL_OK")
</pallas_src>

<mosaic_0001>
module attributes {stable_mosaic.version = 11 : i64} {
  func.func @kernel(%arg0: memref<8x8x32xf32, #tpu.memory_space<vmem>>, %arg1: memref<32x256xf32, #tpu.memory_space<vmem>>, %arg2: memref<32x256xf32, #tpu.memory_space<vmem>>, %arg3: memref<1x256xf32, #tpu.memory_space<vmem>>, %arg4: memref<32x256xf32, #tpu.memory_space<vmem>>, %arg5: memref<32x256xf32, #tpu.memory_space<vmem>>, %arg6: memref<32x256xf32, #tpu.memory_space<vmem>>, %arg7: memref<1x256xf32, #tpu.memory_space<vmem>>, %arg8: memref<128x2xf32, #tpu.memory_space<vmem>>, %arg9: memref<1x2xf32, #tpu.memory_space<vmem>>, %arg10: memref<8x2xf32, #tpu.memory_space<vmem>>, %arg11: memref<8x8x256xf32, #tpu.memory_space<vmem>>, %arg12: memref<8x8x32xf32, #tpu.memory_space<vmem>>, %arg13: memref<8x8x32xf32, #tpu.memory_space<vmem>>) attributes {dimension_semantics = [], scalar_prefetch = 0 : i64, scratch_operands = 3 : i64, tpu.core_type = #tpu.core_type<tc>} {
    %c0 = arith.constant 0 : index
    %c0_0 = arith.constant 0 : index
    %c0_1 = arith.constant 0 : index
    %0 = vector.load %arg0[%c0, %c0_0, %c0_1] : memref<8x8x32xf32, #tpu.memory_space<vmem>>, vector<8x8x32xf32>
    %1 = vector.shape_cast %0 : vector<8x8x32xf32> to vector<64x32xf32>
    %c0_2 = arith.constant 0 : index
    %c0_3 = arith.constant 0 : index
    %2 = vector.load %arg1[%c0_2, %c0_3] : memref<32x256xf32, #tpu.memory_space<vmem>>, vector<32x256xf32>
    %cst = arith.constant dense<0.000000e+00> : vector<64x256xf32>
    %3 = tpu.matmul %1, %2, %cst {dimension_numbers = #tpu.dot_dimension_numbers<[1], [0], [0], [1], [0, 0, 1, 1], [], []>} : vector<64x32xf32>, vector<32x256xf32>, vector<64x256xf32> -> vector<64x256xf32>
    %c0_4 = arith.constant 0 : index
    %c0_5 = arith.constant 0 : index
    %4 = vector.load %arg3[%c0_4, %c0_5] : memref<1x256xf32, #tpu.memory_space<vmem>>, vector<1x256xf32>
    %5 = vector.broadcast %4 : vector<1x256xf32> to vector<64x256xf32>
    %6 = arith.addf %3, %5 : vector<64x256xf32>
    %7 = vector.shape_cast %6 : vector<64x256xf32> to vector<8x8x256xf32>
    %c0_6 = arith.constant 0 : index
    %c0_7 = arith.constant 0 : index
    %c0_8 = arith.constant 0 : index
    %8 = vector.load %arg11[%c0_6, %c0_7, %c0_8] : memref<8x8x256xf32, #tpu.memory_space<vmem>>, vector<8x8x256xf32>
    tpu.vector_store %arg11[%c0_6, %c0_7, %c0_8], %7 {strides = array<i32>} : memref<8x8x256xf32, #tpu.memory_space<vmem>>, vector<8x8x256xf32>,
    %c0_9 = arith.constant 0 : index
    %c0_10 = arith.constant 0 : index
    %9 = vector.load %arg2[%c0_9, %c0_10] : memref<32x256xf32, #tpu.memory_space<vmem>>, vector<32x256xf32>
    %c0_11 = arith.constant 0 : index
    %c0_12 = arith.constant 0 : index
    %c0_13 = arith.constant 0 : index
    %10 = vector.load %arg11[%c0_11, %c0_12, %c0_13] : memref<8x8x256xf32, #tpu.memory_space<vmem>>, vector<1x8x256xf32>
    %11 = vector.shape_cast %10 : vector<1x8x256xf32> to vector<8x256xf32>
    %c7 = arith.constant 7 : index
    %c0_14 = arith.constant 0 : index
    %c0_15 = arith.constant 0 : index
    %12 = vector.load %arg11[%c7, %c0_14, %c0_15] : memref<8x8x256xf32, #tpu.memory_space<vmem>>, vector<1x8x256xf32>
    %13 = vector.shape_cast %12 : vector<1x8x256xf32> to vector<8x256xf32>
    %14 = vector.extract_strided_slice %11 {offsets = [0, 0], sizes = [8, 128], strides = [1, 1]} : vector<8x256xf32> to vector<8x128xf32>
    %15 = vector.extract_strided_slice %13 {offsets = [0, 128], sizes = [8, 128], strides = [1, 1]} : vector<8x256xf32> to vector<8x128xf32>
    %16 = tpu.concatenate %14, %15 in 0 : vector<8x128xf32>, vector<8x128xf32> -> vector<16x128xf32>
    %cst_16 = arith.constant 0.000000e+00 : f32
    %17 = vector.broadcast %cst_16 : f32 to vector<16x32xf32>
    %18 = vector.extract_strided_slice %16 {offsets = [0, 0], sizes = [16, 64], strides = [1, 1]} : vector<16x128xf32> to vector<16x64xf32>
    %19 = arith.negf %18 : vector<16x64xf32>
    %20 = math.exp %19 : vector<16x64xf32>
    %cst_17 = arith.constant 1.000000e+00 : f32
    %21 = vector.broadcast %cst_17 : f32 to vector<16x64xf32>
    %22 = arith.addf %21, %20 : vector<16x64xf32>
    %23 = arith.divf %21, %22 : vector<16x64xf32>
    %24 = vector.extract_strided_slice %16 {offsets = [0, 64], sizes = [16, 32], strides = [1, 1]} : vector<16x128xf32> to vector<16x32xf32>
    %25 = math.tanh %24 : vector<16x32xf32>
    %26 = vector.extract_strided_slice %16 {offsets = [0, 96], sizes = [16, 32], strides = [1, 1]} : vector<16x128xf32> to vector<16x32xf32>
    %27 = arith.negf %26 : vector<16x32xf32>
    %28 = math.exp %27 : vector<16x32xf32>
    %cst_18 = arith.constant 1.000000e+00 : f32
    %29 = vector.broadcast %cst_18 : f32 to vector<16x32xf32>
    %30 = arith.addf %29, %28 : vector<16x32xf32>
    %31 = arith.divf %29, %30 : vector<16x32xf32>
    %32 = vector.extract_strided_slice %23 {offsets = [0, 32], sizes = [16, 32], strides = [1, 1]} : vector<16x64xf32> to vector<16x32xf32>
    %33 = arith.mulf %32, %17 : vector<16x32xf32>
    %34 = vector.extract_strided_slice %23 {offsets = [0, 0], sizes = [16, 32], strides = [1, 1]} : vector<16x64xf32> to vector<16x32xf32>
    %35 = arith.mulf %34, %25 : vector<16x32xf32>
    %36 = arith.addf %33, %35 : vector<16x32xf32>
    %37 = math.tanh %36 : vector<16x32xf32>
    %38 = arith.mulf %31, %37 : vector<16x32xf32>
    %39 = vector.extract_strided_slice %38 {offsets = [0, 0], sizes = [8, 32], strides = [1, 1]} : vector<16x32xf32> to vector<8x32xf32>
    %c0_19 = arith.constant 0 : index
    %c0_20 = arith.constant 0 : index
    %c0_21 = arith.constant 0 : index
    %40 = vector.load %arg12[%c0_19, %c0_20, %c0_21] : memref<8x8x32xf32, #tpu.memory_space<vmem>>, vector<1x8x32xf32>
    %41 = vector.shape_cast %40 : vector<1x8x32xf32> to vector<8x32xf32>
    %42 = vector.shape_cast %39 : vector<8x32xf32> to vector<1x8x32xf32>
    tpu.vector_store %arg12[%c0_19, %c0_20, %c0_21], %42 {strides = array<i32>} : memref<8x8x32xf32, #tpu.memory_space<vmem>>, vector<1x8x32xf32>,
    %43 = vector.extract_strided_slice %38 {offsets = [8, 0], sizes = [8, 32], strides = [1, 1]} : vector<16x32xf32> to vector<8x32xf32>
    %c7_22 = arith.constant 7 : index
    %c0_23 = arith.constant 0 : index
    %c0_24 = arith.constant 0 : index
    %44 = vector.load %arg13[%c7_22, %c0_23, %c0_24] : memref<8x8x32xf32, #tpu.memory_space<vmem>>, vector<1x8x32xf32>
    %45 = vector.shape_cast %44 : vector<1x8x32xf32> to vector<8x32xf32>
    %46 = vector.shape_cast %43 : vector<8x32xf32> to vector<1x8x32xf32>
    tpu.vector_store %arg13[%c7_22, %c0_23, %c0_24], %46 {strides = array<i32>} : memref<8x8x32xf32, #tpu.memory_space<vmem>>, vector<1x8x32xf32>,
    %c1_i32 = arith.constant 1 : i32
    %cst_25 = arith.constant dense<0.000000e+00> : vector<16x256xf32>
    %47 = tpu.matmul %38, %9, %cst_25 {dimension_numbers = #tpu.dot_dimension_numbers<[1], [0], [0], [1], [0, 0, 1, 1], [], []>} : vector<16x32xf32>, vector<32x256xf32>, vector<16x256xf32> -> vector<16x256xf32>
    %48 = arith.index_cast %c1_i32 : i32 to index
    %c0_26 = arith.constant 0 : index
    %c0_27 = arith.constant 0 : index
    %49 = vector.load %arg11[%48, %c0_26, %c0_27] : memref<8x8x256xf32, #tpu.memory_space<vmem>>, vector<1x8x256xf32>
    %50 = vector.shape_cast %49 : vector<1x8x256xf32> to vector<8x256xf32>
    %c7_i32 = arith.constant 7 : i32
    %51 = arith.subi %c7_i32, %c1_i32 : i32
    %52 = arith.index_cast %51 : i32 to index
    %c0_28 = arith.constant 0 : index
    %c0_29 = arith.constant 0 : index
    %53 = vector.load %arg11[%52, %c0_28, %c0_29] : memref<8x8x256xf32, #tpu.memory_space<vmem>>, vector<1x8x256xf32>
    %54 = vector.shape_cast %53 : vector<1x8x256xf32> to vector<8x256xf32>
    %55 = vector.extract_strided_slice %50 {offsets = [0, 0], sizes = [8, 128], strides = [1, 1]} : vector<8x256xf32> to vector<8x128xf32>
    %56 = vector.extract_strided_slice %54 {offsets = [0, 128], sizes = [8, 128], strides = [1, 1]} : vector<8x256xf32> to vector<8x128xf32>
    %57 = vector.extract_strided_slice %47 {offsets = [0, 0], sizes = [8, 128], strides = [1, 1]} : vector<16x256xf32> to vector<8x128xf32>
    %58 = arith.addf %55, %57 : vector<8x128xf32>
    %59 = vector.extract_strided_slice %47 {offsets = [8, 128], sizes = [8, 128], strides = [1, 1]} : vector<16x256xf32> to vector<8x128xf32>
    %60 = arith.addf %56, %59 : vector<8x128xf32>
    %61 = tpu.concatenate %58, %60 in 0 : vector<8x128xf32>, vector<8x128xf32> -> vector<16x128xf32>
    %62 = vector.extract_strided_slice %61 {offsets = [0, 0], sizes = [16, 64], strides = [1, 1]} : vector<16x128xf32> to vector<16x64xf32>
    %63 = arith.negf %62 : vector<16x64xf32>
    %64 = math.exp %63 : vector<16x64xf32>
    %cst_30 = arith.constant 1.000000e+00 : f32
    %65 = vector.broadcast %cst_30 : f32 to vector<16x64xf32>
    %66 = arith.addf %65, %64 : vector<16x64xf32>
    %67 = arith.divf %65, %66 : vector<16x64xf32>
    %68 = vector.extract_strided_slice %61 {offsets = [0, 64], sizes = [16, 32], strides = [1, 1]} : vector<16x128xf32> to vector<16x32xf32>
    %69 = math.tanh %68 : vector<16x32xf32>
    %70 = vector.extract_strided_slice %61 {offsets = [0, 96], sizes = [16, 32], strides = [1, 1]} : vector<16x128xf32> to vector<16x32xf32>
    %71 = arith.negf %70 : vector<16x32xf32>
    %72 = math.exp %71 : vector<16x32xf32>
    %cst_31 = arith.constant 1.000000e+00 : f32
    %73 = vector.broadcast %cst_31 : f32 to vector<16x32xf32>
    %74 = arith.addf %73, %72 : vector<16x32xf32>
    %75 = arith.divf %73, %74 : vector<16x32xf32>
    %76 = vector.extract_strided_slice %67 {offsets = [0, 32], sizes = [16, 32], strides = [1, 1]} : vector<16x64xf32> to vector<16x32xf32>
    %77 = arith.mulf %76, %36 : vector<16x32xf32>
    %78 = vector.extract_strided_slice %67 {offsets = [0, 0], sizes = [16, 32], strides = [1, 1]} : vector<16x64xf32> to vector<16x32xf32>
    %79 = arith.mulf %78, %69 : vector<16x32xf32>
    %80 = arith.addf %77, %79 : vector<16x32xf32>
    %81 = math.tanh %80 : vector<16x32xf32>
    %82 = arith.mulf %75, %81 : vector<16x32xf32>
    %83 = vector.extract_strided_slice %82 {offsets = [0, 0], sizes = [8, 32], strides = [1, 1]} : vector<16x32xf32> to vector<8x32xf32>
    %84 = arith.index_cast %c1_i32 : i32 to index
    %c0_32 = arith.constant 0 : index
    %c0_33 = arith.constant 0 : index
    %85 = vector.load %arg12[%84, %c0_32, %c0_33] : memref<8x8x32xf32, #tpu.memory_space<vmem>>, vector<1x8x32xf32>
    %86 = vector.shape_cast %85 : vector<1x8x32xf32> to vector<8x32xf32>
    %87 = vector.shape_cast %83 : vector<8x32xf32> to vector<1x8x32xf32>
    tpu.vector_store %arg12[%84, %c0_32, %c0_33], %87 {strides = array<i32>} : memref<8x8x32xf32, #tpu.memory_space<vmem>>, vector<1x8x32xf32>,
    %88 = vector.extract_strided_slice %82 {offsets = [8, 0], sizes = [8, 32], strides = [1, 1]} : vector<16x32xf32> to vector<8x32xf32>
    %c7_i32_34 = arith.constant 7 : i32
    %89 = arith.subi %c7_i32_34, %c1_i32 : i32
    %90 = arith.index_cast %89 : i32 to index
    %c0_35 = arith.constant 0 : index
    %c0_36 = arith.constant 0 : index
    %91 = vector.load %arg13[%90, %c0_35, %c0_36] : memref<8x8x32xf32, #tpu.memory_space<vmem>>, vector<1x8x32xf32>
    %92 = vector.shape_cast %91 : vector<1x8x32xf32> to vector<8x32xf32>
    %93 = vector.shape_cast %88 : vector<8x32xf32> to vector<1x8x32xf32>
    tpu.vector_store %arg13[%90, %c0_35, %c0_36], %93 {strides = array<i32>} : memref<8x8x32xf32, #tpu.memory_space<vmem>>, vector<1x8x32xf32>,
    %c2_i32 = arith.constant 2 : i32
    %cst_37 = arith.constant dense<0.000000e+00> : vector<16x256xf32>
    %94 = tpu.matmul %82, %9, %cst_37 {dimension_numbers = #tpu.dot_dimension_numbers<[1], [0], [0], [1], [0, 0, 1, 1], [], []>} : vector<16x32xf32>, vector<32x256xf32>, vector<16x256xf32> -> vector<16x256xf32>
    %95 = arith.index_cast %c2_i32 : i32 to index
    %c0_38 = arith.constant 0 : index
    %c0_39 = arith.constant 0 : index
    %96 = vector.load %arg11[%95, %c0_38, %c0_39] : memref<8x8x256xf32, #tpu.memory_space<vmem>>, vector<1x8x256xf32>
    %97 = vector.shape_cast %96 : vector<1x8x256xf32> to vector<8x256xf32>
    %c7_i32_40 = arith.constant 7 : i32
    %98 = arith.subi %c7_i32_40, %c2_i32 : i32
    %99 = arith.index_cast %98 : i32 to index
    %c0_41 = arith.constant 0 : index
    %c0_42 = arith.constant 0 : index
    %100 = vector.load %arg11[%99, %c0_41, %c0_42] : memref<8x8x256xf32, #tpu.memory_space<vmem>>, vector<1x8x256xf32>
    %101 = vector.shape_cast %100 : vector<1x8x256xf32> to vector<8x256xf32>
    %102 = vector.extract_strided_slice %97 {offsets = [0, 0], sizes = [8, 128], strides = [1, 1]} : vector<8x256xf32> to vector<8x128xf32>
    %103 = vector.extract_strided_slice %101 {offsets = [0, 128], sizes = [8, 128], strides = [1, 1]} : vector<8x256xf32> to vector<8x128xf32>
    %104 = vector.extract_strided_slice %94 {offsets = [0, 0], sizes = [8, 128], strides = [1, 1]} : vector<16x256xf32> to vector<8x128xf32>
    %105 = arith.addf %102, %104 : vector<8x128xf32>
    %106 = vector.extract_strided_slice %94 {offsets = [8, 128], sizes = [8, 128], strides = [1, 1]} : vector<16x256xf32> to vector<8x128xf32>
    %107 = arith.addf %103, %106 : vector<8x128xf32>
    %108 = tpu.concatenate %105, %107 in 0 : vector<8x128xf32>, vector<8x128xf32> -> vector<16x128xf32>
    %109 = vector.extract_strided_slice %108 {offsets = [0, 0], sizes = [16, 64], strides = [1, 1]} : vector<16x128xf32> to vector<16x64xf32>
    %110 = arith.negf %109 : vector<16x64xf32>
    %111 = math.exp %110 : vector<16x64xf32>
    %cst_43 = arith.constant 1.000000e+00 : f32
    %112 = vector.broadcast %cst_43 : f32 to vector<16x64xf32>
    %113 = arith.addf %112, %111 : vector<16x64xf32>
    %114 = arith.divf %112, %113 : vector<16x64xf32>
    %115 = vector.extract_strided_slice %108 {offsets = [0, 64], sizes = [16, 32], strides = [1, 1]} : vector<16x128xf32> to vector<16x32xf32>
    %116 = math.tanh %115 : vector<16x32xf32>
    %117 = vector.extract_strided_slice %108 {offsets = [0, 96], sizes = [16, 32], strides = [1, 1]} : vector<16x128xf32> to vector<16x32xf32>
    %118 = arith.negf %117 : vector<16x32xf32>
    %119 = math.exp %118 : vector<16x32xf32>
    %cst_44 = arith.constant 1.000000e+00 : f32
    %120 = vector.broadcast %cst_44 : f32 to vector<16x32xf32>
    %121 = arith.addf %120, %119 : vector<16x32xf32>
    %122 = arith.divf %120, %121 : vector<16x32xf32>
    %123 = vector.extract_strided_slice %114 {offsets = [0, 32], sizes = [16, 32], strides = [1, 1]} : vector<16x64xf32> to vector<16x32xf32>
    %124 = arith.mulf %123, %80 : vector<16x32xf32>
    %125 = vector.extract_strided_slice %114 {offsets = [0, 0], sizes = [16, 32], strides = [1, 1]} : vector<16x64xf32> to vector<16x32xf32>
    %126 = arith.mulf %125, %116 : vector<16x32xf32>
    %127 = arith.addf %124, %126 : vector<16x32xf32>
    %128 = math.tanh %127 : vector<16x32xf32>
    %129 = arith.mulf %122, %128 : vector<16x32xf32>
    %130 = vector.extract_strided_slice %129 {offsets = [0, 0], sizes = [8, 32], strides = [1, 1]} : vector<16x32xf32> to vector<8x32xf32>
    %131 = arith.index_cast %c2_i32 : i32 to index
    %c0_45 = arith.constant 0 : index
    %c0_46 = arith.constant 0 : index
    %132 = vector.load %arg12[%131, %c0_45, %c0_46] : memref<8x8x32xf32, #tpu.memory_space<vmem>>, vector<1x8x32xf32>
    %133 = vector.shape_cast %132 : vector<1x8x32xf32> to vector<8x32xf32>
    %134 = vector.shape_cast %130 : vector<8x32xf32> to vector<1x8x32xf32>
    tpu.vector_store %arg12[%131, %c0_45, %c0_46], %134 {strides = array<i32>} : memref<8x8x32xf32, #tpu.memory_space<vmem>>, vector<1x8x32xf32>,
    %135 = vector.extract_strided_slice %129 {offsets = [8, 0], sizes = [8, 32], strides = [1, 1]} : vector<16x32xf32> to vector<8x32xf32>
    %c7_i32_47 = arith.constant 7 : i32
    %136 = arith.subi %c7_i32_47, %c2_i32 : i32
    %137 = arith.index_cast %136 : i32 to index
    %c0_48 = arith.constant 0 : index
    %c0_49 = arith.constant 0 : index
    %138 = vector.load %arg13[%137, %c0_48, %c0_49] : memref<8x8x32xf32, #tpu.memory_space<vmem>>, vector<1x8x32xf32>
    %139 = vector.shape_cast %138 : vector<1x8x32xf32> to vector<8x32xf32>
    %140 = vector.shape_cast %135 : vector<8x32xf32> to vector<1x8x32xf32>
    tpu.vector_store %arg13[%137, %c0_48, %c0_49], %140 {strides = array<i32>} : memref<8x8x32xf32, #tpu.memory_space<vmem>>, vector<1x8x32xf32>,
    %c3_i32 = arith.constant 3 : i32
    %cst_50 = arith.constant dense<0.000000e+00> : vector<16x256xf32>
    %141 = tpu.matmul %129, %9, %cst_50 {dimension_numbers = #tpu.dot_dimension_numbers<[1], [0], [0], [1], [0, 0, 1, 1], [], []>} : vector<16x32xf32>, vector<32x256xf32>, vector<16x256xf32> -> vector<16x256xf32>
    %142 = arith.index_cast %c3_i32 : i32 to index
    %c0_51 = arith.constant 0 : index
    %c0_52 = arith.constant 0 : index
    %143 = vector.load %arg11[%142, %c0_51, %c0_52] : memref<8x8x256xf32, #tpu.memory_space<vmem>>, vector<1x8x256xf32>
    %144 = vector.shape_cast %143 : vector<1x8x256xf32> to vector<8x256xf32>
    %c7_i32_53 = arith.constant 7 : i32
    %145 = arith.subi %c7_i32_53, %c3_i32 : i32
    %146 = arith.index_cast %145 : i32 to index
    %c0_54 = arith.constant 0 : index
    %c0_55 = arith.constant 0 : index
    %147 = vector.load %arg11[%146, %c0_54, %c0_55] : memref<8x8x256xf32, #tpu.memory_space<vmem>>, vector<1x8x256xf32>
    %148 = vector.shape_cast %147 : vector<1x8x256xf32> to vector<8x256xf32>
    %149 = vector.extract_strided_slice %144 {offsets = [0, 0], sizes = [8, 128], strides = [1, 1]} : vector<8x256xf32> to vector<8x128xf32>
    %150 = vector.extract_strided_slice %148 {offsets = [0, 128], sizes = [8, 128], strides = [1, 1]} : vector<8x256xf32> to vector<8x128xf32>
    %151 = vector.extract_strided_slice %141 {offsets = [0, 0], sizes = [8, 128], strides = [1, 1]} : vector<16x256xf32> to vector<8x128xf32>
    %152 = arith.addf %149, %151 : vector<8x128xf32>
    %153 = vector.extract_strided_slice %141 {offsets = [8, 128], sizes = [8, 128], strides = [1, 1]} : vector<16x256xf32> to vector<8x128xf32>
    %154 = arith.addf %150, %153 : vector<8x128xf32>
    %155 = tpu.concatenate %152, %154 in 0 : vector<8x128xf32>, vector<8x128xf32> -> vector<16x128xf32>
    %156 = vector.extract_strided_slice %155 {offsets = [0, 0], sizes = [16, 64], strides = [1, 1]} : vector<16x128xf32> to vector<16x64xf32>
    %157 = arith.negf %156 : vector<16x64xf32>
    %158 = math.exp %157 : vector<16x64xf32>
    %cst_56 = arith.constant 1.000000e+00 : f32
    %159 = vector.broadcast %cst_56 : f32 to vector<16x64xf32>
    %160 = arith.addf %159, %158 : vector<16x64xf32>
    %161 = arith.divf %159, %160 : vector<16x64xf32>
    %162 = vector.extract_strided_slice %155 {offsets = [0, 64], sizes = [16, 32], strides = [1, 1]} : vector<16x128xf32> to vector<16x32xf32>
    %163 = math.tanh %162 : vector<16x32xf32>
    %164 = vector.extract_strided_slice %155 {offsets = [0, 96], sizes = [16, 32], strides = [1, 1]} : vector<16x128xf32> to vector<16x32xf32>
    %165 = arith.negf %164 : vector<16x32xf32>
    %166 = math.exp %165 : vector<16x32xf32>
    %cst_57 = arith.constant 1.000000e+00 : f32
    %167 = vector.broadcast %cst_57 : f32 to vector<16x32xf32>
    %168 = arith.addf %167, %166 : vector<16x32xf32>
    %169 = arith.divf %167, %168 : vector<16x32xf32>
    %170 = vector.extract_strided_slice %161 {offsets = [0, 32], sizes = [16, 32], strides = [1, 1]} : vector<16x64xf32> to vector<16x32xf32>
    %171 = arith.mulf %170, %127 : vector<16x32xf32>
    %172 = vector.extract_strided_slice %161 {offsets = [0, 0], sizes = [16, 32], strides = [1, 1]} : vector<16x64xf32> to vector<16x32xf32>
    %173 = arith.mulf %172, %163 : vector<16x32xf32>
    %174 = arith.addf %171, %173 : vector<16x32xf32>
    %175 = math.tanh %174 : vector<16x32xf32>
    %176 = arith.mulf %169, %175 : vector<16x32xf32>
    %177 = vector.extract_strided_slice %176 {offsets = [0, 0], sizes = [8, 32], strides = [1, 1]} : vector<16x32xf32> to vector<8x32xf32>
    %178 = arith.index_cast %c3_i32 : i32 to index
    %c0_58 = arith.constant 0 : index
    %c0_59 = arith.constant 0 : index
    %179 = vector.load %arg12[%178, %c0_58, %c0_59] : memref<8x8x32xf32, #tpu.memory_space<vmem>>, vector<1x8x32xf32>
    %180 = vector.shape_cast %179 : vector<1x8x32xf32> to vector<8x32xf32>
    %181 = vector.shape_cast %177 : vector<8x32xf32> to vector<1x8x32xf32>
    tpu.vector_store %arg12[%178, %c0_58, %c0_59], %181 {strides = array<i32>} : memref<8x8x32xf32, #tpu.memory_space<vmem>>, vector<1x8x32xf32>,
    %182 = vector.extract_strided_slice %176 {offsets = [8, 0], sizes = [8, 32], strides = [1, 1]} : vector<16x32xf32> to vector<8x32xf32>
    %c7_i32_60 = arith.constant 7 : i32
    %183 = arith.subi %c7_i32_60, %c3_i32 : i32
    %184 = arith.index_cast %183 : i32 to index
    %c0_61 = arith.constant 0 : index
    %c0_62 = arith.constant 0 : index
    %185 = vector.load %arg13[%184, %c0_61, %c0_62] : memref<8x8x32xf32, #tpu.memory_space<vmem>>, vector<1x8x32xf32>
    %186 = vector.shape_cast %185 : vector<1x8x32xf32> to vector<8x32xf32>
    %187 = vector.shape_cast %182 : vector<8x32xf32> to vector<1x8x32xf32>
    tpu.vector_store %arg13[%184, %c0_61, %c0_62], %187 {strides = array<i32>} : memref<8x8x32xf32, #tpu.memory_space<vmem>>, vector<1x8x32xf32>,
    %c4_i32 = arith.constant 4 : i32
    %cst_63 = arith.constant dense<0.000000e+00> : vector<16x256xf32>
    %188 = tpu.matmul %176, %9, %cst_63 {dimension_numbers = #tpu.dot_dimension_numbers<[1], [0], [0], [1], [0, 0, 1, 1], [], []>} : vector<16x32xf32>, vector<32x256xf32>, vector<16x256xf32> -> vector<16x256xf32>
    %189 = arith.index_cast %c4_i32 : i32 to index
    %c0_64 = arith.constant 0 : index
    %c0_65 = arith.constant 0 : index
    %190 = vector.load %arg11[%189, %c0_64, %c0_65] : memref<8x8x256xf32, #tpu.memory_space<vmem>>, vector<1x8x256xf32>
    %191 = vector.shape_cast %190 : vector<1x8x256xf32> to vector<8x256xf32>
    %c7_i32_66 = arith.constant 7 : i32
    %192 = arith.subi %c7_i32_66, %c4_i32 : i32
    %193 = arith.index_cast %192 : i32 to index
    %c0_67 = arith.constant 0 : index
    %c0_68 = arith.constant 0 : index
    %194 = vector.load %arg11[%193, %c0_67, %c0_68] : memref<8x8x256xf32, #tpu.memory_space<vmem>>, vector<1x8x256xf32>
    %195 = vector.shape_cast %194 : vector<1x8x256xf32> to vector<8x256xf32>
    %196 = vector.extract_strided_slice %191 {offsets = [0, 0], sizes = [8, 128], strides = [1, 1]} : vector<8x256xf32> to vector<8x128xf32>
    %197 = vector.extract_strided_slice %195 {offsets = [0, 128], sizes = [8, 128], strides = [1, 1]} : vector<8x256xf32> to vector<8x128xf32>
    %198 = vector.extract_strided_slice %188 {offsets = [0, 0], sizes = [8, 128], strides = [1, 1]} : vector<16x256xf32> to vector<8x128xf32>
    %199 = arith.addf %196, %198 : vector<8x128xf32>
    %200 = vector.extract_strided_slice %188 {offsets = [8, 128], sizes = [8, 128], strides = [1, 1]} : vector<16x256xf32> to vector<8x128xf32>
    %201 = arith.addf %197, %200 : vector<8x128xf32>
    %202 = tpu.concatenate %199, %201 in 0 : vector<8x128xf32>, vector<8x128xf32> -> vector<16x128xf32>
    %203 = vector.extract_strided_slice %202 {offsets = [0, 0], sizes = [16, 64], strides = [1, 1]} : vector<16x128xf32> to vector<16x64xf32>
    %204 = arith.negf %203 : vector<16x64xf32>
    %205 = math.exp %204 : vector<16x64xf32>
    %cst_69 = arith.constant 1.000000e+00 : f32
    %206 = vector.broadcast %cst_69 : f32 to vector<16x64xf32>
    %207 = arith.addf %206, %205 : vector<16x64xf32>
    %208 = arith.divf %206, %207 : vector<16x64xf32>
    %209 = vector.extract_strided_slice %202 {offsets = [0, 64], sizes = [16, 32], strides = [1, 1]} : vector<16x128xf32> to vector<16x32xf32>
    %210 = math.tanh %209 : vector<16x32xf32>
    %211 = vector.extract_strided_slice %202 {offsets = [0, 96], sizes = [16, 32], strides = [1, 1]} : vector<16x128xf32> to vector<16x32xf32>
    %212 = arith.negf %211 : vector<16x32xf32>
    %213 = math.exp %212 : vector<16x32xf32>
    %cst_70 = arith.constant 1.000000e+00 : f32
    %214 = vector.broadcast %cst_70 : f32 to vector<16x32xf32>
    %215 = arith.addf %214, %213 : vector<16x32xf32>
    %216 = arith.divf %214, %215 : vector<16x32xf32>
    %217 = vector.extract_strided_slice %208 {offsets = [0, 32], sizes = [16, 32], strides = [1, 1]} : vector<16x64xf32> to vector<16x32xf32>
    %218 = arith.mulf %217, %174 : vector<16x32xf32>
    %219 = vector.extract_strided_slice %208 {offsets = [0, 0], sizes = [16, 32], strides = [1, 1]} : vector<16x64xf32> to vector<16x32xf32>
    %220 = arith.mulf %219, %210 : vector<16x32xf32>
    %221 = arith.addf %218, %220 : vector<16x32xf32>
    %222 = math.tanh %221 : vector<16x32xf32>
    %223 = arith.mulf %216, %222 : vector<16x32xf32>
    %224 = vector.extract_strided_slice %223 {offsets = [0, 0], sizes = [8, 32], strides = [1, 1]} : vector<16x32xf32> to vector<8x32xf32>
    %225 = arith.index_cast %c4_i32 : i32 to index
    %c0_71 = arith.constant 0 : index
    %c0_72 = arith.constant 0 : index
    %226 = vector.load %arg12[%225, %c0_71, %c0_72] : memref<8x8x32xf32, #tpu.memory_space<vmem>>, vector<1x8x32xf32>
    %227 = vector.shape_cast %226 : vector<1x8x32xf32> to vector<8x32xf32>
    %228 = vector.shape_cast %224 : vector<8x32xf32> to vector<1x8x32xf32>
    tpu.vector_store %arg12[%225, %c0_71, %c0_72], %228 {strides = array<i32>} : memref<8x8x32xf32, #tpu.memory_space<vmem>>, vector<1x8x32xf32>,
    %229 = vector.extract_strided_slice %223 {offsets = [8, 0], sizes = [8, 32], strides = [1, 1]} : vector<16x32xf32> to vector<8x32xf32>
    %c7_i32_73 = arith.constant 7 : i32
    %230 = arith.subi %c7_i32_73, %c4_i32 : i32
    %231 = arith.index_cast %230 : i32 to index
    %c0_74 = arith.constant 0 : index
    %c0_75 = arith.constant 0 : index
    %232 = vector.load %arg13[%231, %c0_74, %c0_75] : memref<8x8x32xf32, #tpu.memory_space<vmem>>, vector<1x8x32xf32>
    %233 = vector.shape_cast %232 : vector<1x8x32xf32> to vector<8x32xf32>
    %234 = vector.shape_cast %229 : vector<8x32xf32> to vector<1x8x32xf32>
    tpu.vector_store %arg13[%231, %c0_74, %c0_75], %234 {strides = array<i32>} : memref<8x8x32xf32, #tpu.memory_space<vmem>>, vector<1x8x32xf32>,
    %c5_i32 = arith.constant 5 : i32
    %cst_76 = arith.constant dense<0.000000e+00> : vector<16x256xf32>
    %235 = tpu.matmul %223, %9, %cst_76 {dimension_numbers = #tpu.dot_dimension_numbers<[1], [0], [0], [1], [0, 0, 1, 1], [], []>} : vector<16x32xf32>, vector<32x256xf32>, vector<16x256xf32> -> vector<16x256xf32>
    %236 = arith.index_cast %c5_i32 : i32 to index
    %c0_77 = arith.constant 0 : index
    %c0_78 = arith.constant 0 : index
    %237 = vector.load %arg11[%236, %c0_77, %c0_78] : memref<8x8x256xf32, #tpu.memory_space<vmem>>, vector<1x8x256xf32>
    %238 = vector.shape_cast %237 : vector<1x8x256xf32> to vector<8x256xf32>
    %c7_i32_79 = arith.constant 7 : i32
    %239 = arith.subi %c7_i32_79, %c5_i32 : i32
    %240 = arith.index_cast %239 : i32 to index
    %c0_80 = arith.constant 0 : index
    %c0_81 = arith.constant 0 : index
    %241 = vector.load %arg11[%240, %c0_80, %c0_81] : memref<8x8x256xf32, #tpu.memory_space<vmem>>, vector<1x8x256xf32>
    %242 = vector.shape_cast %241 : vector<1x8x256xf32> to vector<8x256xf32>
    %243 = vector.extract_strided_slice %238 {offsets = [0, 0], sizes = [8, 128], strides = [1, 1]} : vector<8x256xf32> to vector<8x128xf32>
    %244 = vector.extract_strided_slice %242 {offsets = [0, 128], sizes = [8, 128], strides = [1, 1]} : vector<8x256xf32> to vector<8x128xf32>
    %245 = vector.extract_strided_slice %235 {offsets = [0, 0], sizes = [8, 128], strides = [1, 1]} : vector<16x256xf32> to vector<8x128xf32>
    %246 = arith.addf %243, %245 : vector<8x128xf32>
    %247 = vector.extract_strided_slice %235 {offsets = [8, 128], sizes = [8, 128], strides = [1, 1]} : vector<16x256xf32> to vector<8x128xf32>
    %248 = arith.addf %244, %247 : vector<8x128xf32>
    %249 = tpu.concatenate %246, %248 in 0 : vector<8x128xf32>, vector<8x128xf32> -> vector<16x128xf32>
    %250 = vector.extract_strided_slice %249 {offsets = [0, 0], sizes = [16, 64], strides = [1, 1]} : vector<16x128xf32> to vector<16x64xf32>
    %251 = arith.negf %250 : vector<16x64xf32>
    %252 = math.exp %251 : vector<16x64xf32>
    %cst_82 = arith.constant 1.000000e+00 : f32
    %253 = vector.broadcast %cst_82 : f32 to vector<16x64xf32>
    %254 = arith.addf %253, %252 : vector<16x64xf32>
    %255 = arith.divf %253, %254 : vector<16x64xf32>
    %256 = vector.extract_strided_slice %249 {offsets = [0, 64], sizes = [16, 32], strides = [1, 1]} : vector<16x128xf32> to vector<16x32xf32>
    %257 = math.tanh %256 : vector<16x32xf32>
    %258 = vector.extract_strided_slice %249 {offsets = [0, 96], sizes = [16, 32], strides = [1, 1]} : vector<16x128xf32> to vector<16x32xf32>
    %259 = arith.negf %258 : vector<16x32xf32>
    %260 = math.exp %259 : vector<16x32xf32>
    %cst_83 = arith.constant 1.000000e+00 : f32
    %261 = vector.broadcast %cst_83 : f32 to vector<16x32xf32>
    %262 = arith.addf %261, %260 : vector<16x32xf32>
    %263 = arith.divf %261, %262 : vector<16x32xf32>
    %264 = vector.extract_strided_slice %255 {offsets = [0, 32], sizes = [16, 32], strides = [1, 1]} : vector<16x64xf32> to vector<16x32xf32>
    %265 = arith.mulf %264, %221 : vector<16x32xf32>
    %266 = vector.extract_strided_slice %255 {offsets = [0, 0], sizes = [16, 32], strides = [1, 1]} : vector<16x64xf32> to vector<16x32xf32>
    %267 = arith.mulf %266, %257 : vector<16x32xf32>
    %268 = arith.addf %265, %267 : vector<16x32xf32>
    %269 = math.tanh %268 : vector<16x32xf32>
    %270 = arith.mulf %263, %269 : vector<16x32xf32>
    %271 = vector.extract_strided_slice %270 {offsets = [0, 0], sizes = [8, 32], strides = [1, 1]} : vector<16x32xf32> to vector<8x32xf32>
    %272 = arith.index_cast %c5_i32 : i32 to index
    %c0_84 = arith.constant 0 : index
    %c0_85 = arith.constant 0 : index
    %273 = vector.load %arg12[%272, %c0_84, %c0_85] : memref<8x8x32xf32, #tpu.memory_space<vmem>>, vector<1x8x32xf32>
    %274 = vector.shape_cast %273 : vector<1x8x32xf32> to vector<8x32xf32>
    %275 = vector.shape_cast %271 : vector<8x32xf32> to vector<1x8x32xf32>
    tpu.vector_store %arg12[%272, %c0_84, %c0_85], %275 {strides = array<i32>} : memref<8x8x32xf32, #tpu.memory_space<vmem>>, vector<1x8x32xf32>,
    %276 = vector.extract_strided_slice %270 {offsets = [8, 0], sizes = [8, 32], strides = [1, 1]} : vector<16x32xf32> to vector<8x32xf32>
    %c7_i32_86 = arith.constant 7 : i32
    %277 = arith.subi %c7_i32_86, %c5_i32 : i32
    %278 = arith.index_cast %277 : i32 to index
    %c0_87 = arith.constant 0 : index
    %c0_88 = arith.constant 0 : index
    %279 = vector.load %arg13[%278, %c0_87, %c0_88] : memref<8x8x32xf32, #tpu.memory_space<vmem>>, vector<1x8x32xf32>
    %280 = vector.shape_cast %279 : vector<1x8x32xf32> to vector<8x32xf32>
    %281 = vector.shape_cast %276 : vector<8x32xf32> to vector<1x8x32xf32>
    tpu.vector_store %arg13[%278, %c0_87, %c0_88], %281 {strides = array<i32>} : memref<8x8x32xf32, #tpu.memory_space<vmem>>, vector<1x8x32xf32>,
    %c6_i32 = arith.constant 6 : i32
    %cst_89 = arith.constant dense<0.000000e+00> : vector<16x256xf32>
    %282 = tpu.matmul %270, %9, %cst_89 {dimension_numbers = #tpu.dot_dimension_numbers<[1], [0], [0], [1], [0, 0, 1, 1], [], []>} : vector<16x32xf32>, vector<32x256xf32>, vector<16x256xf32> -> vector<16x256xf32>
    %283 = arith.index_cast %c6_i32 : i32 to index
    %c0_90 = arith.constant 0 : index
    %c0_91 = arith.constant 0 : index
    %284 = vector.load %arg11[%283, %c0_90, %c0_91] : memref<8x8x256xf32, #tpu.memory_space<vmem>>, vector<1x8x256xf32>
    %285 = vector.shape_cast %284 : vector<1x8x256xf32> to vector<8x256xf32>
    %c7_i32_92 = arith.constant 7 : i32
    %286 = arith.subi %c7_i32_92, %c6_i32 : i32
    %287 = arith.index_cast %286 : i32 to index
    %c0_93 = arith.constant 0 : index
    %c0_94 = arith.constant 0 : index
    %288 = vector.load %arg11[%287, %c0_93, %c0_94] : memref<8x8x256xf32, #tpu.memory_space<vmem>>, vector<1x8x256xf32>
    %289 = vector.shape_cast %288 : vector<1x8x256xf32> to vector<8x256xf32>
    %290 = vector.extract_strided_slice %285 {offsets = [0, 0], sizes = [8, 128], strides = [1, 1]} : vector<8x256xf32> to vector<8x128xf32>
    %291 = vector.extract_strided_slice %289 {offsets = [0, 128], sizes = [8, 128], strides = [1, 1]} : vector<8x256xf32> to vector<8x128xf32>
    %292 = vector.extract_strided_slice %282 {offsets = [0, 0], sizes = [8, 128], strides = [1, 1]} : vector<16x256xf32> to vector<8x128xf32>
    %293 = arith.addf %290, %292 : vector<8x128xf32>
    %294 = vector.extract_strided_slice %282 {offsets = [8, 128], sizes = [8, 128], strides = [1, 1]} : vector<16x256xf32> to vector<8x128xf32>
    %295 = arith.addf %291, %294 : vector<8x128xf32>
    %296 = tpu.concatenate %293, %295 in 0 : vector<8x128xf32>, vector<8x128xf32> -> vector<16x128xf32>
    %297 = vector.extract_strided_slice %296 {offsets = [0, 0], sizes = [16, 64], strides = [1, 1]} : vector<16x128xf32> to vector<16x64xf32>
    %298 = arith.negf %297 : vector<16x64xf32>
    %299 = math.exp %298 : vector<16x64xf32>
    %cst_95 = arith.constant 1.000000e+00 : f32
    %300 = vector.broadcast %cst_95 : f32 to vector<16x64xf32>
    %301 = arith.addf %300, %299 : vector<16x64xf32>
    %302 = arith.divf %300, %301 : vector<16x64xf32>
    %303 = vector.extract_strided_slice %296 {offsets = [0, 64], sizes = [16, 32], strides = [1, 1]} : vector<16x128xf32> to vector<16x32xf32>
    %304 = math.tanh %303 : vector<16x32xf32>
    %305 = vector.extract_strided_slice %296 {offsets = [0, 96], sizes = [16, 32], strides = [1, 1]} : vector<16x128xf32> to vector<16x32xf32>
    %306 = arith.negf %305 : vector<16x32xf32>
    %307 = math.exp %306 : vector<16x32xf32>
    %cst_96 = arith.constant 1.000000e+00 : f32
    %308 = vector.broadcast %cst_96 : f32 to vector<16x32xf32>
    %309 = arith.addf %308, %307 : vector<16x32xf32>
    %310 = arith.divf %308, %309 : vector<16x32xf32>
    %311 = vector.extract_strided_slice %302 {offsets = [0, 32], sizes = [16, 32], strides = [1, 1]} : vector<16x64xf32> to vector<16x32xf32>
    %312 = arith.mulf %311, %268 : vector<16x32xf32>
    %313 = vector.extract_strided_slice %302 {offsets = [0, 0], sizes = [16, 32], strides = [1, 1]} : vector<16x64xf32> to vector<16x32xf32>
    %314 = arith.mulf %313, %304 : vector<16x32xf32>
    %315 = arith.addf %312, %314 : vector<16x32xf32>
    %316 = math.tanh %315 : vector<16x32xf32>
    %317 = arith.mulf %310, %316 : vector<16x32xf32>
    %318 = vector.extract_strided_slice %317 {offsets = [0, 0], sizes = [8, 32], strides = [1, 1]} : vector<16x32xf32> to vector<8x32xf32>
    %319 = arith.index_cast %c6_i32 : i32 to index
    %c0_97 = arith.constant 0 : index
    %c0_98 = arith.constant 0 : index
    %320 = vector.load %arg12[%319, %c0_97, %c0_98] : memref<8x8x32xf32, #tpu.memory_space<vmem>>, vector<1x8x32xf32>
    %321 = vector.shape_cast %320 : vector<1x8x32xf32> to vector<8x32xf32>
    %322 = vector.shape_cast %318 : vector<8x32xf32> to vector<1x8x32xf32>
    tpu.vector_store %arg12[%319, %c0_97, %c0_98], %322 {strides = array<i32>} : memref<8x8x32xf32, #tpu.memory_space<vmem>>, vector<1x8x32xf32>,
    %323 = vector.extract_strided_slice %317 {offsets = [8, 0], sizes = [8, 32], strides = [1, 1]} : vector<16x32xf32> to vector<8x32xf32>
    %c7_i32_99 = arith.constant 7 : i32
    %324 = arith.subi %c7_i32_99, %c6_i32 : i32
    %325 = arith.index_cast %324 : i32 to index
    %c0_100 = arith.constant 0 : index
    %c0_101 = arith.constant 0 : index
    %326 = vector.load %arg13[%325, %c0_100, %c0_101] : memref<8x8x32xf32, #tpu.memory_space<vmem>>, vector<1x8x32xf32>
    %327 = vector.shape_cast %326 : vector<1x8x32xf32> to vector<8x32xf32>
    %328 = vector.shape_cast %323 : vector<8x32xf32> to vector<1x8x32xf32>
    tpu.vector_store %arg13[%325, %c0_100, %c0_101], %328 {strides = array<i32>} : memref<8x8x32xf32, #tpu.memory_space<vmem>>, vector<1x8x32xf32>,
    %c7_i32_102 = arith.constant 7 : i32
    %cst_103 = arith.constant dense<0.000000e+00> : vector<16x256xf32>
    %329 = tpu.matmul %317, %9, %cst_103 {dimension_numbers = #tpu.dot_dimension_numbers<[1], [0], [0], [1], [0, 0, 1, 1], [], []>} : vector<16x32xf32>, vector<32x256xf32>, vector<16x256xf32> -> vector<16x256xf32>
    %330 = arith.index_cast %c7_i32_102 : i32 to index
    %c0_104 = arith.constant 0 : index
    %c0_105 = arith.constant 0 : index
    %331 = vector.load %arg11[%330, %c0_104, %c0_105] : memref<8x8x256xf32, #tpu.memory_space<vmem>>, vector<1x8x256xf32>
    %332 = vector.shape_cast %331 : vector<1x8x256xf32> to vector<8x256xf32>
    %c7_i32_106 = arith.constant 7 : i32
    %333 = arith.subi %c7_i32_106, %c7_i32_102 : i32
    %334 = arith.index_cast %333 : i32 to index
    %c0_107 = arith.constant 0 : index
    %c0_108 = arith.constant 0 : index
    %335 = vector.load %arg11[%334, %c0_107, %c0_108] : memref<8x8x256xf32, #tpu.memory_space<vmem>>, vector<1x8x256xf32>
    %336 = vector.shape_cast %335 : vector<1x8x256xf32> to vector<8x256xf32>
    %337 = vector.extract_strided_slice %332 {offsets = [0, 0], sizes = [8, 128], strides = [1, 1]} : vector<8x256xf32> to vector<8x128xf32>
    %338 = vector.extract_strided_slice %336 {offsets = [0, 128], sizes = [8, 128], strides = [1, 1]} : vector<8x256xf32> to vector<8x128xf32>
    %339 = vector.extract_strided_slice %329 {offsets = [0, 0], sizes = [8, 128], strides = [1, 1]} : vector<16x256xf32> to vector<8x128xf32>
    %340 = arith.addf %337, %339 : vector<8x128xf32>
    %341 = vector.extract_strided_slice %329 {offsets = [8, 128], sizes = [8, 128], strides = [1, 1]} : vector<16x256xf32> to vector<8x128xf32>
    %342 = arith.addf %338, %341 : vector<8x128xf32>
    %343 = tpu.concatenate %340, %342 in 0 : vector<8x128xf32>, vector<8x128xf32> -> vector<16x128xf32>
    %344 = vector.extract_strided_slice %343 {offsets = [0, 0], sizes = [16, 64], strides = [1, 1]} : vector<16x128xf32> to vector<16x64xf32>
    %345 = arith.negf %344 : vector<16x64xf32>
    %346 = math.exp %345 : vector<16x64xf32>
    %cst_109 = arith.constant 1.000000e+00 : f32
    %347 = vector.broadcast %cst_109 : f32 to vector<16x64xf32>
    %348 = arith.addf %347, %346 : vector<16x64xf32>
    %349 = arith.divf %347, %348 : vector<16x64xf32>
    %350 = vector.extract_strided_slice %343 {offsets = [0, 64], sizes = [16, 32], strides = [1, 1]} : vector<16x128xf32> to vector<16x32xf32>
    %351 = math.tanh %350 : vector<16x32xf32>
    %352 = vector.extract_strided_slice %343 {offsets = [0, 96], sizes = [16, 32], strides = [1, 1]} : vector<16x128xf32> to vector<16x32xf32>
    %353 = arith.negf %352 : vector<16x32xf32>
    %354 = math.exp %353 : vector<16x32xf32>
    %cst_110 = arith.constant 1.000000e+00 : f32
    %355 = vector.broadcast %cst_110 : f32 to vector<16x32xf32>
    %356 = arith.addf %355, %354 : vector<16x32xf32>
    %357 = arith.divf %355, %356 : vector<16x32xf32>
    %358 = vector.extract_strided_slice %349 {offsets = [0, 32], sizes = [16, 32], strides = [1, 1]} : vector<16x64xf32> to vector<16x32xf32>
    %359 = arith.mulf %358, %315 : vector<16x32xf32>
    %360 = vector.extract_strided_slice %349 {offsets = [0, 0], sizes = [16, 32], strides = [1, 1]} : vector<16x64xf32> to vector<16x32xf32>
    %361 = arith.mulf %360, %351 : vector<16x32xf32>
    %362 = arith.addf %359, %361 : vector<16x32xf32>
    %363 = math.tanh %362 : vector<16x32xf32>
    %364 = arith.mulf %357, %363 : vector<16x32xf32>
    %365 = vector.extract_strided_slice %364 {offsets = [0, 0], sizes = [8, 32], strides = [1, 1]} : vector<16x32xf32> to vector<8x32xf32>
    %366 = arith.index_cast %c7_i32_102 : i32 to index
    %c0_111 = arith.constant 0 : index
    %c0_112 = arith.constant 0 : index
    %367 = vector.load %arg12[%366, %c0_111, %c0_112] : memref<8x8x32xf32, #tpu.memory_space<vmem>>, vector<1x8x32xf32>
    %368 = vector.shape_cast %367 : vector<1x8x32xf32> to vector<8x32xf32>
    %369 = vector.shape_cast %365 : vector<8x32xf32> to vector<1x8x32xf32>
    tpu.vector_store %arg12[%366, %c0_111, %c0_112], %369 {strides = array<i32>} : memref<8x8x32xf32, #tpu.memory_space<vmem>>, vector<1x8x32xf32>,
    %370 = vector.extract_strided_slice %364 {offsets = [8, 0], sizes = [8, 32], strides = [1, 1]} : vector<16x32xf32> to vector<8x32xf32>
    %c7_i32_113 = arith.constant 7 : i32
    %371 = arith.subi %c7_i32_113, %c7_i32_102 : i32
    %372 = arith.index_cast %371 : i32 to index
    %c0_114 = arith.constant 0 : index
    %c0_115 = arith.constant 0 : index
    %373 = vector.load %arg13[%372, %c0_114, %c0_115] : memref<8x8x32xf32, #tpu.memory_space<vmem>>, vector<1x8x32xf32>
    %374 = vector.shape_cast %373 : vector<1x8x32xf32> to vector<8x32xf32>
    %375 = vector.shape_cast %370 : vector<8x32xf32> to vector<1x8x32xf32>
    tpu.vector_store %arg13[%372, %c0_114, %c0_115], %375 {strides = array<i32>} : memref<8x8x32xf32, #tpu.memory_space<vmem>>, vector<1x8x32xf32>,
    %c7_i32_116 = arith.constant 7 : i32
    %c0_117 = arith.constant 0 : index
    %c0_118 = arith.constant 0 : index
    %c0_119 = arith.constant 0 : index
    %376 = vector.load %arg12[%c0_117, %c0_118, %c0_119] : memref<8x8x32xf32, #tpu.memory_space<vmem>>, vector<8x8x32xf32>
    %377 = vector.shape_cast %376 : vector<8x8x32xf32> to vector<64x32xf32>
    %c0_120 = arith.constant 0 : index
    %c0_121 = arith.constant 0 : index
    %378 = vector.load %arg4[%c0_120, %c0_121] : memref<32x256xf32, #tpu.memory_space<vmem>>, vector<32x256xf32>
    %cst_122 = arith.constant dense<0.000000e+00> : vector<64x256xf32>
    %379 = tpu.matmul %377, %378, %cst_122 {dimension_numbers = #tpu.dot_dimension_numbers<[1], [0], [0], [1], [0, 0, 1, 1], [], []>} : vector<64x32xf32>, vector<32x256xf32>, vector<64x256xf32> -> vector<64x256xf32>
    %c0_123 = arith.constant 0 : index
    %c0_124 = arith.constant 0 : index
    %c0_125 = arith.constant 0 : index
    %380 = vector.load %arg13[%c0_123, %c0_124, %c0_125] : memref<8x8x32xf32, #tpu.memory_space<vmem>>, vector<8x8x32xf32>
    %381 = vector.shape_cast %380 : vector<8x8x32xf32> to vector<64x32xf32>
    %c0_126 = arith.constant 0 : index
    %c0_127 = arith.constant 0 : index
    %382 = vector.load %arg5[%c0_126, %c0_127] : memref<32x256xf32, #tpu.memory_space<vmem>>, vector<32x256xf32>
    %cst_128 = arith.constant dense<0.000000e+00> : vector<64x256xf32>
    %383 = tpu.matmul %381, %382, %cst_128 {dimension_numbers = #tpu.dot_dimension_numbers<[1], [0], [0], [1], [0, 0, 1, 1], [], []>} : vector<64x32xf32>, vector<32x256xf32>, vector<64x256xf32> -> vector<64x256xf32>
    %384 = arith.addf %379, %383 : vector<64x256xf32>
    %c0_129 = arith.constant 0 : index
    %c0_130 = arith.constant 0 : index
    %385 = vector.load %arg7[%c0_129, %c0_130] : memref<1x256xf32, #tpu.memory_space<vmem>>, vector<1x256xf32>
    %386 = vector.broadcast %385 : vector<1x256xf32> to vector<64x256xf32>
    %387 = arith.addf %384, %386 : vector<64x256xf32>
    %388 = vector.shape_cast %387 : vector<64x256xf32> to vector<8x8x256xf32>
    %c0_131 = arith.constant 0 : index
    %c0_132 = arith.constant 0 : index
    %c0_133 = arith.constant 0 : index
    %389 = vector.load %arg11[%c0_131, %c0_132, %c0_133] : memref<8x8x256xf32, #tpu.memory_space<vmem>>, vector<8x8x256xf32>
    tpu.vector_store %arg11[%c0_131, %c0_132, %c0_133], %388 {strides = array<i32>} : memref<8x8x256xf32, #tpu.memory_space<vmem>>, vector<8x8x256xf32>,
    %c0_134 = arith.constant 0 : index
    %c0_135 = arith.constant 0 : index
    %390 = vector.load %arg6[%c0_134, %c0_135] : memref<32x256xf32, #tpu.memory_space<vmem>>, vector<32x256xf32>
    %c0_136 = arith.constant 0 : index
    %c0_137 = arith.constant 0 : index
    %c0_138 = arith.constant 0 : index
    %391 = vector.load %arg11[%c0_136, %c0_137, %c0_138] : memref<8x8x256xf32, #tpu.memory_space<vmem>>, vector<1x8x256xf32>
    %392 = vector.shape_cast %391 : vector<1x8x256xf32> to vector<8x256xf32>
    %c7_139 = arith.constant 7 : index
    %c0_140 = arith.constant 0 : index
    %c0_141 = arith.constant 0 : index
    %393 = vector.load %arg11[%c7_139, %c0_140, %c0_141] : memref<8x8x256xf32, #tpu.memory_space<vmem>>, vector<1x8x256xf32>
    %394 = vector.shape_cast %393 : vector<1x8x256xf32> to vector<8x256xf32>
    %395 = vector.extract_strided_slice %392 {offsets = [0, 0], sizes = [8, 128], strides = [1, 1]} : vector<8x256xf32> to vector<8x128xf32>
    %396 = vector.extract_strided_slice %394 {offsets = [0, 128], sizes = [8, 128], strides = [1, 1]} : vector<8x256xf32> to vector<8x128xf32>
    %397 = tpu.concatenate %395, %396 in 0 : vector<8x128xf32>, vector<8x128xf32> -> vector<16x128xf32>
    %cst_142 = arith.constant 0.000000e+00 : f32
    %398 = vector.broadcast %cst_142 : f32 to vector<16x32xf32>
    %399 = vector.extract_strided_slice %397 {offsets = [0, 0], sizes = [16, 64], strides = [1, 1]} : vector<16x128xf32> to vector<16x64xf32>
    %400 = arith.negf %399 : vector<16x64xf32>
    %401 = math.exp %400 : vector<16x64xf32>
    %cst_143 = arith.constant 1.000000e+00 : f32
    %402 = vector.broadcast %cst_143 : f32 to vector<16x64xf32>
    %403 = arith.addf %402, %401 : vector<16x64xf32>
    %404 = arith.divf %402, %403 : vector<16x64xf32>
    %405 = vector.extract_strided_slice %397 {offsets = [0, 64], sizes = [16, 32], strides = [1, 1]} : vector<16x128xf32> to vector<16x32xf32>
    %406 = math.tanh %405 : vector<16x32xf32>
    %407 = vector.extract_strided_slice %397 {offsets = [0, 96], sizes = [16, 32], strides = [1, 1]} : vector<16x128xf32> to vector<16x32xf32>
    %408 = arith.negf %407 : vector<16x32xf32>
    %409 = math.exp %408 : vector<16x32xf32>
    %cst_144 = arith.constant 1.000000e+00 : f32
    %410 = vector.broadcast %cst_144 : f32 to vector<16x32xf32>
    %411 = arith.addf %410, %409 : vector<16x32xf32>
    %412 = arith.divf %410, %411 : vector<16x32xf32>
    %413 = vector.extract_strided_slice %404 {offsets = [0, 32], sizes = [16, 32], strides = [1, 1]} : vector<16x64xf32> to vector<16x32xf32>
    %414 = arith.mulf %413, %398 : vector<16x32xf32>
    %415 = vector.extract_strided_slice %404 {offsets = [0, 0], sizes = [16, 32], strides = [1, 1]} : vector<16x64xf32> to vector<16x32xf32>
    %416 = arith.mulf %415, %406 : vector<16x32xf32>
    %417 = arith.addf %414, %416 : vector<16x32xf32>
    %418 = math.tanh %417 : vector<16x32xf32>
    %419 = arith.mulf %412, %418 : vector<16x32xf32>
    %c1_i32_145 = arith.constant 1 : i32
    %cst_146 = arith.constant dense<0.000000e+00> : vector<16x256xf32>
    %420 = tpu.matmul %419, %390, %cst_146 {dimension_numbers = #tpu.dot_dimension_numbers<[1], [0], [0], [1], [0, 0, 1, 1], [], []>} : vector<16x32xf32>, vector<32x256xf32>, vector<16x256xf32> -> vector<16x256xf32>
    %421 = arith.index_cast %c1_i32_145 : i32 to index
    %c0_147 = arith.constant 0 : index
    %c0_148 = arith.constant 0 : index
    %422 = vector.load %arg11[%421, %c0_147, %c0_148] : memref<8x8x256xf32, #tpu.memory_space<vmem>>, vector<1x8x256xf32>
    %423 = vector.shape_cast %422 : vector<1x8x256xf32> to vector<8x256xf32>
    %c7_i32_149 = arith.constant 7 : i32
    %424 = arith.subi %c7_i32_149, %c1_i32_145 : i32
    %425 = arith.index_cast %424 : i32 to index
    %c0_150 = arith.constant 0 : index
    %c0_151 = arith.constant 0 : index
    %426 = vector.load %arg11[%425, %c0_150, %c0_151] : memref<8x8x256xf32, #tpu.memory_space<vmem>>, vector<1x8x256xf32>
    %427 = vector.shape_cast %426 : vector<1x8x256xf32> to vector<8x256xf32>
    %428 = vector.extract_strided_slice %423 {offsets = [0, 0], sizes = [8, 128], strides = [1, 1]} : vector<8x256xf32> to vector<8x128xf32>
    %429 = vector.extract_strided_slice %427 {offsets = [0, 128], sizes = [8, 128], strides = [1, 1]} : vector<8x256xf32> to vector<8x128xf32>
    %430 = vector.extract_strided_slice %420 {offsets = [0, 0], sizes = [8, 128], strides = [1, 1]} : vector<16x256xf32> to vector<8x128xf32>
    %431 = arith.addf %428, %430 : vector<8x128xf32>
    %432 = vector.extract_strided_slice %420 {offsets = [8, 128], sizes = [8, 128], strides = [1, 1]} : vector<16x256xf32> to vector<8x128xf32>
    %433 = arith.addf %429, %432 : vector<8x128xf32>
    %434 = tpu.concatenate %431, %433 in 0 : vector<8x128xf32>, vector<8x128xf32> -> vector<16x128xf32>
    %435 = vector.extract_strided_slice %434 {offsets = [0, 0], sizes = [16, 64], strides = [1, 1]} : vector<16x128xf32> to vector<16x64xf32>
    %436 = arith.negf %435 : vector<16x64xf32>
    %437 = math.exp %436 : vector<16x64xf32>
    %cst_152 = arith.constant 1.000000e+00 : f32
    %438 = vector.broadcast %cst_152 : f32 to vector<16x64xf32>
    %439 = arith.addf %438, %437 : vector<16x64xf32>
    %440 = arith.divf %438, %439 : vector<16x64xf32>
    %441 = vector.extract_strided_slice %434 {offsets = [0, 64], sizes = [16, 32], strides = [1, 1]} : vector<16x128xf32> to vector<16x32xf32>
    %442 = math.tanh %441 : vector<16x32xf32>
    %443 = vector.extract_strided_slice %434 {offsets = [0, 96], sizes = [16, 32], strides = [1, 1]} : vector<16x128xf32> to vector<16x32xf32>
    %444 = arith.negf %443 : vector<16x32xf32>
    %445 = math.exp %444 : vector<16x32xf32>
    %cst_153 = arith.constant 1.000000e+00 : f32
    %446 = vector.broadcast %cst_153 : f32 to vector<16x32xf32>
    %447 = arith.addf %446, %445 : vector<16x32xf32>
    %448 = arith.divf %446, %447 : vector<16x32xf32>
    %449 = vector.extract_strided_slice %440 {offsets = [0, 32], sizes = [16, 32], strides = [1, 1]} : vector<16x64xf32> to vector<16x32xf32>
    %450 = arith.mulf %449, %417 : vector<16x32xf32>
    %451 = vector.extract_strided_slice %440 {offsets = [0, 0], sizes = [16, 32], strides = [1, 1]} : vector<16x64xf32> to vector<16x32xf32>
    %452 = arith.mulf %451, %442 : vector<16x32xf32>
    %453 = arith.addf %450, %452 : vector<16x32xf32>
    %454 = math.tanh %453 : vector<16x32xf32>
    %455 = arith.mulf %448, %454 : vector<16x32xf32>
    %c2_i32_154 = arith.constant 2 : i32
    %cst_155 = arith.constant dense<0.000000e+00> : vector<16x256xf32>
    %456 = tpu.matmul %455, %390, %cst_155 {dimension_numbers = #tpu.dot_dimension_numbers<[1], [0], [0], [1], [0, 0, 1, 1], [], []>} : vector<16x32xf32>, vector<32x256xf32>, vector<16x256xf32> -> vector<16x256xf32>
    %457 = arith.index_cast %c2_i32_154 : i32 to index
    %c0_156 = arith.constant 0 : index
    %c0_157 = arith.constant 0 : index
    %458 = vector.load %arg11[%457, %c0_156, %c0_157] : memref<8x8x256xf32, #tpu.memory_space<vmem>>, vector<1x8x256xf32>
    %459 = vector.shape_cast %458 : vector<1x8x256xf32> to vector<8x256xf32>
    %c7_i32_158 = arith.constant 7 : i32
    %460 = arith.subi %c7_i32_158, %c2_i32_154 : i32
    %461 = arith.index_cast %460 : i32 to index
    %c0_159 = arith.constant 0 : index
    %c0_160 = arith.constant 0 : index
    %462 = vector.load %arg11[%461, %c0_159, %c0_160] : memref<8x8x256xf32, #tpu.memory_space<vmem>>, vector<1x8x256xf32>
    %463 = vector.shape_cast %462 : vector<1x8x256xf32> to vector<8x256xf32>
    %464 = vector.extract_strided_slice %459 {offsets = [0, 0], sizes = [8, 128], strides = [1, 1]} : vector<8x256xf32> to vector<8x128xf32>
    %465 = vector.extract_strided_slice %463 {offsets = [0, 128], sizes = [8, 128], strides = [1, 1]} : vector<8x256xf32> to vector<8x128xf32>
    %466 = vector.extract_strided_slice %456 {offsets = [0, 0], sizes = [8, 128], strides = [1, 1]} : vector<16x256xf32> to vector<8x128xf32>
    %467 = arith.addf %464, %466 : vector<8x128xf32>
    %468 = vector.extract_strided_slice %456 {offsets = [8, 128], sizes = [8, 128], strides = [1, 1]} : vector<16x256xf32> to vector<8x128xf32>
    %469 = arith.addf %465, %468 : vector<8x128xf32>
    %470 = tpu.concatenate %467, %469 in 0 : vector<8x128xf32>, vector<8x128xf32> -> vector<16x128xf32>
    %471 = vector.extract_strided_slice %470 {offsets = [0, 0], sizes = [16, 64], strides = [1, 1]} : vector<16x128xf32> to vector<16x64xf32>
    %472 = arith.negf %471 : vector<16x64xf32>
    %473 = math.exp %472 : vector<16x64xf32>
    %cst_161 = arith.constant 1.000000e+00 : f32
    %474 = vector.broadcast %cst_161 : f32 to vector<16x64xf32>
    %475 = arith.addf %474, %473 : vector<16x64xf32>
    %476 = arith.divf %474, %475 : vector<16x64xf32>
    %477 = vector.extract_strided_slice %470 {offsets = [0, 64], sizes = [16, 32], strides = [1, 1]} : vector<16x128xf32> to vector<16x32xf32>
    %478 = math.tanh %477 : vector<16x32xf32>
    %479 = vector.extract_strided_slice %470 {offsets = [0, 96], sizes = [16, 32], strides = [1, 1]} : vector<16x128xf32> to vector<16x32xf32>
    %480 = arith.negf %479 : vector<16x32xf32>
    %481 = math.exp %480 : vector<16x32xf32>
    %cst_162 = arith.constant 1.000000e+00 : f32
    %482 = vector.broadcast %cst_162 : f32 to vector<16x32xf32>
    %483 = arith.addf %482, %481 : vector<16x32xf32>
    %484 = arith.divf %482, %483 : vector<16x32xf32>
    %485 = vector.extract_strided_slice %476 {offsets = [0, 32], sizes = [16, 32], strides = [1, 1]} : vector<16x64xf32> to vector<16x32xf32>
    %486 = arith.mulf %485, %453 : vector<16x32xf32>
    %487 = vector.extract_strided_slice %476 {offsets = [0, 0], sizes = [16, 32], strides = [1, 1]} : vector<16x64xf32> to vector<16x32xf32>
    %488 = arith.mulf %487, %478 : vector<16x32xf32>
    %489 = arith.addf %486, %488 : vector<16x32xf32>
    %490 = math.tanh %489 : vector<16x32xf32>
    %491 = arith.mulf %484, %490 : vector<16x32xf32>
    %c3_i32_163 = arith.constant 3 : i32
    %cst_164 = arith.constant dense<0.000000e+00> : vector<16x256xf32>
    %492 = tpu.matmul %491, %390, %cst_164 {dimension_numbers = #tpu.dot_dimension_numbers<[1], [0], [0], [1], [0, 0, 1, 1], [], []>} : vector<16x32xf32>, vector<32x256xf32>, vector<16x256xf32> -> vector<16x256xf32>
    %493 = arith.index_cast %c3_i32_163 : i32 to index
    %c0_165 = arith.constant 0 : index
    %c0_166 = arith.constant 0 : index
    %494 = vector.load %arg11[%493, %c0_165, %c0_166] : memref<8x8x256xf32, #tpu.memory_space<vmem>>, vector<1x8x256xf32>
    %495 = vector.shape_cast %494 : vector<1x8x256xf32> to vector<8x256xf32>
    %c7_i32_167 = arith.constant 7 : i32
    %496 = arith.subi %c7_i32_167, %c3_i32_163 : i32
    %497 = arith.index_cast %496 : i32 to index
    %c0_168 = arith.constant 0 : index
    %c0_169 = arith.constant 0 : index
    %498 = vector.load %arg11[%497, %c0_168, %c0_169] : memref<8x8x256xf32, #tpu.memory_space<vmem>>, vector<1x8x256xf32>
    %499 = vector.shape_cast %498 : vector<1x8x256xf32> to vector<8x256xf32>
    %500 = vector.extract_strided_slice %495 {offsets = [0, 0], sizes = [8, 128], strides = [1, 1]} : vector<8x256xf32> to vector<8x128xf32>
    %501 = vector.extract_strided_slice %499 {offsets = [0, 128], sizes = [8, 128], strides = [1, 1]} : vector<8x256xf32> to vector<8x128xf32>
    %502 = vector.extract_strided_slice %492 {offsets = [0, 0], sizes = [8, 128], strides = [1, 1]} : vector<16x256xf32> to vector<8x128xf32>
    %503 = arith.addf %500, %502 : vector<8x128xf32>
    %504 = vector.extract_strided_slice %492 {offsets = [8, 128], sizes = [8, 128], strides = [1, 1]} : vector<16x256xf32> to vector<8x128xf32>
    %505 = arith.addf %501, %504 : vector<8x128xf32>
    %506 = tpu.concatenate %503, %505 in 0 : vector<8x128xf32>, vector<8x128xf32> -> vector<16x128xf32>
    %507 = vector.extract_strided_slice %506 {offsets = [0, 0], sizes = [16, 64], strides = [1, 1]} : vector<16x128xf32> to vector<16x64xf32>
    %508 = arith.negf %507 : vector<16x64xf32>
    %509 = math.exp %508 : vector<16x64xf32>
    %cst_170 = arith.constant 1.000000e+00 : f32
    %510 = vector.broadcast %cst_170 : f32 to vector<16x64xf32>
    %511 = arith.addf %510, %509 : vector<16x64xf32>
    %512 = arith.divf %510, %511 : vector<16x64xf32>
    %513 = vector.extract_strided_slice %506 {offsets = [0, 64], sizes = [16, 32], strides = [1, 1]} : vector<16x128xf32> to vector<16x32xf32>
    %514 = math.tanh %513 : vector<16x32xf32>
    %515 = vector.extract_strided_slice %506 {offsets = [0, 96], sizes = [16, 32], strides = [1, 1]} : vector<16x128xf32> to vector<16x32xf32>
    %516 = arith.negf %515 : vector<16x32xf32>
    %517 = math.exp %516 : vector<16x32xf32>
    %cst_171 = arith.constant 1.000000e+00 : f32
    %518 = vector.broadcast %cst_171 : f32 to vector<16x32xf32>
    %519 = arith.addf %518, %517 : vector<16x32xf32>
    %520 = arith.divf %518, %519 : vector<16x32xf32>
    %521 = vector.extract_strided_slice %512 {offsets = [0, 32], sizes = [16, 32], strides = [1, 1]} : vector<16x64xf32> to vector<16x32xf32>
    %522 = arith.mulf %521, %489 : vector<16x32xf32>
    %523 = vector.extract_strided_slice %512 {offsets = [0, 0], sizes = [16, 32], strides = [1, 1]} : vector<16x64xf32> to vector<16x32xf32>
    %524 = arith.mulf %523, %514 : vector<16x32xf32>
    %525 = arith.addf %522, %524 : vector<16x32xf32>
    %526 = math.tanh %525 : vector<16x32xf32>
    %527 = arith.mulf %520, %526 : vector<16x32xf32>
    %c4_i32_172 = arith.constant 4 : i32
    %cst_173 = arith.constant dense<0.000000e+00> : vector<16x256xf32>
    %528 = tpu.matmul %527, %390, %cst_173 {dimension_numbers = #tpu.dot_dimension_numbers<[1], [0], [0], [1], [0, 0, 1, 1], [], []>} : vector<16x32xf32>, vector<32x256xf32>, vector<16x256xf32> -> vector<16x256xf32>
    %529 = arith.index_cast %c4_i32_172 : i32 to index
    %c0_174 = arith.constant 0 : index
    %c0_175 = arith.constant 0 : index
    %530 = vector.load %arg11[%529, %c0_174, %c0_175] : memref<8x8x256xf32, #tpu.memory_space<vmem>>, vector<1x8x256xf32>
    %531 = vector.shape_cast %530 : vector<1x8x256xf32> to vector<8x256xf32>
    %c7_i32_176 = arith.constant 7 : i32
    %532 = arith.subi %c7_i32_176, %c4_i32_172 : i32
    %533 = arith.index_cast %532 : i32 to index
    %c0_177 = arith.constant 0 : index
    %c0_178 = arith.constant 0 : index
    %534 = vector.load %arg11[%533, %c0_177, %c0_178] : memref<8x8x256xf32, #tpu.memory_space<vmem>>, vector<1x8x256xf32>
    %535 = vector.shape_cast %534 : vector<1x8x256xf32> to vector<8x256xf32>
    %536 = vector.extract_strided_slice %531 {offsets = [0, 0], sizes = [8, 128], strides = [1, 1]} : vector<8x256xf32> to vector<8x128xf32>
    %537 = vector.extract_strided_slice %535 {offsets = [0, 128], sizes = [8, 128], strides = [1, 1]} : vector<8x256xf32> to vector<8x128xf32>
    %538 = vector.extract_strided_slice %528 {offsets = [0, 0], sizes = [8, 128], strides = [1, 1]} : vector<16x256xf32> to vector<8x128xf32>
    %539 = arith.addf %536, %538 : vector<8x128xf32>
    %540 = vector.extract_strided_slice %528 {offsets = [8, 128], sizes = [8, 128], strides = [1, 1]} : vector<16x256xf32> to vector<8x128xf32>
    %541 = arith.addf %537, %540 : vector<8x128xf32>
    %542 = tpu.concatenate %539, %541 in 0 : vector<8x128xf32>, vector<8x128xf32> -> vector<16x128xf32>
    %543 = vector.extract_strided_slice %542 {offsets = [0, 0], sizes = [16, 64], strides = [1, 1]} : vector<16x128xf32> to vector<16x64xf32>
    %544 = arith.negf %543 : vector<16x64xf32>
    %545 = math.exp %544 : vector<16x64xf32>
    %cst_179 = arith.constant 1.000000e+00 : f32
    %546 = vector.broadcast %cst_179 : f32 to vector<16x64xf32>
    %547 = arith.addf %546, %545 : vector<16x64xf32>
    %548 = arith.divf %546, %547 : vector<16x64xf32>
    %549 = vector.extract_strided_slice %542 {offsets = [0, 64], sizes = [16, 32], strides = [1, 1]} : vector<16x128xf32> to vector<16x32xf32>
    %550 = math.tanh %549 : vector<16x32xf32>
    %551 = vector.extract_strided_slice %542 {offsets = [0, 96], sizes = [16, 32], strides = [1, 1]} : vector<16x128xf32> to vector<16x32xf32>
    %552 = arith.negf %551 : vector<16x32xf32>
    %553 = math.exp %552 : vector<16x32xf32>
    %cst_180 = arith.constant 1.000000e+00 : f32
    %554 = vector.broadcast %cst_180 : f32 to vector<16x32xf32>
    %555 = arith.addf %554, %553 : vector<16x32xf32>
    %556 = arith.divf %554, %555 : vector<16x32xf32>
    %557 = vector.extract_strided_slice %548 {offsets = [0, 32], sizes = [16, 32], strides = [1, 1]} : vector<16x64xf32> to vector<16x32xf32>
    %558 = arith.mulf %557, %525 : vector<16x32xf32>
    %559 = vector.extract_strided_slice %548 {offsets = [0, 0], sizes = [16, 32], strides = [1, 1]} : vector<16x64xf32> to vector<16x32xf32>
    %560 = arith.mulf %559, %550 : vector<16x32xf32>
    %561 = arith.addf %558, %560 : vector<16x32xf32>
    %562 = math.tanh %561 : vector<16x32xf32>
    %563 = arith.mulf %556, %562 : vector<16x32xf32>
    %c5_i32_181 = arith.constant 5 : i32
    %cst_182 = arith.constant dense<0.000000e+00> : vector<16x256xf32>
    %564 = tpu.matmul %563, %390, %cst_182 {dimension_numbers = #tpu.dot_dimension_numbers<[1], [0], [0], [1], [0, 0, 1, 1], [], []>} : vector<16x32xf32>, vector<32x256xf32>, vector<16x256xf32> -> vector<16x256xf32>
    %565 = arith.index_cast %c5_i32_181 : i32 to index
    %c0_183 = arith.constant 0 : index
    %c0_184 = arith.constant 0 : index
    %566 = vector.load %arg11[%565, %c0_183, %c0_184] : memref<8x8x256xf32, #tpu.memory_space<vmem>>, vector<1x8x256xf32>
    %567 = vector.shape_cast %566 : vector<1x8x256xf32> to vector<8x256xf32>
    %c7_i32_185 = arith.constant 7 : i32
    %568 = arith.subi %c7_i32_185, %c5_i32_181 : i32
    %569 = arith.index_cast %568 : i32 to index
    %c0_186 = arith.constant 0 : index
    %c0_187 = arith.constant 0 : index
    %570 = vector.load %arg11[%569, %c0_186, %c0_187] : memref<8x8x256xf32, #tpu.memory_space<vmem>>, vector<1x8x256xf32>
    %571 = vector.shape_cast %570 : vector<1x8x256xf32> to vector<8x256xf32>
    %572 = vector.extract_strided_slice %567 {offsets = [0, 0], sizes = [8, 128], strides = [1, 1]} : vector<8x256xf32> to vector<8x128xf32>
    %573 = vector.extract_strided_slice %571 {offsets = [0, 128], sizes = [8, 128], strides = [1, 1]} : vector<8x256xf32> to vector<8x128xf32>
    %574 = vector.extract_strided_slice %564 {offsets = [0, 0], sizes = [8, 128], strides = [1, 1]} : vector<16x256xf32> to vector<8x128xf32>
    %575 = arith.addf %572, %574 : vector<8x128xf32>
    %576 = vector.extract_strided_slice %564 {offsets = [8, 128], sizes = [8, 128], strides = [1, 1]} : vector<16x256xf32> to vector<8x128xf32>
    %577 = arith.addf %573, %576 : vector<8x128xf32>
    %578 = tpu.concatenate %575, %577 in 0 : vector<8x128xf32>, vector<8x128xf32> -> vector<16x128xf32>
    %579 = vector.extract_strided_slice %578 {offsets = [0, 0], sizes = [16, 64], strides = [1, 1]} : vector<16x128xf32> to vector<16x64xf32>
    %580 = arith.negf %579 : vector<16x64xf32>
    %581 = math.exp %580 : vector<16x64xf32>
    %cst_188 = arith.constant 1.000000e+00 : f32
    %582 = vector.broadcast %cst_188 : f32 to vector<16x64xf32>
    %583 = arith.addf %582, %581 : vector<16x64xf32>
    %584 = arith.divf %582, %583 : vector<16x64xf32>
    %585 = vector.extract_strided_slice %578 {offsets = [0, 64], sizes = [16, 32], strides = [1, 1]} : vector<16x128xf32> to vector<16x32xf32>
    %586 = math.tanh %585 : vector<16x32xf32>
    %587 = vector.extract_strided_slice %578 {offsets = [0, 96], sizes = [16, 32], strides = [1, 1]} : vector<16x128xf32> to vector<16x32xf32>
    %588 = arith.negf %587 : vector<16x32xf32>
    %589 = math.exp %588 : vector<16x32xf32>
    %cst_189 = arith.constant 1.000000e+00 : f32
    %590 = vector.broadcast %cst_189 : f32 to vector<16x32xf32>
    %591 = arith.addf %590, %589 : vector<16x32xf32>
    %592 = arith.divf %590, %591 : vector<16x32xf32>
    %593 = vector.extract_strided_slice %584 {offsets = [0, 32], sizes = [16, 32], strides = [1, 1]} : vector<16x64xf32> to vector<16x32xf32>
    %594 = arith.mulf %593, %561 : vector<16x32xf32>
    %595 = vector.extract_strided_slice %584 {offsets = [0, 0], sizes = [16, 32], strides = [1, 1]} : vector<16x64xf32> to vector<16x32xf32>
    %596 = arith.mulf %595, %586 : vector<16x32xf32>
    %597 = arith.addf %594, %596 : vector<16x32xf32>
    %598 = math.tanh %597 : vector<16x32xf32>
    %599 = arith.mulf %592, %598 : vector<16x32xf32>
    %c6_i32_190 = arith.constant 6 : i32
    %cst_191 = arith.constant dense<0.000000e+00> : vector<16x256xf32>
    %600 = tpu.matmul %599, %390, %cst_191 {dimension_numbers = #tpu.dot_dimension_numbers<[1], [0], [0], [1], [0, 0, 1, 1], [], []>} : vector<16x32xf32>, vector<32x256xf32>, vector<16x256xf32> -> vector<16x256xf32>
    %601 = arith.index_cast %c6_i32_190 : i32 to index
    %c0_192 = arith.constant 0 : index
    %c0_193 = arith.constant 0 : index
    %602 = vector.load %arg11[%601, %c0_192, %c0_193] : memref<8x8x256xf32, #tpu.memory_space<vmem>>, vector<1x8x256xf32>
    %603 = vector.shape_cast %602 : vector<1x8x256xf32> to vector<8x256xf32>
    %c7_i32_194 = arith.constant 7 : i32
    %604 = arith.subi %c7_i32_194, %c6_i32_190 : i32
    %605 = arith.index_cast %604 : i32 to index
    %c0_195 = arith.constant 0 : index
    %c0_196 = arith.constant 0 : index
    %606 = vector.load %arg11[%605, %c0_195, %c0_196] : memref<8x8x256xf32, #tpu.memory_space<vmem>>, vector<1x8x256xf32>
    %607 = vector.shape_cast %606 : vector<1x8x256xf32> to vector<8x256xf32>
    %608 = vector.extract_strided_slice %603 {offsets = [0, 0], sizes = [8, 128], strides = [1, 1]} : vector<8x256xf32> to vector<8x128xf32>
    %609 = vector.extract_strided_slice %607 {offsets = [0, 128], sizes = [8, 128], strides = [1, 1]} : vector<8x256xf32> to vector<8x128xf32>
    %610 = vector.extract_strided_slice %600 {offsets = [0, 0], sizes = [8, 128], strides = [1, 1]} : vector<16x256xf32> to vector<8x128xf32>
    %611 = arith.addf %608, %610 : vector<8x128xf32>
    %612 = vector.extract_strided_slice %600 {offsets = [8, 128], sizes = [8, 128], strides = [1, 1]} : vector<16x256xf32> to vector<8x128xf32>
    %613 = arith.addf %609, %612 : vector<8x128xf32>
    %614 = tpu.concatenate %611, %613 in 0 : vector<8x128xf32>, vector<8x128xf32> -> vector<16x128xf32>
    %615 = vector.extract_strided_slice %614 {offsets = [0, 0], sizes = [16, 64], strides = [1, 1]} : vector<16x128xf32> to vector<16x64xf32>
    %616 = arith.negf %615 : vector<16x64xf32>
    %617 = math.exp %616 : vector<16x64xf32>
    %cst_197 = arith.constant 1.000000e+00 : f32
    %618 = vector.broadcast %cst_197 : f32 to vector<16x64xf32>
    %619 = arith.addf %618, %617 : vector<16x64xf32>
    %620 = arith.divf %618, %619 : vector<16x64xf32>
    %621 = vector.extract_strided_slice %614 {offsets = [0, 64], sizes = [16, 32], strides = [1, 1]} : vector<16x128xf32> to vector<16x32xf32>
    %622 = math.tanh %621 : vector<16x32xf32>
    %623 = vector.extract_strided_slice %614 {offsets = [0, 96], sizes = [16, 32], strides = [1, 1]} : vector<16x128xf32> to vector<16x32xf32>
    %624 = arith.negf %623 : vector<16x32xf32>
    %625 = math.exp %624 : vector<16x32xf32>
    %cst_198 = arith.constant 1.000000e+00 : f32
    %626 = vector.broadcast %cst_198 : f32 to vector<16x32xf32>
    %627 = arith.addf %626, %625 : vector<16x32xf32>
    %628 = arith.divf %626, %627 : vector<16x32xf32>
    %629 = vector.extract_strided_slice %620 {offsets = [0, 32], sizes = [16, 32], strides = [1, 1]} : vector<16x64xf32> to vector<16x32xf32>
    %630 = arith.mulf %629, %597 : vector<16x32xf32>
    %631 = vector.extract_strided_slice %620 {offsets = [0, 0], sizes = [16, 32], strides = [1, 1]} : vector<16x64xf32> to vector<16x32xf32>
    %632 = arith.mulf %631, %622 : vector<16x32xf32>
    %633 = arith.addf %630, %632 : vector<16x32xf32>
    %634 = math.tanh %633 : vector<16x32xf32>
    %635 = arith.mulf %628, %634 : vector<16x32xf32>
    %c7_i32_199 = arith.constant 7 : i32
    %cst_200 = arith.constant dense<0.000000e+00> : vector<16x256xf32>
    %636 = tpu.matmul %635, %390, %cst_200 {dimension_numbers = #tpu.dot_dimension_numbers<[1], [0], [0], [1], [0, 0, 1, 1], [], []>} : vector<16x32xf32>, vector<32x256xf32>, vector<16x256xf32> -> vector<16x256xf32>
    %637 = arith.index_cast %c7_i32_199 : i32 to index
    %c0_201 = arith.constant 0 : index
    %c0_202 = arith.constant 0 : index
    %638 = vector.load %arg11[%637, %c0_201, %c0_202] : memref<8x8x256xf32, #tpu.memory_space<vmem>>, vector<1x8x256xf32>
    %639 = vector.shape_cast %638 : vector<1x8x256xf32> to vector<8x256xf32>
    %c7_i32_203 = arith.constant 7 : i32
    %640 = arith.subi %c7_i32_203, %c7_i32_199 : i32
    %641 = arith.index_cast %640 : i32 to index
    %c0_204 = arith.constant 0 : index
    %c0_205 = arith.constant 0 : index
    %642 = vector.load %arg11[%641, %c0_204, %c0_205] : memref<8x8x256xf32, #tpu.memory_space<vmem>>, vector<1x8x256xf32>
    %643 = vector.shape_cast %642 : vector<1x8x256xf32> to vector<8x256xf32>
    %644 = vector.extract_strided_slice %639 {offsets = [0, 0], sizes = [8, 128], strides = [1, 1]} : vector<8x256xf32> to vector<8x128xf32>
    %645 = vector.extract_strided_slice %643 {offsets = [0, 128], sizes = [8, 128], strides = [1, 1]} : vector<8x256xf32> to vector<8x128xf32>
    %646 = vector.extract_strided_slice %636 {offsets = [0, 0], sizes = [8, 128], strides = [1, 1]} : vector<16x256xf32> to vector<8x128xf32>
    %647 = arith.addf %644, %646 : vector<8x128xf32>
    %648 = vector.extract_strided_slice %636 {offsets = [8, 128], sizes = [8, 128], strides = [1, 1]} : vector<16x256xf32> to vector<8x128xf32>
    %649 = arith.addf %645, %648 : vector<8x128xf32>
    %650 = tpu.concatenate %647, %649 in 0 : vector<8x128xf32>, vector<8x128xf32> -> vector<16x128xf32>
    %651 = vector.extract_strided_slice %650 {offsets = [0, 0], sizes = [16, 64], strides = [1, 1]} : vector<16x128xf32> to vector<16x64xf32>
    %652 = arith.negf %651 : vector<16x64xf32>
    %653 = math.exp %652 : vector<16x64xf32>
    %cst_206 = arith.constant 1.000000e+00 : f32
    %654 = vector.broadcast %cst_206 : f32 to vector<16x64xf32>
    %655 = arith.addf %654, %653 : vector<16x64xf32>
    %656 = arith.divf %654, %655 : vector<16x64xf32>
    %657 = vector.extract_strided_slice %650 {offsets = [0, 64], sizes = [16, 32], strides = [1, 1]} : vector<16x128xf32> to vector<16x32xf32>
    %658 = math.tanh %657 : vector<16x32xf32>
    %659 = vector.extract_strided_slice %650 {offsets = [0, 96], sizes = [16, 32], strides = [1, 1]} : vector<16x128xf32> to vector<16x32xf32>
    %660 = arith.negf %659 : vector<16x32xf32>
    %661 = math.exp %660 : vector<16x32xf32>
    %cst_207 = arith.constant 1.000000e+00 : f32
    %662 = vector.broadcast %cst_207 : f32 to vector<16x32xf32>
    %663 = arith.addf %662, %661 : vector<16x32xf32>
    %664 = arith.divf %662, %663 : vector<16x32xf32>
    %665 = vector.extract_strided_slice %656 {offsets = [0, 32], sizes = [16, 32], strides = [1, 1]} : vector<16x64xf32> to vector<16x32xf32>
    %666 = arith.mulf %665, %633 : vector<16x32xf32>
    %667 = vector.extract_strided_slice %656 {offsets = [0, 0], sizes = [16, 32], strides = [1, 1]} : vector<16x64xf32> to vector<16x32xf32>
    %668 = arith.mulf %667, %658 : vector<16x32xf32>
    %669 = arith.addf %666, %668 : vector<16x32xf32>
    %670 = math.tanh %669 : vector<16x32xf32>
    %671 = arith.mulf %664, %670 : vector<16x32xf32>
    %c7_i32_208 = arith.constant 7 : i32
    %672 = vector.extract_strided_slice %419 {offsets = [0, 0], sizes = [8, 32], strides = [1, 1]} : vector<16x32xf32> to vector<8x32xf32>
    %673 = vector.extract_strided_slice %671 {offsets = [8, 0], sizes = [8, 32], strides = [1, 1]} : vector<16x32xf32> to vector<8x32xf32>
    %674 = vector.extract_strided_slice %671 {offsets = [0, 0], sizes = [8, 32], strides = [1, 1]} : vector<16x32xf32> to vector<8x32xf32>
    %675 = vector.extract_strided_slice %419 {offsets = [8, 0], sizes = [8, 32], strides = [1, 1]} : vector<16x32xf32> to vector<8x32xf32>
    %676 = tpu.concatenate %672, %673, %674, %675 in 1 : vector<8x32xf32>, vector<8x32xf32>, vector<8x32xf32>, vector<8x32xf32> -> vector<8x128xf32>
    %c0_209 = arith.constant 0 : index
    %c0_210 = arith.constant 0 : index
    %677 = vector.load %arg8[%c0_209, %c0_210] : memref<128x2xf32, #tpu.memory_space<vmem>>, vector<128x2xf32>
    %cst_211 = arith.constant dense<0.000000e+00> : vector<8x2xf32>
    %678 = tpu.matmul %676, %677, %cst_211 {dimension_numbers = #tpu.dot_dimension_numbers<[1], [0], [0], [1], [0, 0, 1, 1], [], []>} : vector<8x128xf32>, vector<128x2xf32>, vector<8x2xf32> -> vector<8x2xf32>
    %c0_212 = arith.constant 0 : index
    %c0_213 = arith.constant 0 : index
    %679 = vector.load %arg9[%c0_212, %c0_213] : memref<1x2xf32, #tpu.memory_space<vmem>>, vector<1x2xf32>
    %680 = vector.broadcast %679 : vector<1x2xf32> to vector<8x2xf32>
    %681 = arith.addf %678, %680 : vector<8x2xf32>
    %c0_214 = arith.constant 0 : index
    %c0_215 = arith.constant 0 : index
    %682 = vector.load %arg10[%c0_214, %c0_215] : memref<8x2xf32, #tpu.memory_space<vmem>>, vector<8x2xf32>
    tpu.vector_store %arg10[%c0_214, %c0_215], %681 {strides = array<i32>} : memref<8x2xf32, #tpu.memory_space<vmem>>, vector<8x2xf32>,
    return
  }
}

</mosaic_0001>

<llo_original>
// kernel: tpu_custom_call.1
$region0: #{tpu_custom_call.1}
  #allocation0 [shape = 'u32[]', space=smem, size = 0x4, offset = 0x4, fixed_abs, tag = 'smem constant byte address 0x4 - core index']
  #allocation1 [shape = 'u32[144,128]{1,0:T(1,128)}', space=vmem, size = 0x12000, scoped, tag = 'internal scratch']
  #allocation2 [shape = 'f32[8,8,256]{2,1,0:T(8,128)}', space=vmem, size = 0x10000, scoped, tag = 'scratch operand']
  #allocation3 [shape = 'f32[8,8,32]{2,1,0:T(8,128)}', space=vmem, size = 0x8000, scoped, tag = 'scratch operand']
  #allocation4 [shape = 'f32[8,8,32]{2,1,0:T(8,128)}', space=vmem, size = 0x8000, scoped, tag = 'scratch operand']
  %s0 = inlined_call_operand.vmem [shape: f32[8,8,32], index: 0, kind: input, shape index: {}]
  %s1 = inlined_call_operand.vmem [shape: f32[32,256], index: 1, kind: input, shape index: {}]
  %s2 = inlined_call_operand.hbm [shape: f32[32,256], index: 2, kind: input, shape index: {}]
  %s3 = inlined_call_operand.vmem [shape: f32[1,256], index: 3, kind: input, shape index: {}]
  %s4 = inlined_call_operand.hbm [shape: f32[32,256], index: 4, kind: input, shape index: {}]
  %s5 = inlined_call_operand.hbm [shape: f32[32,256], index: 5, kind: input, shape index: {}]
  %s6 = inlined_call_operand.hbm [shape: f32[32,256], index: 6, kind: input, shape index: {}]
  %s7 = inlined_call_operand.vmem [shape: f32[1,256], index: 7, kind: input, shape index: {}]
  %s8 = inlined_call_operand.vmem [shape: f32[128,2], index: 8, kind: input, shape index: {}]
  %s9 = inlined_call_operand.vmem [shape: f32[1,2], index: 9, kind: input, shape index: {}]
  %s10 = inlined_call_operand.vmem [shape: f32[8,2], index: 10, kind: output, shape index: {}]
  %s11 = sld [smem:[#allocation0]]
  $region66: #{tpu_custom_call.1} parent=0
    _
  %s13 = ssub.s32 1, %s11
  %s14 = scalar_select 0, %s13, %s11
  $region1: #{tpu_custom_call.1} parent=0
    #allocation5 [shape = 'u8[32768]{0}', space=vmem, size = 0x8000, scoped, tag = 'input window, operand 2, single buffered']
    #allocation6 [shape = 's32[1]{0}', space=sflag, size = 0x4, scoped, tag = 'scoped memory for tpu_custom_call.1']
    #allocation7 [shape = 'u8[32768]{0}', space=vmem, size = 0x8000, scoped, tag = 'input window, operand 4, single buffered']
    #allocation8 [shape = 's32[1]{0}', space=sflag, size = 0x4, scoped, tag = 'scoped memory for tpu_custom_call.1']
    #allocation9 [shape = 'u8[32768]{0}', space=vmem, size = 0x8000, scoped, tag = 'input window, operand 5, single buffered']
    #allocation10 [shape = 'u8[32768]{0}', space=vmem, size = 0x8000, scoped, tag = 'input window, operand 6, single buffered']
    #allocation11 [shape = 's32[1]{0}', space=sflag, size = 0x4, scoped, tag = 'scoped memory for tpu_custom_call.1']
    %15 = vsyncpa [#allocation6], 0
    %16 = vsyncpa [#allocation8], 0
    %17 = vsyncpa [#allocation11], 0
    // Predicated region
    $region2: #{tpu_custom_call.1} parent=1 // pred_check
      _
    $region3: #{tpu_custom_call.1} parent=1 // pred_check_branch
      %19 = sbr.rel (0) target = $region5
    $region4: #{tpu_custom_call.1} parent=1 // pred_region
      _
    $region5: #{tpu_custom_call.1} parent=1 // pred_fallthru
      _
    // Predicated region
    $region6: #{tpu_custom_call.1} parent=1 // pred_check
      _
    $region7: #{tpu_custom_call.1} parent=1 // pred_check_branch
      %21 = sbr.rel (0) target = $region9
    $region8: #{tpu_custom_call.1} parent=1 // pred_region
      _
    $region9: #{tpu_custom_call.1} parent=1 // pred_fallthru
      _
    // Predicated region
    $region10: #{tpu_custom_call.1} parent=1 // pred_check
      _
    $region11: #{tpu_custom_call.1} parent=1 // pred_check_branch
      %23 = sbr.rel (0) target = $region13
    $region12: #{tpu_custom_call.1} parent=1 // pred_region
      %s25 = ssub.s32 1024, 1024
      %26 = vsyncadd [#allocation6], %s25
      %s27 = sshll.u32 [#allocation5], 4
      %s28 = int_to_ptr.vmem [resolvable:$true] %s27
      %33 = dma.hbm_to_vmem [thread:$0]  %s2, 1024, %s28, [#allocation6], 256, 256, 16
    $region13: #{tpu_custom_call.1} parent=1 // pred_fallthru
      _
    // Predicated region
    $region14: #{tpu_custom_call.1} parent=1 // pred_check
      _
    $region15: #{tpu_custom_call.1} parent=1 // pred_check_branch
      %35 = sbr.rel (0) target = $region17
    $region16: #{tpu_custom_call.1} parent=1 // pred_region
      _
    $region17: #{tpu_custom_call.1} parent=1 // pred_fallthru
      _
    // Predicated region
    $region18: #{tpu_custom_call.1} parent=1 // pred_check
      _
    $region19: #{tpu_custom_call.1} parent=1 // pred_check_branch
      %37 = sbr.rel (0) target = $region21
    $region20: #{tpu_custom_call.1} parent=1 // pred_region
      %s39 = ssub.s32 1024, 1024
      %40 = vsyncadd [#allocation8], %s39
      %s41 = sshll.u32 [#allocation7], 4
      %s42 = int_to_ptr.vmem [resolvable:$true] %s41
      %47 = dma.hbm_to_vmem [thread:$0]  %s4, 1024, %s42, [#allocation8], 256, 256, 16
    $region21: #{tpu_custom_call.1} parent=1 // pred_fallthru
      _
    // Predicated region
    $region22: #{tpu_custom_call.1} parent=1 // pred_check
      _
    $region23: #{tpu_custom_call.1} parent=1 // pred_check_branch
      %49 = sbr.rel (0) target = $region25
    $region24: #{tpu_custom_call.1} parent=1 // pred_region
      %s51 = ssub.s32 1024, 1024
      %52 = vsyncadd [#allocation8], %s51
      %s53 = sshll.u32 [#allocation9], 4
      %s54 = int_to_ptr.vmem [resolvable:$true] %s53
      %59 = dma.hbm_to_vmem [thread:$0]  %s5, 1024, %s54, [#allocation8], 256, 256, 16
    $region25: #{tpu_custom_call.1} parent=1 // pred_fallthru
      _
    // Predicated region
    $region26: #{tpu_custom_call.1} parent=1 // pred_check
      _
    $region27: #{tpu_custom_call.1} parent=1 // pred_check_branch
      %61 = sbr.rel (0) target = $region29
    $region28: #{tpu_custom_call.1} parent=1 // pred_region
      %s63 = ssub.s32 1024, 1024
      %64 = vsyncadd [#allocation11], %s63
      %s65 = sshll.u32 [#allocation10], 4
      %s66 = int_to_ptr.vmem [resolvable:$true] %s65
      %71 = dma.hbm_to_vmem [thread:$0]  %s6, 1024, %s66, [#allocation11], 256, 256, 16
    $region29: #{tpu_custom_call.1} parent=1 // pred_fallthru
      _
    // Predicated region
    $region30: #{tpu_custom_call.1} parent=1 // pred_check
      _
    $region31: #{tpu_custom_call.1} parent=1 // pred_check_branch
      %73 = sbr.rel (0) target = $region33
    $region32: #{tpu_custom_call.1} parent=1 // pred_region
      _
    $region33: #{tpu_custom_call.1} parent=1 // pred_fallthru
      _
    // Predicated region
    $region34: #{tpu_custom_call.1} parent=1 // pred_check
      _
    $region35: #{tpu_custom_call.1} parent=1 // pred_check_branch
      %75 = sbr.rel (0) target = $region37
    $region36: #{tpu_custom_call.1} parent=1 // pred_region
      _
    $region37: #{tpu_custom_call.1} parent=1 // pred_fallthru
      _
    // Predicated region
    $region38: #{tpu_custom_call.1} parent=1 // pred_check
      _
    $region39: #{tpu_custom_call.1} parent=1 // pred_check_branch
      %77 = sbr.rel (0) target = $region41
    $region40: #{tpu_custom_call.1} parent=1 // pred_region
      _
    $region41: #{tpu_custom_call.1} parent=1 // pred_fallthru
      _
    // Predicated region
    $region42: #{tpu_custom_call.1} parent=1 // pred_check
      _
    $region43: #{tpu_custom_call.1} parent=1 // pred_check_branch
      %79 = sbr.rel (0) target = $region45
    $region44: #{tpu_custom_call.1} parent=1 // pred_region
      %80 = dma.done [#allocation6], 1024
    $region45: #{tpu_custom_call.1} parent=1 // pred_fallthru
      _
    // Predicated region
    $region46: #{tpu_custom_call.1} parent=1 // pred_check
      _
    $region47: #{tpu_custom_call.1} parent=1 // pred_check_branch
      %82 = sbr.rel (0) target = $region49
    $region48: #{tpu_custom_call.1} parent=1 // pred_region
      %83 = dma.done [#allocation8], 1024
    $region49: #{tpu_custom_call.1} parent=1 // pred_fallthru
      _
    // Predicated region
    $region50: #{tpu_custom_call.1} parent=1 // pred_check
      _
    $region51: #{tpu_custom_call.1} parent=1 // pred_check_branch
      %85 = sbr.rel (0) target = $region53
    $region52: #{tpu_custom_call.1} parent=1 // pred_region
      %86 = dma.done [#allocation8], 1024
    $region53: #{tpu_custom_call.1} parent=1 // pred_fallthru
      _
    // Predicated region
    $region54: #{tpu_custom_call.1} parent=1 // pred_check
      _
    $region55: #{tpu_custom_call.1} parent=1 // pred_check_branch
      %88 = sbr.rel (0) target = $region57
    $region56: #{tpu_custom_call.1} parent=1 // pred_region
      %89 = dma.done [#allocation11], 1024
    $region57: #{tpu_custom_call.1} parent=1 // pred_fallthru
      _
    %v90 = vld [vmem:[%s0] sm:$0xff]
    %v91 = vld [vmem:[%s0 + $0x8] sm:$0xff]
    %v92 = vld [vmem:[%s0 + $0x10] sm:$0xff]
    %v93 = vld [vmem:[%s0 + $0x18] sm:$0xff]
    %v94 = vld [vmem:[%s0 + $0x20] sm:$0xff]
    %v95 = vld [vmem:[%s0 + $0x28] sm:$0xff]
    %v96 = vld [vmem:[%s0 + $0x30] sm:$0xff]
    %v97 = vld [vmem:[%s0 + $0x38] sm:$0xff]
    %v98 = vld [vmem:[%s1] sm:$0xff]
    %v99 = vld [vmem:[%s1 + $0x8] sm:$0xff]
    %v100 = vld [vmem:[%s1 + $0x10] sm:$0xff]
    %v101 = vld [vmem:[%s1 + $0x18] sm:$0xff]
    %v102 = vld [vmem:[%s1 + $0x20] sm:$0xff]
    %v103 = vld [vmem:[%s1 + $0x28] sm:$0xff]
    %v104 = vld [vmem:[%s1 + $0x30] sm:$0xff]
    %v105 = vld [vmem:[%s1 + $0x38] sm:$0xff]
    %v106 = vld [vmem:[%s3] sm:$0x3]
    %v108 = vlaneseq
    %v109 = vshrl.u32 %v108, 7
    %v110 = vsub.s32 0, %v109
    %v111 = vrot.slane %v106, %v110
    %v112 = vlaneseq
    %v113 = vshrl.u32 %v112, 7
    %v114 = vsub.s32 1, %v113
    %v115 = vrot.slane %v106, %v114
    %vm118 = vcmask 261120
    %v120 = vsel %vm118, %v90, 0
    %v123 = vsel %vm118, %v91, 0
    %v126 = vsel %vm118, %v92, 0
    %v129 = vsel %vm118, %v93, 0
    %v132 = vsel %vm118, %v94, 0
    %v135 = vsel %vm118, %v95, 0
    %v138 = vsel %vm118, %v96, 0
    %v141 = vsel %vm118, %v97, 0
    %143 = vmatprep.subr.mxu0 0.0
    %144 = vmatpush1.msra.mxu0 0.0
    %145 = vmatprep.subr.mxu0 0.0
    %146 = vmatpush1.msra.mxu0 0.0
    %147 = vmatprep.subr.mxu0 0.0
    %148 = vmatpush1.msra.mxu0 0.0
    %149 = vmatprep.subr.mxu0 0.0
    %150 = vmatpush1.msra.mxu0 0.0
    %151 = vmatprep.subr.mxu0 0.0
    %152 = vmatpush1.msra.mxu0 0.0
    %153 = vmatprep.subr.mxu0 0.0
    %154 = vmatpush1.msra.mxu0 0.0
    %155 = vmatprep.subr.mxu0 0.0
    %156 = vmatpush1.msra.mxu0 0.0
    %157 = vmatprep.subr.mxu0 0.0
    %158 = vmatpush1.msra.mxu0 0.0
    %159 = vmatprep.subr.mxu0 0.0
    %160 = vmatpush1.msra.mxu0 0.0
    %161 = vmatprep.subr.mxu0 0.0
    %162 = vmatpush1.msra.mxu0 0.0
    %163 = vmatprep.subr.mxu0 0.0
    %164 = vmatpush1.msra.mxu0 0.0
    %165 = vmatprep.subr.mxu0 0.0
    %166 = vmatpush1.msra.mxu0 0.0
    %167 = vmatprep.subr.mxu0 %v105
    %168 = vmatpush1.msra.mxu0 %v104
    %169 = vmatprep.subr.mxu0 %v103
    %170 = vmatpush1.msra.mxu0 %v102
    %171 = vmatprep.subr.mxu0 %v101
    %172 = vmatpush1.msra.mxu0 %v100
    %173 = vmatprep.subr.mxu0 %v99
    %174 = vmatpush1.msra.mxu0 %v98
    %175 = vmatprep.subr.mxu0 0.0
    %176 = vmatpush2.msra.mxu0 0.0
    %177 = vmatprep.subr.mxu0 0.0
    %178 = vmatpush2.msra.mxu0 0.0
    %179 = vmatprep.subr.mxu0 0.0
    %180 = vmatpush2.msra.mxu0 0.0
    %181 = vmatprep.subr.mxu0 0.0
    %182 = vmatpush2.msra.mxu0 0.0
    %183 = vmatprep.subr.mxu0 0.0
    %184 = vmatpush2.msra.mxu0 0.0
    %185 = vmatprep.subr.mxu0 0.0
    %186 = vmatpush2.msra.mxu0 0.0
    %187 = vmatprep.subr.mxu0 0.0
    %188 = vmatpush2.msra.mxu0 0.0
    %189 = vmatprep.subr.mxu0 0.0
    %190 = vmatpush2.msra.mxu0 0.0
    %191 = vmatprep.subr.mxu0 0.0
    %192 = vmatpush2.msra.mxu0 0.0
    %193 = vmatprep.subr.mxu0 0.0
    %194 = vmatpush2.msra.mxu0 0.0
    %195 = vmatprep.subr.mxu0 0.0
    %196 = vmatpush2.msra.mxu0 0.0
    %197 = vmatprep.subr.mxu0 0.0
    %198 = vmatpush2.msra.mxu0 0.0
    %199 = vmatprep.subr.mxu0 0.0
    %200 = vmatpush2.msra.mxu0 0.0
    %201 = vmatprep.subr.mxu0 0.0
    %202 = vmatpush2.msra.mxu0 0.0
    %203 = vmatprep.subr.mxu0 0.0
    %204 = vmatpush2.msra.mxu0 0.0
    %205 = vmatprep.subr.mxu0 0.0
    %206 = vmatpush2.msra.mxu0 0.0
    %207 = vmatprep.mubr.f32.mxu0 0.0
    %208 = vmatmul.mubr.f32.gmra.mxu0 %v120
    %v209 = vpop.f32.mrf.mxu0
    %v210 = vadd.f32 %v111, %v209
    %v211 = vpop.f32.mrf.mxu0
    %v212 = vadd.f32 %v115, %v211
    %213 = vmatprep.mubr.f32.mxu0 0.0
    %214 = vmatmul.mubr.f32.gmra.mxu0 %v123
    %v215 = vpop.f32.mrf.mxu0
    %v216 = vadd.f32 %v111, %v215
    %v217 = vpop.f32.mrf.mxu0
    %v218 = vadd.f32 %v115, %v217
    %219 = vmatprep.mubr.f32.mxu0 0.0
    %220 = vmatmul.mubr.f32.gmra.mxu0 %v126
    %v221 = vpop.f32.mrf.mxu0
    %v222 = vadd.f32 %v111, %v221
    %v223 = vpop.f32.mrf.mxu0
    %v224 = vadd.f32 %v115, %v223
    %225 = vmatprep.mubr.f32.mxu0 0.0
    %226 = vmatmul.mubr.f32.gmra.mxu0 %v129
    %v227 = vpop.f32.mrf.mxu0
    %v228 = vadd.f32 %v111, %v227
    %v229 = vpop.f32.mrf.mxu0
    %v230 = vadd.f32 %v115, %v229
    %231 = vmatprep.mubr.f32.mxu0 0.0
    %232 = vmatmul.mubr.f32.gmra.mxu0 %v132
    %v233 = vpop.f32.mrf.mxu0
    %v234 = vadd.f32 %v111, %v233
    %v235 = vpop.f32.mrf.mxu0
    %v236 = vadd.f32 %v115, %v235
    %237 = vmatprep.mubr.f32.mxu0 0.0
    %238 = vmatmul.mubr.f32.gmra.mxu0 %v135
    %v239 = vpop.f32.mrf.mxu0
    %v240 = vadd.f32 %v111, %v239
    %v241 = vpop.f32.mrf.mxu0
    %v242 = vadd.f32 %v115, %v241
    %243 = vmatprep.mubr.f32.mxu0 0.0
    %244 = vmatmul.mubr.f32.gmra.mxu0 %v138
    %v245 = vpop.f32.mrf.mxu0
    %v246 = vadd.f32 %v111, %v245
    %v247 = vpop.f32.mrf.mxu0
    %v248 = vadd.f32 %v115, %v247
    %249 = vmatprep.mubr.f32.mxu0 0.0
    %250 = vmatmul.mubr.f32.gmra.mxu0 %v141
    %v251 = vpop.f32.mrf.mxu0
    %v252 = vadd.f32 %v111, %v251
    %v253 = vpop.f32.mrf.mxu0
    %v254 = vadd.f32 %v115, %v253
    %255 = vdwg.mxu0
    %256 = vst [vmem:[#allocation2] sm:$0xff] %v210
    %257 = vst [vmem:[#allocation2 + $0x8] sm:$0xff] %v212
    %258 = vst [vmem:[#allocation2 + $0x10] sm:$0xff] %v216
    %259 = vst [vmem:[#allocation2 + $0x18] sm:$0xff] %v218
    %260 = vst [vmem:[#allocation2 + $0x20] sm:$0xff] %v222
    %261 = vst [vmem:[#allocation2 + $0x28] sm:$0xff] %v224
    %262 = vst [vmem:[#allocation2 + $0x30] sm:$0xff] %v228
    %263 = vst [vmem:[#allocation2 + $0x38] sm:$0xff] %v230
    %264 = vst [vmem:[#allocation2 + $0x40] sm:$0xff] %v234
    %265 = vst [vmem:[#allocation2 + $0x48] sm:$0xff] %v236
    %266 = vst [vmem:[#allocation2 + $0x50] sm:$0xff] %v240
    %267 = vst [vmem:[#allocation2 + $0x58] sm:$0xff] %v242
    %268 = vst [vmem:[#allocation2 + $0x60] sm:$0xff] %v246
    %269 = vst [vmem:[#allocation2 + $0x68] sm:$0xff] %v248
    %270 = vst [vmem:[#allocation2 + $0x70] sm:$0xff] %v252
    %271 = vst [vmem:[#allocation2 + $0x78] sm:$0xff] %v254
    %v272 = vld [vmem:[#allocation5] sm:$0xff]
    %v273 = vld [vmem:[#allocation5 + $0x8] sm:$0xff]
    %v274 = vld [vmem:[#allocation5 + $0x10] sm:$0xff]
    %v275 = vld [vmem:[#allocation5 + $0x18] sm:$0xff]
    %v276 = vld [vmem:[#allocation5 + $0x20] sm:$0xff]
    %v277 = vld [vmem:[#allocation5 + $0x28] sm:$0xff]
    %v278 = vld [vmem:[#allocation5 + $0x30] sm:$0xff]
    %v279 = vld [vmem:[#allocation5 + $0x38] sm:$0xff]
    %v280 = vld [vmem:[#allocation2] sm:$0xff]
    %s281 = scalar_lea.vmem [#allocation2], 112
    %v282 = vld [vmem:[%s281 + $0x8] sm:$0xff]
    %v283 = vxor.u32 %v280, 2147483648
    %v284 = vxor.u32 %v282, 2147483648
    %v285 = vmul.f32 %v283, 1.442695
    %v286 = vpow.pop %v285
    %v287 = vmul.f32 %v284, 1.442695
    %v288 = vpow.pop %v287
    %v289 = vadd.f32 %v286, 1.0
    %v290 = vadd.f32 %v288, 1.0
    %v291 = vrcp.pop %v289
    %v292 = vmul.f32 1.0, %v291
    %v293 = vrcp.pop %v290
    %v294 = vmul.f32 1.0, %v293
    %v295 = vtanh.pop %v280
    %v296 = vtanh.pop %v282
    %v297 = vmul.f32 %v292, 0.0
    %v298 = vmul.f32 %v294, 0.0
    %301 = vrot.lane.b32.xlu0 %v295, 64
    %v302 = vpop.permute.xlu0 %301
    %303 = vrot.lane.b32.xlu0 %v296, 64
    %v304 = vpop.permute.xlu0 %303
    %v307 = vmul.f32 %v292, %v302
    %v308 = vmul.f32 %v294, %v304
    %311 = vrot.lane.b32.xlu0 %v307, 32
    %v312 = vpop.permute.xlu0 %311
    %313 = vrot.lane.b32.xlu0 %v308, 32
    %v314 = vpop.permute.xlu0 %313
    %v317 = vadd.f32 %v297, %v312
    %v318 = vadd.f32 %v298, %v314
    %v319 = vtanh.pop %v317
    %v320 = vtanh.pop %v318
    %323 = vrot.lane.b32.xlu0 %v319, 64
    %v324 = vpop.permute.xlu0 %323
    %325 = vrot.lane.b32.xlu0 %v320, 64
    %v326 = vpop.permute.xlu0 %325
    %v329 = vmul.f32 %v292, %v324
    %v330 = vmul.f32 %v294, %v326
    %332 = vrot.lane.b32.xlu0 %v329, 32
    %v333 = vpop.permute.xlu0 %332
    %335 = vst.msk [vmem:[#allocation3] sm:$0xff] %vm118, %v333
    %337 = vrot.lane.b32.xlu0 %v330, 32
    %v338 = vpop.permute.xlu0 %337
    %s340 = scalar_lea.vmem [#allocation4], 56
    %341 = vst.msk [vmem:[%s340] sm:$0xff] %vm118, %v338
    %v342 = vsel %vm118, %v333, 0
    %v344 = vsel %vm118, %v338, 0
    %346 = vmatprep.subr.mxu0 0.0
    %347 = vmatpush1.msra.mxu0 0.0
    %348 = vmatprep.subr.mxu0 0.0
    %349 = vmatpush1.msra.mxu0 0.0
    %350 = vmatprep.subr.mxu0 0.0
    %351 = vmatpush1.msra.mxu0 0.0
    %352 = vmatprep.subr.mxu0 0.0
    %353 = vmatpush1.msra.mxu0 0.0
    %354 = vmatprep.subr.mxu0 0.0
    %355 = vmatpush1.msra.mxu0 0.0
    %356 = vmatprep.subr.mxu0 0.0
    %357 = vmatpush1.msra.mxu0 0.0
    %358 = vmatprep.subr.mxu0 0.0
    %359 = vmatpush1.msra.mxu0 0.0
    %360 = vmatprep.subr.mxu0 0.0
    %361 = vmatpush1.msra.mxu0 0.0
    %362 = vmatprep.subr.mxu0 0.0
    %363 = vmatpush1.msra.mxu0 0.0
    %364 = vmatprep.subr.mxu0 0.0
    %365 = vmatpush1.msra.mxu0 0.0
    %366 = vmatprep.subr.mxu0 0.0
    %367 = vmatpush1.msra.mxu0 0.0
    %368 = vmatprep.subr.mxu0 0.0
    %369 = vmatpush1.msra.mxu0 0.0
    %370 = vmatprep.subr.mxu0 %v279
    %371 = vmatpush1.msra.mxu0 %v278
    %372 = vmatprep.subr.mxu0 %v277
    %373 = vmatpush1.msra.mxu0 %v276
    %374 = vmatprep.subr.mxu0 %v275
    %375 = vmatpush1.msra.mxu0 %v274
    %376 = vmatprep.subr.mxu0 %v273
    %377 = vmatpush1.msra.mxu0 %v272
    %378 = vmatprep.subr.mxu0 0.0
    %379 = vmatpush2.msra.mxu0 0.0
    %380 = vmatprep.subr.mxu0 0.0
    %381 = vmatpush2.msra.mxu0 0.0
    %382 = vmatprep.subr.mxu0 0.0
    %383 = vmatpush2.msra.mxu0 0.0
    %384 = vmatprep.subr.mxu0 0.0
    %385 = vmatpush2.msra.mxu0 0.0
    %386 = vmatprep.subr.mxu0 0.0
    %387 = vmatpush2.msra.mxu0 0.0
    %388 = vmatprep.subr.mxu0 0.0
    %389 = vmatpush2.msra.mxu0 0.0
    %390 = vmatprep.subr.mxu0 0.0
    %391 = vmatpush2.msra.mxu0 0.0
    %392 = vmatprep.subr.mxu0 0.0
    %393 = vmatpush2.msra.mxu0 0.0
    %394 = vmatprep.subr.mxu0 0.0
    %395 = vmatpush2.msra.mxu0 0.0
    %396 = vmatprep.subr.mxu0 0.0
    %397 = vmatpush2.msra.mxu0 0.0
    %398 = vmatprep.subr.mxu0 0.0
    %399 = vmatpush2.msra.mxu0 0.0
    %400 = vmatprep.subr.mxu0 0.0
    %401 = vmatpush2.msra.mxu0 0.0
    %402 = vmatprep.subr.mxu0 0.0
    %403 = vmatpush2.msra.mxu0 0.0
    %404 = vmatprep.subr.mxu0 0.0
    %405 = vmatpush2.msra.mxu0 0.0
    %406 = vmatprep.subr.mxu0 0.0
    %407 = vmatpush2.msra.mxu0 0.0
    %408 = vmatprep.subr.mxu0 0.0
    %409 = vmatpush2.msra.mxu0 0.0
    %410 = vmatprep.mubr.f32.mxu0 0.0
    %411 = vmatmul.mubr.f32.gmra.mxu0 %v342
    %v412 = vpop.f32.mrf.mxu0
    %v413 = vadd.f32 0.0, %v412
    %v414 = vpop.f32.mrf.mxu0
    %415 = vmatprep.mubr.f32.mxu0 0.0
    %416 = vmatmul.mubr.f32.gmra.mxu0 %v344
    %v417 = vpop.f32.mrf.mxu0
    %v418 = vpop.f32.mrf.mxu0
    %v419 = vadd.f32 0.0, %v418
    %420 = vdwg.mxu0
    %s421 = scalar_lea.vmem [#allocation2], 16
    %v422 = vld [vmem:[%s421] sm:$0xff]
    %s423 = scalar_lea.vmem [#allocation2], 96
    %v424 = vld [vmem:[%s423 + $0x8] sm:$0xff]
    %v425 = vadd.f32 %v422, %v413
    %v426 = vadd.f32 %v424, %v419
    %v427 = vxor.u32 %v425, 2147483648
    %v428 = vxor.u32 %v426, 2147483648
    %v429 = vmul.f32 %v427, 1.442695
    %v430 = vpow.pop %v429
    %v431 = vmul.f32 %v428, 1.442695
    %v432 = vpow.pop %v431
    %v433 = vadd.f32 %v430, 1.0
    %v434 = vadd.f32 %v432, 1.0
    %v435 = vrcp.pop %v433
    %v436 = vmul.f32 1.0, %v435
    %v437 = vrcp.pop %v434
    %v438 = vmul.f32 1.0, %v437
    %v439 = vtanh.pop %v425
    %v440 = vtanh.pop %v426
    %v441 = vmul.f32 %v436, %v317
    %v442 = vmul.f32 %v438, %v318
    %445 = vrot.lane.b32.xlu0 %v439, 64
    %v446 = vpop.permute.xlu0 %445
    %447 = vrot.lane.b32.xlu0 %v440, 64
    %v448 = vpop.permute.xlu0 %447
    %v451 = vmul.f32 %v436, %v446
    %v452 = vmul.f32 %v438, %v448
    %455 = vrot.lane.b32.xlu0 %v451, 32
    %v456 = vpop.permute.xlu0 %455
    %457 = vrot.lane.b32.xlu0 %v452, 32
    %v458 = vpop.permute.xlu0 %457
    %v461 = vadd.f32 %v441, %v456
    %v462 = vadd.f32 %v442, %v458
    %v463 = vtanh.pop %v461
    %v464 = vtanh.pop %v462
    %467 = vrot.lane.b32.xlu0 %v463, 64
    %v468 = vpop.permute.xlu0 %467
    %469 = vrot.lane.b32.xlu0 %v464, 64
    %v470 = vpop.permute.xlu0 %469
    %v473 = vmul.f32 %v436, %v468
    %v474 = vmul.f32 %v438, %v470
    %476 = vrot.lane.b32.xlu0 %v473, 32
    %v477 = vpop.permute.xlu0 %476
    %s479 = scalar_lea.vmem [#allocation3], 8
    %480 = vst.msk [vmem:[%s479] sm:$0xff] %vm118, %v477
    %482 = vrot.lane.b32.xlu0 %v474, 32
    %v483 = vpop.permute.xlu0 %482
    %s485 = scalar_lea.vmem [#allocation4], 48
    %486 = vst.msk [vmem:[%s485] sm:$0xff] %vm118, %v483
    %v487 = vsel %vm118, %v477, 0
    %v489 = vsel %vm118, %v483, 0
    %491 = vmatprep.subr.mxu0 0.0
    %492 = vmatpush1.msra.mxu0 0.0
    %493 = vmatprep.subr.mxu0 0.0
    %494 = vmatpush1.msra.mxu0 0.0
    %495 = vmatprep.subr.mxu0 0.0
    %496 = vmatpush1.msra.mxu0 0.0
    %497 = vmatprep.subr.mxu0 0.0
    %498 = vmatpush1.msra.mxu0 0.0
    %499 = vmatprep.subr.mxu0 0.0
    %500 = vmatpush1.msra.mxu0 0.0
    %501 = vmatprep.subr.mxu0 0.0
    %502 = vmatpush1.msra.mxu0 0.0
    %503 = vmatprep.subr.mxu0 0.0
    %504 = vmatpush1.msra.mxu0 0.0
    %505 = vmatprep.subr.mxu0 0.0
    %506 = vmatpush1.msra.mxu0 0.0
    %507 = vmatprep.subr.mxu0 0.0
    %508 = vmatpush1.msra.mxu0 0.0
    %509 = vmatprep.subr.mxu0 0.0
    %510 = vmatpush1.msra.mxu0 0.0
    %511 = vmatprep.subr.mxu0 0.0
    %512 = vmatpush1.msra.mxu0 0.0
    %513 = vmatprep.subr.mxu0 0.0
    %514 = vmatpush1.msra.mxu0 0.0
    %515 = vmatprep.subr.mxu0 %v279
    %516 = vmatpush1.msra.mxu0 %v278
    %517 = vmatprep.subr.mxu0 %v277
    %518 = vmatpush1.msra.mxu0 %v276
    %519 = vmatprep.subr.mxu0 %v275
    %520 = vmatpush1.msra.mxu0 %v274
    %521 = vmatprep.subr.mxu0 %v273
    %522 = vmatpush1.msra.mxu0 %v272
    %523 = vmatprep.subr.mxu0 0.0
    %524 = vmatpush2.msra.mxu0 0.0
    %525 = vmatprep.subr.mxu0 0.0
    %526 = vmatpush2.msra.mxu0 0.0
    %527 = vmatprep.subr.mxu0 0.0
    %528 = vmatpush2.msra.mxu0 0.0
    %529 = vmatprep.subr.mxu0 0.0
    %530 = vmatpush2.msra.mxu0 0.0
    %531 = vmatprep.subr.mxu0 0.0
    %532 = vmatpush2.msra.mxu0 0.0
    %533 = vmatprep.subr.mxu0 0.0
    %534 = vmatpush2.msra.mxu0 0.0
    %535 = vmatprep.subr.mxu0 0.0
    %536 = vmatpush2.msra.mxu0 0.0
    %537 = vmatprep.subr.mxu0 0.0
    %538 = vmatpush2.msra.mxu0 0.0
    %539 = vmatprep.subr.mxu0 0.0
    %540 = vmatpush2.msra.mxu0 0.0
    %541 = vmatprep.subr.mxu0 0.0
    %542 = vmatpush2.msra.mxu0 0.0
    %543 = vmatprep.subr.mxu0 0.0
    %544 = vmatpush2.msra.mxu0 0.0
    %545 = vmatprep.subr.mxu0 0.0
    %546 = vmatpush2.msra.mxu0 0.0
    %547 = vmatprep.subr.mxu0 0.0
    %548 = vmatpush2.msra.mxu0 0.0
    %549 = vmatprep.subr.mxu0 0.0
    %550 = vmatpush2.msra.mxu0 0.0
    %551 = vmatprep.subr.mxu0 0.0
    %552 = vmatpush2.msra.mxu0 0.0
    %553 = vmatprep.subr.mxu0 0.0
    %554 = vmatpush2.msra.mxu0 0.0
    %555 = vmatprep.mubr.f32.mxu0 0.0
    %556 = vmatmul.mubr.f32.gmra.mxu0 %v487
    %v557 = vpop.f32.mrf.mxu0
    %v558 = vadd.f32 0.0, %v557
    %v559 = vpop.f32.mrf.mxu0
    %560 = vmatprep.mubr.f32.mxu0 0.0
    %561 = vmatmul.mubr.f32.gmra.mxu0 %v489
    %v562 = vpop.f32.mrf.mxu0
    %v563 = vpop.f32.mrf.mxu0
    %v564 = vadd.f32 0.0, %v563
    %565 = vdwg.mxu0
    %s566 = scalar_lea.vmem [#allocation2], 32
    %v567 = vld [vmem:[%s566] sm:$0xff]
    %s568 = scalar_lea.vmem [#allocation2], 80
    %v569 = vld [vmem:[%s568 + $0x8] sm:$0xff]
    %v570 = vadd.f32 %v567, %v558
    %v571 = vadd.f32 %v569, %v564
    %v572 = vxor.u32 %v570, 2147483648
    %v573 = vxor.u32 %v571, 2147483648
    %v574 = vmul.f32 %v572, 1.442695
    %v575 = vpow.pop %v574
    %v576 = vmul.f32 %v573, 1.442695
    %v577 = vpow.pop %v576
    %v578 = vadd.f32 %v575, 1.0
    %v579 = vadd.f32 %v577, 1.0
    %v580 = vrcp.pop %v578
    %v581 = vmul.f32 1.0, %v580
    %v582 = vrcp.pop %v579
    %v583 = vmul.f32 1.0, %v582
    %v584 = vtanh.pop %v570
    %v585 = vtanh.pop %v571
    %v586 = vmul.f32 %v581, %v461
    %v587 = vmul.f32 %v583, %v462
    %590 = vrot.lane.b32.xlu0 %v584, 64
    %v591 = vpop.permute.xlu0 %590
    %592 = vrot.lane.b32.xlu0 %v585, 64
    %v593 = vpop.permute.xlu0 %592
    %v596 = vmul.f32 %v581, %v591
    %v597 = vmul.f32 %v583, %v593
    %600 = vrot.lane.b32.xlu0 %v596, 32
    %v601 = vpop.permute.xlu0 %600
    %602 = vrot.lane.b32.xlu0 %v597, 32
    %v603 = vpop.permute.xlu0 %602
    %v606 = vadd.f32 %v586, %v601
    %v607 = vadd.f32 %v587, %v603
    %v608 = vtanh.pop %v606
    %v609 = vtanh.pop %v607
    %612 = vrot.lane.b32.xlu0 %v608, 64
    %v613 = vpop.permute.xlu0 %612
    %614 = vrot.lane.b32.xlu0 %v609, 64
    %v615 = vpop.permute.xlu0 %614
    %v618 = vmul.f32 %v581, %v613
    %v619 = vmul.f32 %v583, %v615
    %621 = vrot.lane.b32.xlu0 %v618, 32
    %v622 = vpop.permute.xlu0 %621
    %s624 = scalar_lea.vmem [#allocation3], 16
    %625 = vst.msk [vmem:[%s624] sm:$0xff] %vm118, %v622
    %627 = vrot.lane.b32.xlu0 %v619, 32
    %v628 = vpop.permute.xlu0 %627
    %s630 = scalar_lea.vmem [#allocation4], 40
    %631 = vst.msk [vmem:[%s630] sm:$0xff] %vm118, %v628
    %v632 = vsel %vm118, %v622, 0
    %v634 = vsel %vm118, %v628, 0
    %636 = vmatprep.subr.mxu0 0.0
    %637 = vmatpush1.msra.mxu0 0.0
    %638 = vmatprep.subr.mxu0 0.0
    %639 = vmatpush1.msra.mxu0 0.0
    %640 = vmatprep.subr.mxu0 0.0
    %641 = vmatpush1.msra.mxu0 0.0
    %642 = vmatprep.subr.mxu0 0.0
    %643 = vmatpush1.msra.mxu0 0.0
    %644 = vmatprep.subr.mxu0 0.0
    %645 = vmatpush1.msra.mxu0 0.0
    %646 = vmatprep.subr.mxu0 0.0
    %647 = vmatpush1.msra.mxu0 0.0
    %648 = vmatprep.subr.mxu0 0.0
    %649 = vmatpush1.msra.mxu0 0.0
    %650 = vmatprep.subr.mxu0 0.0
    %651 = vmatpush1.msra.mxu0 0.0
    %652 = vmatprep.subr.mxu0 0.0
    %653 = vmatpush1.msra.mxu0 0.0
    %654 = vmatprep.subr.mxu0 0.0
    %655 = vmatpush1.msra.mxu0 0.0
    %656 = vmatprep.subr.mxu0 0.0
    %657 = vmatpush1.msra.mxu0 0.0
    %658 = vmatprep.subr.mxu0 0.0
    %659 = vmatpush1.msra.mxu0 0.0
    %660 = vmatprep.subr.mxu0 %v279
    %661 = vmatpush1.msra.mxu0 %v278
    %662 = vmatprep.subr.mxu0 %v277
    %663 = vmatpush1.msra.mxu0 %v276
    %664 = vmatprep.subr.mxu0 %v275
    %665 = vmatpush1.msra.mxu0 %v274
    %666 = vmatprep.subr.mxu0 %v273
    %667 = vmatpush1.msra.mxu0 %v272
    %668 = vmatprep.subr.mxu0 0.0
    %669 = vmatpush2.msra.mxu0 0.0
    %670 = vmatprep.subr.mxu0 0.0
    %671 = vmatpush2.msra.mxu0 0.0
    %672 = vmatprep.subr.mxu0 0.0
    %673 = vmatpush2.msra.mxu0 0.0
    %674 = vmatprep.subr.mxu0 0.0
    %675 = vmatpush2.msra.mxu0 0.0
    %676 = vmatprep.subr.mxu0 0.0
    %677 = vmatpush2.msra.mxu0 0.0
    %678 = vmatprep.subr.mxu0 0.0
    %679 = vmatpush2.msra.mxu0 0.0
    %680 = vmatprep.subr.mxu0 0.0
    %681 = vmatpush2.msra.mxu0 0.0
    %682 = vmatprep.subr.mxu0 0.0
    %683 = vmatpush2.msra.mxu0 0.0
    %684 = vmatprep.subr.mxu0 0.0
    %685 = vmatpush2.msra.mxu0 0.0
    %686 = vmatprep.subr.mxu0 0.0
    %687 = vmatpush2.msra.mxu0 0.0
    %688 = vmatprep.subr.mxu0 0.0
    %689 = vmatpush2.msra.mxu0 0.0
    %690 = vmatprep.subr.mxu0 0.0
    %691 = vmatpush2.msra.mxu0 0.0
    %692 = vmatprep.subr.mxu0 0.0
    %693 = vmatpush2.msra.mxu0 0.0
    %694 = vmatprep.subr.mxu0 0.0
    %695 = vmatpush2.msra.mxu0 0.0
    %696 = vmatprep.subr.mxu0 0.0
    %697 = vmatpush2.msra.mxu0 0.0
    %698 = vmatprep.subr.mxu0 0.0
    %699 = vmatpush2.msra.mxu0 0.0
    %700 = vmatprep.mubr.f32.mxu0 0.0
    %701 = vmatmul.mubr.f32.gmra.mxu0 %v632
    %v702 = vpop.f32.mrf.mxu0
    %v703 = vadd.f32 0.0, %v702
    %v704 = vpop.f32.mrf.mxu0
    %705 = vmatprep.mubr.f32.mxu0 0.0
    %706 = vmatmul.mubr.f32.gmra.mxu0 %v634
    %v707 = vpop.f32.mrf.mxu0
    %v708 = vpop.f32.mrf.mxu0
    %v709 = vadd.f32 0.0, %v708
    %710 = vdwg.mxu0
    %s711 = scalar_lea.vmem [#allocation2], 48
    %v712 = vld [vmem:[%s711] sm:$0xff]
    %s713 = scalar_lea.vmem [#allocation2], 64
    %v714 = vld [vmem:[%s713 + $0x8] sm:$0xff]
    %v715 = vadd.f32 %v712, %v703
    %v716 = vadd.f32 %v714, %v709
    %v717 = vxor.u32 %v715, 2147483648
    %v718 = vxor.u32 %v716, 2147483648
    %v719 = vmul.f32 %v717, 1.442695
    %v720 = vpow.pop %v719
    %v721 = vmul.f32 %v718, 1.442695
    %v722 = vpow.pop %v721
    %v723 = vadd.f32 %v720, 1.0
    %v724 = vadd.f32 %v722, 1.0
    %v725 = vrcp.pop %v723
    %v726 = vmul.f32 1.0, %v725
    %v727 = vrcp.pop %v724
    %v728 = vmul.f32 1.0, %v727
    %v729 = vtanh.pop %v715
    %v730 = vtanh.pop %v716
    %v731 = vmul.f32 %v726, %v606
    %v732 = vmul.f32 %v728, %v607
    %735 = vrot.lane.b32.xlu0 %v729, 64
    %v736 = vpop.permute.xlu0 %735
    %737 = vrot.lane.b32.xlu0 %v730, 64
    %v738 = vpop.permute.xlu0 %737
    %v741 = vmul.f32 %v726, %v736
    %v742 = vmul.f32 %v728, %v738
    %745 = vrot.lane.b32.xlu0 %v741, 32
    %v746 = vpop.permute.xlu0 %745
    %747 = vrot.lane.b32.xlu0 %v742, 32
    %v748 = vpop.permute.xlu0 %747
    %v751 = vadd.f32 %v731, %v746
    %v752 = vadd.f32 %v732, %v748
    %v753 = vtanh.pop %v751
    %v754 = vtanh.pop %v752
    %757 = vrot.lane.b32.xlu0 %v753, 64
    %v758 = vpop.permute.xlu0 %757
    %759 = vrot.lane.b32.xlu0 %v754, 64
    %v760 = vpop.permute.xlu0 %759
    %v763 = vmul.f32 %v726, %v758
    %v764 = vmul.f32 %v728, %v760
    %766 = vrot.lane.b32.xlu0 %v763, 32
    %v767 = vpop.permute.xlu0 %766
    %s769 = scalar_lea.vmem [#allocation3], 24
    %770 = vst.msk [vmem:[%s769] sm:$0xff] %vm118, %v767
    %772 = vrot.lane.b32.xlu0 %v764, 32
    %v773 = vpop.permute.xlu0 %772
    %s775 = scalar_lea.vmem [#allocation4], 32
    %776 = vst.msk [vmem:[%s775] sm:$0xff] %vm118, %v773
    %v777 = vsel %vm118, %v767, 0
    %v779 = vsel %vm118, %v773, 0
    %781 = vmatprep.subr.mxu0 0.0
    %782 = vmatpush1.msra.mxu0 0.0
    %783 = vmatprep.subr.mxu0 0.0
    %784 = vmatpush1.msra.mxu0 0.0
    %785 = vmatprep.subr.mxu0 0.0
    %786 = vmatpush1.msra.mxu0 0.0
    %787 = vmatprep.subr.mxu0 0.0
    %788 = vmatpush1.msra.mxu0 0.0
    %789 = vmatprep.subr.mxu0 0.0
    %790 = vmatpush1.msra.mxu0 0.0
    %791 = vmatprep.subr.mxu0 0.0
    %792 = vmatpush1.msra.mxu0 0.0
    %793 = vmatprep.subr.mxu0 0.0
    %794 = vmatpush1.msra.mxu0 0.0
    %795 = vmatprep.subr.mxu0 0.0
    %796 = vmatpush1.msra.mxu0 0.0
    %797 = vmatprep.subr.mxu0 0.0
    %798 = vmatpush1.msra.mxu0 0.0
    %799 = vmatprep.subr.mxu0 0.0
    %800 = vmatpush1.msra.mxu0 0.0
    %801 = vmatprep.subr.mxu0 0.0
    %802 = vmatpush1.msra.mxu0 0.0
    %803 = vmatprep.subr.mxu0 0.0
    %804 = vmatpush1.msra.mxu0 0.0
    %805 = vmatprep.subr.mxu0 %v279
    %806 = vmatpush1.msra.mxu0 %v278
    %807 = vmatprep.subr.mxu0 %v277
    %808 = vmatpush1.msra.mxu0 %v276
    %809 = vmatprep.subr.mxu0 %v275
    %810 = vmatpush1.msra.mxu0 %v274
    %811 = vmatprep.subr.mxu0 %v273
    %812 = vmatpush1.msra.mxu0 %v272
    %813 = vmatprep.subr.mxu0 0.0
    %814 = vmatpush2.msra.mxu0 0.0
    %815 = vmatprep.subr.mxu0 0.0
    %816 = vmatpush2.msra.mxu0 0.0
    %817 = vmatprep.subr.mxu0 0.0
    %818 = vmatpush2.msra.mxu0 0.0
    %819 = vmatprep.subr.mxu0 0.0
    %820 = vmatpush2.msra.mxu0 0.0
    %821 = vmatprep.subr.mxu0 0.0
    %822 = vmatpush2.msra.mxu0 0.0
    %823 = vmatprep.subr.mxu0 0.0
    %824 = vmatpush2.msra.mxu0 0.0
    %825 = vmatprep.subr.mxu0 0.0
    %826 = vmatpush2.msra.mxu0 0.0
    %827 = vmatprep.subr.mxu0 0.0
    %828 = vmatpush2.msra.mxu0 0.0
    %829 = vmatprep.subr.mxu0 0.0
    %830 = vmatpush2.msra.mxu0 0.0
    %831 = vmatprep.subr.mxu0 0.0
    %832 = vmatpush2.msra.mxu0 0.0
    %833 = vmatprep.subr.mxu0 0.0
    %834 = vmatpush2.msra.mxu0 0.0
    %835 = vmatprep.subr.mxu0 0.0
    %836 = vmatpush2.msra.mxu0 0.0
    %837 = vmatprep.subr.mxu0 0.0
    %838 = vmatpush2.msra.mxu0 0.0
    %839 = vmatprep.subr.mxu0 0.0
    %840 = vmatpush2.msra.mxu0 0.0
    %841 = vmatprep.subr.mxu0 0.0
    %842 = vmatpush2.msra.mxu0 0.0
    %843 = vmatprep.subr.mxu0 0.0
    %844 = vmatpush2.msra.mxu0 0.0
    %845 = vmatprep.mubr.f32.mxu0 0.0
    %846 = vmatmul.mubr.f32.gmra.mxu0 %v777
    %v847 = vpop.f32.mrf.mxu0
    %v848 = vadd.f32 0.0, %v847
    %v849 = vpop.f32.mrf.mxu0
    %850 = vmatprep.mubr.f32.mxu0 0.0
    %851 = vmatmul.mubr.f32.gmra.mxu0 %v779
    %v852 = vpop.f32.mrf.mxu0
    %v853 = vpop.f32.mrf.mxu0
    %v854 = vadd.f32 0.0, %v853
    %855 = vdwg.mxu0
    %v856 = vld [vmem:[%s713] sm:$0xff]
    %v857 = vld [vmem:[%s711 + $0x8] sm:$0xff]
    %v858 = vadd.f32 %v856, %v848
    %v859 = vadd.f32 %v857, %v854
    %v860 = vxor.u32 %v858, 2147483648
    %v861 = vxor.u32 %v859, 2147483648
    %v862 = vmul.f32 %v860, 1.442695
    %v863 = vpow.pop %v862
    %v864 = vmul.f32 %v861, 1.442695
    %v865 = vpow.pop %v864
    %v866 = vadd.f32 %v863, 1.0
    %v867 = vadd.f32 %v865, 1.0
    %v868 = vrcp.pop %v866
    %v869 = vmul.f32 1.0, %v868
    %v870 = vrcp.pop %v867
    %v871 = vmul.f32 1.0, %v870
    %v872 = vtanh.pop %v858
    %v873 = vtanh.pop %v859
    %v874 = vmul.f32 %v869, %v751
    %v875 = vmul.f32 %v871, %v752
    %878 = vrot.lane.b32.xlu0 %v872, 64
    %v879 = vpop.permute.xlu0 %878
    %880 = vrot.lane.b32.xlu0 %v873, 64
    %v881 = vpop.permute.xlu0 %880
    %v884 = vmul.f32 %v869, %v879
    %v885 = vmul.f32 %v871, %v881
    %888 = vrot.lane.b32.xlu0 %v884, 32
    %v889 = vpop.permute.xlu0 %888
    %890 = vrot.lane.b32.xlu0 %v885, 32
    %v891 = vpop.permute.xlu0 %890
    %v894 = vadd.f32 %v874, %v889
    %v895 = vadd.f32 %v875, %v891
    %v896 = vtanh.pop %v894
    %v897 = vtanh.pop %v895
    %900 = vrot.lane.b32.xlu0 %v896, 64
    %v901 = vpop.permute.xlu0 %900
    %902 = vrot.lane.b32.xlu0 %v897, 64
    %v903 = vpop.permute.xlu0 %902
    %v906 = vmul.f32 %v869, %v901
    %v907 = vmul.f32 %v871, %v903
    %909 = vrot.lane.b32.xlu0 %v906, 32
    %v910 = vpop.permute.xlu0 %909
    %s912 = scalar_lea.vmem [#allocation3], 32
    %913 = vst.msk [vmem:[%s912] sm:$0xff] %vm118, %v910
    %915 = vrot.lane.b32.xlu0 %v907, 32
    %v916 = vpop.permute.xlu0 %915
    %s918 = scalar_lea.vmem [#allocation4], 24
    %919 = vst.msk [vmem:[%s918] sm:$0xff] %vm118, %v916
    %v920 = vsel %vm118, %v910, 0
    %v922 = vsel %vm118, %v916, 0
    %924 = vmatprep.subr.mxu0 0.0
    %925 = vmatpush1.msra.mxu0 0.0
    %926 = vmatprep.subr.mxu0 0.0
    %927 = vmatpush1.msra.mxu0 0.0
    %928 = vmatprep.subr.mxu0 0.0
    %929 = vmatpush1.msra.mxu0 0.0
    %930 = vmatprep.subr.mxu0 0.0
    %931 = vmatpush1.msra.mxu0 0.0
    %932 = vmatprep.subr.mxu0 0.0
    %933 = vmatpush1.msra.mxu0 0.0
    %934 = vmatprep.subr.mxu0 0.0
    %935 = vmatpush1.msra.mxu0 0.0
    %936 = vmatprep.subr.mxu0 0.0
    %937 = vmatpush1.msra.mxu0 0.0
    %938 = vmatprep.subr.mxu0 0.0
    %939 = vmatpush1.msra.mxu0 0.0
    %940 = vmatprep.subr.mxu0 0.0
    %941 = vmatpush1.msra.mxu0 0.0
    %942 = vmatprep.subr.mxu0 0.0
    %943 = vmatpush1.msra.mxu0 0.0
    %944 = vmatprep.subr.mxu0 0.0
    %945 = vmatpush1.msra.mxu0 0.0
    %946 = vmatprep.subr.mxu0 0.0
    %947 = vmatpush1.msra.mxu0 0.0
    %948 = vmatprep.subr.mxu0 %v279
    %949 = vmatpush1.msra.mxu0 %v278
    %950 = vmatprep.subr.mxu0 %v277
    %951 = vmatpush1.msra.mxu0 %v276
    %952 = vmatprep.subr.mxu0 %v275
    %953 = vmatpush1.msra.mxu0 %v274
    %954 = vmatprep.subr.mxu0 %v273
    %955 = vmatpush1.msra.mxu0 %v272
    %956 = vmatprep.subr.mxu0 0.0
    %957 = vmatpush2.msra.mxu0 0.0
    %958 = vmatprep.subr.mxu0 0.0
    %959 = vmatpush2.msra.mxu0 0.0
    %960 = vmatprep.subr.mxu0 0.0
    %961 = vmatpush2.msra.mxu0 0.0
    %962 = vmatprep.subr.mxu0 0.0
    %963 = vmatpush2.msra.mxu0 0.0
    %964 = vmatprep.subr.mxu0 0.0
    %965 = vmatpush2.msra.mxu0 0.0
    %966 = vmatprep.subr.mxu0 0.0
    %967 = vmatpush2.msra.mxu0 0.0
    %968 = vmatprep.subr.mxu0 0.0
    %969 = vmatpush2.msra.mxu0 0.0
    %970 = vmatprep.subr.mxu0 0.0
    %971 = vmatpush2.msra.mxu0 0.0
    %972 = vmatprep.subr.mxu0 0.0
    %973 = vmatpush2.msra.mxu0 0.0
    %974 = vmatprep.subr.mxu0 0.0
    %975 = vmatpush2.msra.mxu0 0.0
    %976 = vmatprep.subr.mxu0 0.0
    %977 = vmatpush2.msra.mxu0 0.0
    %978 = vmatprep.subr.mxu0 0.0
    %979 = vmatpush2.msra.mxu0 0.0
    %980 = vmatprep.subr.mxu0 0.0
    %981 = vmatpush2.msra.mxu0 0.0
    %982 = vmatprep.subr.mxu0 0.0
    %983 = vmatpush2.msra.mxu0 0.0
    %984 = vmatprep.subr.mxu0 0.0
    %985 = vmatpush2.msra.mxu0 0.0
    %986 = vmatprep.subr.mxu0 0.0
    %987 = vmatpush2.msra.mxu0 0.0
    %988 = vmatprep.mubr.f32.mxu0 0.0
    %989 = vmatmul.mubr.f32.gmra.mxu0 %v920
    %v990 = vpop.f32.mrf.mxu0
    %v991 = vadd.f32 0.0, %v990
    %v992 = vpop.f32.mrf.mxu0
    %993 = vmatprep.mubr.f32.mxu0 0.0
    %994 = vmatmul.mubr.f32.gmra.mxu0 %v922
    %v995 = vpop.f32.mrf.mxu0
    %v996 = vpop.f32.mrf.mxu0
    %v997 = vadd.f32 0.0, %v996
    %998 = vdwg.mxu0
    %v999 = vld [vmem:[%s568] sm:$0xff]
    %v1000 = vld [vmem:[%s566 + $0x8] sm:$0xff]
    %v1001 = vadd.f32 %v999, %v991
    %v1002 = vadd.f32 %v1000, %v997
    %v1003 = vxor.u32 %v1001, 2147483648
    %v1004 = vxor.u32 %v1002, 2147483648
    %v1005 = vmul.f32 %v1003, 1.442695
    %v1006 = vpow.pop %v1005
    %v1007 = vmul.f32 %v1004, 1.442695
    %v1008 = vpow.pop %v1007
    %v1009 = vadd.f32 %v1006, 1.0
    %v1010 = vadd.f32 %v1008, 1.0
    %v1011 = vrcp.pop %v1009
    %v1012 = vmul.f32 1.0, %v1011
    %v1013 = vrcp.pop %v1010
    %v1014 = vmul.f32 1.0, %v1013
    %v1015 = vtanh.pop %v1001
    %v1016 = vtanh.pop %v1002
    %v1017 = vmul.f32 %v1012, %v894
    %v1018 = vmul.f32 %v1014, %v895
    %1021 = vrot.lane.b32.xlu0 %v1015, 64
    %v1022 = vpop.permute.xlu0 %1021
    %1023 = vrot.lane.b32.xlu0 %v1016, 64
    %v1024 = vpop.permute.xlu0 %1023
    %v1027 = vmul.f32 %v1012, %v1022
    %v1028 = vmul.f32 %v1014, %v1024
    %1031 = vrot.lane.b32.xlu0 %v1027, 32
    %v1032 = vpop.permute.xlu0 %1031
    %1033 = vrot.lane.b32.xlu0 %v1028, 32
    %v1034 = vpop.permute.xlu0 %1033
    %v1037 = vadd.f32 %v1017, %v1032
    %v1038 = vadd.f32 %v1018, %v1034
    %v1039 = vtanh.pop %v1037
    %v1040 = vtanh.pop %v1038
    %1043 = vrot.lane.b32.xlu0 %v1039, 64
    %v1044 = vpop.permute.xlu0 %1043
    %1045 = vrot.lane.b32.xlu0 %v1040, 64
    %v1046 = vpop.permute.xlu0 %1045
    %v1049 = vmul.f32 %v1012, %v1044
    %v1050 = vmul.f32 %v1014, %v1046
    %1052 = vrot.lane.b32.xlu0 %v1049, 32
    %v1053 = vpop.permute.xlu0 %1052
    %s1055 = scalar_lea.vmem [#allocation3], 40
    %1056 = vst.msk [vmem:[%s1055] sm:$0xff] %vm118, %v1053
    %1058 = vrot.lane.b32.xlu0 %v1050, 32
    %v1059 = vpop.permute.xlu0 %1058
    %s1061 = scalar_lea.vmem [#allocation4], 16
    %1062 = vst.msk [vmem:[%s1061] sm:$0xff] %vm118, %v1059
    %v1063 = vsel %vm118, %v1053, 0
    %v1065 = vsel %vm118, %v1059, 0
    %1067 = vmatprep.subr.mxu0 0.0
    %1068 = vmatpush1.msra.mxu0 0.0
    %1069 = vmatprep.subr.mxu0 0.0
    %1070 = vmatpush1.msra.mxu0 0.0
    %1071 = vmatprep.subr.mxu0 0.0
    %1072 = vmatpush1.msra.mxu0 0.0
    %1073 = vmatprep.subr.mxu0 0.0
    %1074 = vmatpush1.msra.mxu0 0.0
    %1075 = vmatprep.subr.mxu0 0.0
    %1076 = vmatpush1.msra.mxu0 0.0
    %1077 = vmatprep.subr.mxu0 0.0
    %1078 = vmatpush1.msra.mxu0 0.0
    %1079 = vmatprep.subr.mxu0 0.0
    %1080 = vmatpush1.msra.mxu0 0.0
    %1081 = vmatprep.subr.mxu0 0.0
    %1082 = vmatpush1.msra.mxu0 0.0
    %1083 = vmatprep.subr.mxu0 0.0
    %1084 = vmatpush1.msra.mxu0 0.0
    %1085 = vmatprep.subr.mxu0 0.0
    %1086 = vmatpush1.msra.mxu0 0.0
    %1087 = vmatprep.subr.mxu0 0.0
    %1088 = vmatpush1.msra.mxu0 0.0
    %1089 = vmatprep.subr.mxu0 0.0
    %1090 = vmatpush1.msra.mxu0 0.0
    %1091 = vmatprep.subr.mxu0 %v279
    %1092 = vmatpush1.msra.mxu0 %v278
    %1093 = vmatprep.subr.mxu0 %v277
    %1094 = vmatpush1.msra.mxu0 %v276
    %1095 = vmatprep.subr.mxu0 %v275
    %1096 = vmatpush1.msra.mxu0 %v274
    %1097 = vmatprep.subr.mxu0 %v273
    %1098 = vmatpush1.msra.mxu0 %v272
    %1099 = vmatprep.subr.mxu0 0.0
    %1100 = vmatpush2.msra.mxu0 0.0
    %1101 = vmatprep.subr.mxu0 0.0
    %1102 = vmatpush2.msra.mxu0 0.0
    %1103 = vmatprep.subr.mxu0 0.0
    %1104 = vmatpush2.msra.mxu0 0.0
    %1105 = vmatprep.subr.mxu0 0.0
    %1106 = vmatpush2.msra.mxu0 0.0
    %1107 = vmatprep.subr.mxu0 0.0
    %1108 = vmatpush2.msra.mxu0 0.0
    %1109 = vmatprep.subr.mxu0 0.0
    %1110 = vmatpush2.msra.mxu0 0.0
    %1111 = vmatprep.subr.mxu0 0.0
    %1112 = vmatpush2.msra.mxu0 0.0
    %1113 = vmatprep.subr.mxu0 0.0
    %1114 = vmatpush2.msra.mxu0 0.0
    %1115 = vmatprep.subr.mxu0 0.0
    %1116 = vmatpush2.msra.mxu0 0.0
    %1117 = vmatprep.subr.mxu0 0.0
    %1118 = vmatpush2.msra.mxu0 0.0
    %1119 = vmatprep.subr.mxu0 0.0
    %1120 = vmatpush2.msra.mxu0 0.0
    %1121 = vmatprep.subr.mxu0 0.0
    %1122 = vmatpush2.msra.mxu0 0.0
    %1123 = vmatprep.subr.mxu0 0.0
    %1124 = vmatpush2.msra.mxu0 0.0
    %1125 = vmatprep.subr.mxu0 0.0
    %1126 = vmatpush2.msra.mxu0 0.0
    %1127 = vmatprep.subr.mxu0 0.0
    %1128 = vmatpush2.msra.mxu0 0.0
    %1129 = vmatprep.subr.mxu0 0.0
    %1130 = vmatpush2.msra.mxu0 0.0
    %1131 = vmatprep.mubr.f32.mxu0 0.0
    %1132 = vmatmul.mubr.f32.gmra.mxu0 %v1063
    %v1133 = vpop.f32.mrf.mxu0
    %v1134 = vadd.f32 0.0, %v1133
    %v1135 = vpop.f32.mrf.mxu0
    %1136 = vmatprep.mubr.f32.mxu0 0.0
    %1137 = vmatmul.mubr.f32.gmra.mxu0 %v1065
    %v1138 = vpop.f32.mrf.mxu0
    %v1139 = vpop.f32.mrf.mxu0
    %v1140 = vadd.f32 0.0, %v1139
    %1141 = vdwg.mxu0
    %v1142 = vld [vmem:[%s423] sm:$0xff]
    %v1143 = vld [vmem:[%s421 + $0x8] sm:$0xff]
    %v1144 = vadd.f32 %v1142, %v1134
    %v1145 = vadd.f32 %v1143, %v1140
    %v1146 = vxor.u32 %v1144, 2147483648
    %v1147 = vxor.u32 %v1145, 2147483648
    %v1148 = vmul.f32 %v1146, 1.442695
    %v1149 = vpow.pop %v1148
    %v1150 = vmul.f32 %v1147, 1.442695
    %v1151 = vpow.pop %v1150
    %v1152 = vadd.f32 %v1149, 1.0
    %v1153 = vadd.f32 %v1151, 1.0
    %v1154 = vrcp.pop %v1152
    %v1155 = vmul.f32 1.0, %v1154
    %v1156 = vrcp.pop %v1153
    %v1157 = vmul.f32 1.0, %v1156
    %v1158 = vtanh.pop %v1144
    %v1159 = vtanh.pop %v1145
    %v1160 = vmul.f32 %v1155, %v1037
    %v1161 = vmul.f32 %v1157, %v1038
    %1164 = vrot.lane.b32.xlu0 %v1158, 64
    %v1165 = vpop.permute.xlu0 %1164
    %1166 = vrot.lane.b32.xlu0 %v1159, 64
    %v1167 = vpop.permute.xlu0 %1166
    %v1170 = vmul.f32 %v1155, %v1165
    %v1171 = vmul.f32 %v1157, %v1167
    %1174 = vrot.lane.b32.xlu0 %v1170, 32
    %v1175 = vpop.permute.xlu0 %1174
    %1176 = vrot.lane.b32.xlu0 %v1171, 32
    %v1177 = vpop.permute.xlu0 %1176
    %v1180 = vadd.f32 %v1160, %v1175
    %v1181 = vadd.f32 %v1161, %v1177
    %v1182 = vtanh.pop %v1180
    %v1183 = vtanh.pop %v1181
    %1186 = vrot.lane.b32.xlu0 %v1182, 64
    %v1187 = vpop.permute.xlu0 %1186
    %1188 = vrot.lane.b32.xlu0 %v1183, 64
    %v1189 = vpop.permute.xlu0 %1188
    %v1192 = vmul.f32 %v1155, %v1187
    %v1193 = vmul.f32 %v1157, %v1189
    %1195 = vrot.lane.b32.xlu0 %v1192, 32
    %v1196 = vpop.permute.xlu0 %1195
    %s1198 = scalar_lea.vmem [#allocation3], 48
    %1199 = vst.msk [vmem:[%s1198] sm:$0xff] %vm118, %v1196
    %1201 = vrot.lane.b32.xlu0 %v1193, 32
    %v1202 = vpop.permute.xlu0 %1201
    %s1204 = scalar_lea.vmem [#allocation4], 8
    %1205 = vst.msk [vmem:[%s1204] sm:$0xff] %vm118, %v1202
    %v1206 = vsel %vm118, %v1196, 0
    %v1208 = vsel %vm118, %v1202, 0
    %1210 = vmatprep.subr.mxu0 0.0
    %1211 = vmatpush1.msra.mxu0 0.0
    %1212 = vmatprep.subr.mxu0 0.0
    %1213 = vmatpush1.msra.mxu0 0.0
    %1214 = vmatprep.subr.mxu0 0.0
    %1215 = vmatpush1.msra.mxu0 0.0
    %1216 = vmatprep.subr.mxu0 0.0
    %1217 = vmatpush1.msra.mxu0 0.0
    %1218 = vmatprep.subr.mxu0 0.0
    %1219 = vmatpush1.msra.mxu0 0.0
    %1220 = vmatprep.subr.mxu0 0.0
    %1221 = vmatpush1.msra.mxu0 0.0
    %1222 = vmatprep.subr.mxu0 0.0
    %1223 = vmatpush1.msra.mxu0 0.0
    %1224 = vmatprep.subr.mxu0 0.0
    %1225 = vmatpush1.msra.mxu0 0.0
    %1226 = vmatprep.subr.mxu0 0.0
    %1227 = vmatpush1.msra.mxu0 0.0
    %1228 = vmatprep.subr.mxu0 0.0
    %1229 = vmatpush1.msra.mxu0 0.0
    %1230 = vmatprep.subr.mxu0 0.0
    %1231 = vmatpush1.msra.mxu0 0.0
    %1232 = vmatprep.subr.mxu0 0.0
    %1233 = vmatpush1.msra.mxu0 0.0
    %1234 = vmatprep.subr.mxu0 %v279
    %1235 = vmatpush1.msra.mxu0 %v278
    %1236 = vmatprep.subr.mxu0 %v277
    %1237 = vmatpush1.msra.mxu0 %v276
    %1238 = vmatprep.subr.mxu0 %v275
    %1239 = vmatpush1.msra.mxu0 %v274
    %1240 = vmatprep.subr.mxu0 %v273
    %1241 = vmatpush1.msra.mxu0 %v272
    %1242 = vmatprep.subr.mxu0 0.0
    %1243 = vmatpush2.msra.mxu0 0.0
    %1244 = vmatprep.subr.mxu0 0.0
    %1245 = vmatpush2.msra.mxu0 0.0
    %1246 = vmatprep.subr.mxu0 0.0
    %1247 = vmatpush2.msra.mxu0 0.0
    %1248 = vmatprep.subr.mxu0 0.0
    %1249 = vmatpush2.msra.mxu0 0.0
    %1250 = vmatprep.subr.mxu0 0.0
    %1251 = vmatpush2.msra.mxu0 0.0
    %1252 = vmatprep.subr.mxu0 0.0
    %1253 = vmatpush2.msra.mxu0 0.0
    %1254 = vmatprep.subr.mxu0 0.0
    %1255 = vmatpush2.msra.mxu0 0.0
    %1256 = vmatprep.subr.mxu0 0.0
    %1257 = vmatpush2.msra.mxu0 0.0
    %1258 = vmatprep.subr.mxu0 0.0
    %1259 = vmatpush2.msra.mxu0 0.0
    %1260 = vmatprep.subr.mxu0 0.0
    %1261 = vmatpush2.msra.mxu0 0.0
    %1262 = vmatprep.subr.mxu0 0.0
    %1263 = vmatpush2.msra.mxu0 0.0
    %1264 = vmatprep.subr.mxu0 0.0
    %1265 = vmatpush2.msra.mxu0 0.0
    %1266 = vmatprep.subr.mxu0 0.0
    %1267 = vmatpush2.msra.mxu0 0.0
    %1268 = vmatprep.subr.mxu0 0.0
    %1269 = vmatpush2.msra.mxu0 0.0
    %1270 = vmatprep.subr.mxu0 0.0
    %1271 = vmatpush2.msra.mxu0 0.0
    %1272 = vmatprep.subr.mxu0 0.0
    %1273 = vmatpush2.msra.mxu0 0.0
    %1274 = vmatprep.mubr.f32.mxu0 0.0
    %1275 = vmatmul.mubr.f32.gmra.mxu0 %v1206
    %v1276 = vpop.f32.mrf.mxu0
    %v1277 = vadd.f32 0.0, %v1276
    %v1278 = vpop.f32.mrf.mxu0
    %1279 = vmatprep.mubr.f32.mxu0 0.0
    %1280 = vmatmul.mubr.f32.gmra.mxu0 %v1208
    %v1281 = vpop.f32.mrf.mxu0
    %v1282 = vpop.f32.mrf.mxu0
    %v1283 = vadd.f32 0.0, %v1282
    %1284 = vdwg.mxu0
    %v1285 = vld [vmem:[%s281] sm:$0xff]
    %v1286 = vld [vmem:[#allocation2 + $0x8] sm:$0xff]
    %v1287 = vadd.f32 %v1285, %v1277
    %v1288 = vadd.f32 %v1286, %v1283
    %v1289 = vxor.u32 %v1287, 2147483648
    %v1290 = vxor.u32 %v1288, 2147483648
    %v1291 = vmul.f32 %v1289, 1.442695
    %v1292 = vpow.pop %v1291
    %v1293 = vmul.f32 %v1290, 1.442695
    %v1294 = vpow.pop %v1293
    %v1295 = vadd.f32 %v1292, 1.0
    %v1296 = vadd.f32 %v1294, 1.0
    %v1297 = vrcp.pop %v1295
    %v1298 = vmul.f32 1.0, %v1297
    %v1299 = vrcp.pop %v1296
    %v1300 = vmul.f32 1.0, %v1299
    %v1301 = vtanh.pop %v1287
    %v1302 = vtanh.pop %v1288
    %v1303 = vmul.f32 %v1298, %v1180
    %v1304 = vmul.f32 %v1300, %v1181
    %1307 = vrot.lane.b32.xlu0 %v1301, 64
    %v1308 = vpop.permute.xlu0 %1307
    %1309 = vrot.lane.b32.xlu0 %v1302, 64
    %v1310 = vpop.permute.xlu0 %1309
    %v1313 = vmul.f32 %v1298, %v1308
    %v1314 = vmul.f32 %v1300, %v1310
    %1317 = vrot.lane.b32.xlu0 %v1313, 32
    %v1318 = vpop.permute.xlu0 %1317
    %1319 = vrot.lane.b32.xlu0 %v1314, 32
    %v1320 = vpop.permute.xlu0 %1319
    %v1323 = vadd.f32 %v1303, %v1318
    %v1324 = vadd.f32 %v1304, %v1320
    %v1325 = vtanh.pop %v1323
    %v1326 = vtanh.pop %v1324
    %1329 = vrot.lane.b32.xlu0 %v1325, 64
    %v1330 = vpop.permute.xlu0 %1329
    %1331 = vrot.lane.b32.xlu0 %v1326, 64
    %v1332 = vpop.permute.xlu0 %1331
    %v1335 = vmul.f32 %v1298, %v1330
    %v1336 = vmul.f32 %v1300, %v1332
    %1338 = vrot.lane.b32.xlu0 %v1335, 32
    %v1339 = vpop.permute.xlu0 %1338
    %s1341 = scalar_lea.vmem [#allocation3], 56
    %1342 = vst.msk [vmem:[%s1341] sm:$0xff] %vm118, %v1339
    %1344 = vrot.lane.b32.xlu0 %v1336, 32
    %v1345 = vpop.permute.xlu0 %1344
    %1347 = vst.msk [vmem:[#allocation4] sm:$0xff] %vm118, %v1345
    %v1348 = vld [vmem:[#allocation3] sm:$0xff]
    %v1349 = vld [vmem:[#allocation3 + $0x8] sm:$0xff]
    %v1350 = vld [vmem:[#allocation3 + $0x10] sm:$0xff]
    %v1351 = vld [vmem:[#allocation3 + $0x18] sm:$0xff]
    %v1352 = vld [vmem:[#allocation3 + $0x20] sm:$0xff]
    %v1353 = vld [vmem:[#allocation3 + $0x28] sm:$0xff]
    %v1354 = vld [vmem:[#allocation3 + $0x30] sm:$0xff]
    %v1355 = vld [vmem:[#allocation3 + $0x38] sm:$0xff]
    %v1356 = vld [vmem:[#allocation7] sm:$0xff]
    %v1357 = vld [vmem:[#allocation7 + $0x8] sm:$0xff]
    %v1358 = vld [vmem:[#allocation7 + $0x10] sm:$0xff]
    %v1359 = vld [vmem:[#allocation7 + $0x18] sm:$0xff]
    %v1360 = vld [vmem:[#allocation7 + $0x20] sm:$0xff]
    %v1361 = vld [vmem:[#allocation7 + $0x28] sm:$0xff]
    %v1362 = vld [vmem:[#allocation7 + $0x30] sm:$0xff]
    %v1363 = vld [vmem:[#allocation7 + $0x38] sm:$0xff]
    %v1364 = vld [vmem:[#allocation4] sm:$0xff]
    %v1365 = vld [vmem:[#allocation4 + $0x8] sm:$0xff]
    %v1366 = vld [vmem:[#allocation4 + $0x10] sm:$0xff]
    %v1367 = vld [vmem:[#allocation4 + $0x18] sm:$0xff]
    %v1368 = vld [vmem:[#allocation4 + $0x20] sm:$0xff]
    %v1369 = vld [vmem:[#allocation4 + $0x28] sm:$0xff]
    %v1370 = vld [vmem:[#allocation4 + $0x30] sm:$0xff]
    %v1371 = vld [vmem:[#allocation4 + $0x38] sm:$0xff]
    %v1372 = vld [vmem:[#allocation9] sm:$0xff]
    %v1373 = vld [vmem:[#allocation9 + $0x8] sm:$0xff]
    %v1374 = vld [vmem:[#allocation9 + $0x10] sm:$0xff]
    %v1375 = vld [vmem:[#allocation9 + $0x18] sm:$0xff]
    %v1376 = vld [vmem:[#allocation9 + $0x20] sm:$0xff]
    %v1377 = vld [vmem:[#allocation9 + $0x28] sm:$0xff]
    %v1378 = vld [vmem:[#allocation9 + $0x30] sm:$0xff]
    %v1379 = vld [vmem:[#allocation9 + $0x38] sm:$0xff]
    %v1381 = vsel %vm118, %v1364, 0
    %v1384 = vsel %vm118, %v1365, 0
    %v1387 = vsel %vm118, %v1366, 0
    %v1390 = vsel %vm118, %v1367, 0
    %v1393 = vsel %vm118, %v1368, 0
    %v1396 = vsel %vm118, %v1369, 0
    %v1399 = vsel %vm118, %v1370, 0
    %v1402 = vsel %vm118, %v1371, 0
    %1404 = vmatprep.subr.mxu0 0.0
    %1405 = vmatpush1.msra.mxu0 0.0
    %1406 = vmatprep.subr.mxu0 0.0
    %1407 = vmatpush1.msra.mxu0 0.0
    %1408 = vmatprep.subr.mxu0 0.0
    %1409 = vmatpush1.msra.mxu0 0.0
    %1410 = vmatprep.subr.mxu0 0.0
    %1411 = vmatpush1.msra.mxu0 0.0
    %1412 = vmatprep.subr.mxu0 0.0
    %1413 = vmatpush1.msra.mxu0 0.0
    %1414 = vmatprep.subr.mxu0 0.0
    %1415 = vmatpush1.msra.mxu0 0.0
    %1416 = vmatprep.subr.mxu0 0.0
    %1417 = vmatpush1.msra.mxu0 0.0
    %1418 = vmatprep.subr.mxu0 0.0
    %1419 = vmatpush1.msra.mxu0 0.0
    %1420 = vmatprep.subr.mxu0 0.0
    %1421 = vmatpush1.msra.mxu0 0.0
    %1422 = vmatprep.subr.mxu0 0.0
    %1423 = vmatpush1.msra.mxu0 0.0
    %1424 = vmatprep.subr.mxu0 0.0
    %1425 = vmatpush1.msra.mxu0 0.0
    %1426 = vmatprep.subr.mxu0 0.0
    %1427 = vmatpush1.msra.mxu0 0.0
    %1428 = vmatprep.subr.mxu0 %v1379
    %1429 = vmatpush1.msra.mxu0 %v1378
    %1430 = vmatprep.subr.mxu0 %v1377
    %1431 = vmatpush1.msra.mxu0 %v1376
    %1432 = vmatprep.subr.mxu0 %v1375
    %1433 = vmatpush1.msra.mxu0 %v1374
    %1434 = vmatprep.subr.mxu0 %v1373
    %1435 = vmatpush1.msra.mxu0 %v1372
    %1436 = vmatprep.subr.mxu0 0.0
    %1437 = vmatpush2.msra.mxu0 0.0
    %1438 = vmatprep.subr.mxu0 0.0
    %1439 = vmatpush2.msra.mxu0 0.0
    %1440 = vmatprep.subr.mxu0 0.0
    %1441 = vmatpush2.msra.mxu0 0.0
    %1442 = vmatprep.subr.mxu0 0.0
    %1443 = vmatpush2.msra.mxu0 0.0
    %1444 = vmatprep.subr.mxu0 0.0
    %1445 = vmatpush2.msra.mxu0 0.0
    %1446 = vmatprep.subr.mxu0 0.0
    %1447 = vmatpush2.msra.mxu0 0.0
    %1448 = vmatprep.subr.mxu0 0.0
    %1449 = vmatpush2.msra.mxu0 0.0
    %1450 = vmatprep.subr.mxu0 0.0
    %1451 = vmatpush2.msra.mxu0 0.0
    %1452 = vmatprep.subr.mxu0 0.0
    %1453 = vmatpush2.msra.mxu0 0.0
    %1454 = vmatprep.subr.mxu0 0.0
    %1455 = vmatpush2.msra.mxu0 0.0
    %1456 = vmatprep.subr.mxu0 0.0
    %1457 = vmatpush2.msra.mxu0 0.0
    %1458 = vmatprep.subr.mxu0 0.0
    %1459 = vmatpush2.msra.mxu0 0.0
    %1460 = vmatprep.subr.mxu0 0.0
    %1461 = vmatpush2.msra.mxu0 0.0
    %1462 = vmatprep.subr.mxu0 0.0
    %1463 = vmatpush2.msra.mxu0 0.0
    %1464 = vmatprep.subr.mxu0 0.0
    %1465 = vmatpush2.msra.mxu0 0.0
    %1466 = vmatprep.subr.mxu0 0.0
    %1467 = vmatpush2.msra.mxu0 0.0
    %1468 = vmatprep.mubr.f32.mxu0 0.0
    %1469 = vmatmul.mubr.f32.gmra.mxu0 %v1381
    %v1470 = vpop.f32.mrf.mxu0
    %v1471 = vadd.f32 0.0, %v1470
    %v1472 = vpop.f32.mrf.mxu0
    %v1473 = vadd.f32 0.0, %v1472
    %1474 = vmatprep.mubr.f32.mxu0 0.0
    %1475 = vmatmul.mubr.f32.gmra.mxu0 %v1384
    %v1476 = vpop.f32.mrf.mxu0
    %v1477 = vadd.f32 0.0, %v1476
    %v1478 = vpop.f32.mrf.mxu0
    %v1479 = vadd.f32 0.0, %v1478
    %1480 = vmatprep.mubr.f32.mxu0 0.0
    %1481 = vmatmul.mubr.f32.gmra.mxu0 %v1387
    %v1482 = vpop.f32.mrf.mxu0
    %v1483 = vadd.f32 0.0, %v1482
    %v1484 = vpop.f32.mrf.mxu0
    %v1485 = vadd.f32 0.0, %v1484
    %1486 = vmatprep.mubr.f32.mxu0 0.0
    %1487 = vmatmul.mubr.f32.gmra.mxu0 %v1390
    %v1488 = vpop.f32.mrf.mxu0
    %v1489 = vadd.f32 0.0, %v1488
    %v1490 = vpop.f32.mrf.mxu0
    %v1491 = vadd.f32 0.0, %v1490
    %1492 = vmatprep.mubr.f32.mxu0 0.0
    %1493 = vmatmul.mubr.f32.gmra.mxu0 %v1393
    %v1494 = vpop.f32.mrf.mxu0
    %v1495 = vadd.f32 0.0, %v1494
    %v1496 = vpop.f32.mrf.mxu0
    %v1497 = vadd.f32 0.0, %v1496
    %1498 = vmatprep.mubr.f32.mxu0 0.0
    %1499 = vmatmul.mubr.f32.gmra.mxu0 %v1396
    %v1500 = vpop.f32.mrf.mxu0
    %v1501 = vadd.f32 0.0, %v1500
    %v1502 = vpop.f32.mrf.mxu0
    %v1503 = vadd.f32 0.0, %v1502
    %1504 = vmatprep.mubr.f32.mxu0 0.0
    %1505 = vmatmul.mubr.f32.gmra.mxu0 %v1399
    %v1506 = vpop.f32.mrf.mxu0
    %v1507 = vadd.f32 0.0, %v1506
    %v1508 = vpop.f32.mrf.mxu0
    %v1509 = vadd.f32 0.0, %v1508
    %1510 = vmatprep.mubr.f32.mxu0 0.0
    %1511 = vmatmul.mubr.f32.gmra.mxu0 %v1402
    %v1512 = vpop.f32.mrf.mxu0
    %v1513 = vadd.f32 0.0, %v1512
    %v1514 = vpop.f32.mrf.mxu0
    %v1515 = vadd.f32 0.0, %v1514
    %1516 = vdwg.mxu0
    %v1518 = vsel %vm118, %v1348, 0
    %v1521 = vsel %vm118, %v1349, 0
    %v1524 = vsel %vm118, %v1350, 0
    %v1527 = vsel %vm118, %v1351, 0
    %v1530 = vsel %vm118, %v1352, 0
    %v1533 = vsel %vm118, %v1353, 0
    %v1536 = vsel %vm118, %v1354, 0
    %v1539 = vsel %vm118, %v1355, 0
    %1541 = vmatprep.subr.mxu0 0.0
    %1542 = vmatpush1.msra.mxu0 0.0
    %1543 = vmatprep.subr.mxu0 0.0
    %1544 = vmatpush1.msra.mxu0 0.0
    %1545 = vmatprep.subr.mxu0 0.0
    %1546 = vmatpush1.msra.mxu0 0.0
    %1547 = vmatprep.subr.mxu0 0.0
    %1548 = vmatpush1.msra.mxu0 0.0
    %1549 = vmatprep.subr.mxu0 0.0
    %1550 = vmatpush1.msra.mxu0 0.0
    %1551 = vmatprep.subr.mxu0 0.0
    %1552 = vmatpush1.msra.mxu0 0.0
    %1553 = vmatprep.subr.mxu0 0.0
    %1554 = vmatpush1.msra.mxu0 0.0
    %1555 = vmatprep.subr.mxu0 0.0
    %1556 = vmatpush1.msra.mxu0 0.0
    %1557 = vmatprep.subr.mxu0 0.0
    %1558 = vmatpush1.msra.mxu0 0.0
    %1559 = vmatprep.subr.mxu0 0.0
    %1560 = vmatpush1.msra.mxu0 0.0
    %1561 = vmatprep.subr.mxu0 0.0
    %1562 = vmatpush1.msra.mxu0 0.0
    %1563 = vmatprep.subr.mxu0 0.0
    %1564 = vmatpush1.msra.mxu0 0.0
    %1565 = vmatprep.subr.mxu0 %v1363
    %1566 = vmatpush1.msra.mxu0 %v1362
    %1567 = vmatprep.subr.mxu0 %v1361
    %1568 = vmatpush1.msra.mxu0 %v1360
    %1569 = vmatprep.subr.mxu0 %v1359
    %1570 = vmatpush1.msra.mxu0 %v1358
    %1571 = vmatprep.subr.mxu0 %v1357
    %1572 = vmatpush1.msra.mxu0 %v1356
    %1573 = vmatprep.subr.mxu0 0.0
    %1574 = vmatpush2.msra.mxu0 0.0
    %1575 = vmatprep.subr.mxu0 0.0
    %1576 = vmatpush2.msra.mxu0 0.0
    %1577 = vmatprep.subr.mxu0 0.0
    %1578 = vmatpush2.msra.mxu0 0.0
    %1579 = vmatprep.subr.mxu0 0.0
    %1580 = vmatpush2.msra.mxu0 0.0
    %1581 = vmatprep.subr.mxu0 0.0
    %1582 = vmatpush2.msra.mxu0 0.0
    %1583 = vmatprep.subr.mxu0 0.0
    %1584 = vmatpush2.msra.mxu0 0.0
    %1585 = vmatprep.subr.mxu0 0.0
    %1586 = vmatpush2.msra.mxu0 0.0
    %1587 = vmatprep.subr.mxu0 0.0
    %1588 = vmatpush2.msra.mxu0 0.0
    %1589 = vmatprep.subr.mxu0 0.0
    %1590 = vmatpush2.msra.mxu0 0.0
    %1591 = vmatprep.subr.mxu0 0.0
    %1592 = vmatpush2.msra.mxu0 0.0
    %1593 = vmatprep.subr.mxu0 0.0
    %1594 = vmatpush2.msra.mxu0 0.0
    %1595 = vmatprep.subr.mxu0 0.0
    %1596 = vmatpush2.msra.mxu0 0.0
    %1597 = vmatprep.subr.mxu0 0.0
    %1598 = vmatpush2.msra.mxu0 0.0
    %1599 = vmatprep.subr.mxu0 0.0
    %1600 = vmatpush2.msra.mxu0 0.0
    %1601 = vmatprep.subr.mxu0 0.0
    %1602 = vmatpush2.msra.mxu0 0.0
    %1603 = vmatprep.subr.mxu0 0.0
    %1604 = vmatpush2.msra.mxu0 0.0
    %1605 = vmatprep.mubr.f32.mxu0 0.0
    %1606 = vmatmul.mubr.f32.gmra.mxu0 %v1518
    %v1607 = vpop.f32.mrf.mxu0
    %v1608 = vadd.f32 %v1471, %v1607
    %v1609 = vpop.f32.mrf.mxu0
    %v1610 = vadd.f32 %v1473, %v1609
    %1611 = vmatprep.mubr.f32.mxu0 0.0
    %1612 = vmatmul.mubr.f32.gmra.mxu0 %v1521
    %v1613 = vpop.f32.mrf.mxu0
    %v1614 = vadd.f32 %v1477, %v1613
    %v1615 = vpop.f32.mrf.mxu0
    %v1616 = vadd.f32 %v1479, %v1615
    %1617 = vmatprep.mubr.f32.mxu0 0.0
    %1618 = vmatmul.mubr.f32.gmra.mxu0 %v1524
    %v1619 = vpop.f32.mrf.mxu0
    %v1620 = vadd.f32 %v1483, %v1619
    %v1621 = vpop.f32.mrf.mxu0
    %v1622 = vadd.f32 %v1485, %v1621
    %1623 = vmatprep.mubr.f32.mxu0 0.0
    %1624 = vmatmul.mubr.f32.gmra.mxu0 %v1527
    %v1625 = vpop.f32.mrf.mxu0
    %v1626 = vadd.f32 %v1489, %v1625
    %v1627 = vpop.f32.mrf.mxu0
    %v1628 = vadd.f32 %v1491, %v1627
    %1629 = vmatprep.mubr.f32.mxu0 0.0
    %1630 = vmatmul.mubr.f32.gmra.mxu0 %v1530
    %v1631 = vpop.f32.mrf.mxu0
    %v1632 = vadd.f32 %v1495, %v1631
    %v1633 = vpop.f32.mrf.mxu0
    %v1634 = vadd.f32 %v1497, %v1633
    %1635 = vmatprep.mubr.f32.mxu0 0.0
    %1636 = vmatmul.mubr.f32.gmra.mxu0 %v1533
    %v1637 = vpop.f32.mrf.mxu0
    %v1638 = vadd.f32 %v1501, %v1637
    %v1639 = vpop.f32.mrf.mxu0
    %v1640 = vadd.f32 %v1503, %v1639
    %1641 = vmatprep.mubr.f32.mxu0 0.0
    %1642 = vmatmul.mubr.f32.gmra.mxu0 %v1536
    %v1643 = vpop.f32.mrf.mxu0
    %v1644 = vadd.f32 %v1507, %v1643
    %v1645 = vpop.f32.mrf.mxu0
    %v1646 = vadd.f32 %v1509, %v1645
    %1647 = vmatprep.mubr.f32.mxu0 0.0
    %1648 = vmatmul.mubr.f32.gmra.mxu0 %v1539
    %v1649 = vpop.f32.mrf.mxu0
    %v1650 = vadd.f32 %v1513, %v1649
    %v1651 = vpop.f32.mrf.mxu0
    %v1652 = vadd.f32 %v1515, %v1651
    %1653 = vdwg.mxu0
    %v1654 = vld [vmem:[%s7] sm:$0x3]
    %v1656 = vlaneseq
    %v1657 = vshrl.u32 %v1656, 7
    %v1658 = vsub.s32 0, %v1657
    %v1659 = vrot.slane %v1654, %v1658
    %v1660 = vlaneseq
    %v1661 = vshrl.u32 %v1660, 7
    %v1662 = vsub.s32 1, %v1661
    %v1663 = vrot.slane %v1654, %v1662
    %v1666 = vadd.f32 %v1608, %v1659
    %v1667 = vadd.f32 %v1610, %v1663
    %v1668 = vadd.f32 %v1614, %v1659
    %v1669 = vadd.f32 %v1616, %v1663
    %v1670 = vadd.f32 %v1620, %v1659
    %v1671 = vadd.f32 %v1622, %v1663
    %v1672 = vadd.f32 %v1626, %v1659
    %v1673 = vadd.f32 %v1628, %v1663
    %v1674 = vadd.f32 %v1632, %v1659
    %v1675 = vadd.f32 %v1634, %v1663
    %v1676 = vadd.f32 %v1638, %v1659
    %v1677 = vadd.f32 %v1640, %v1663
    %v1678 = vadd.f32 %v1644, %v1659
    %v1679 = vadd.f32 %v1646, %v1663
    %v1680 = vadd.f32 %v1650, %v1659
    %v1681 = vadd.f32 %v1652, %v1663
    %1682 = vst [vmem:[#allocation2] sm:$0xff] %v1666
    %1683 = vst [vmem:[#allocation2 + $0x8] sm:$0xff] %v1667
    %1684 = vst [vmem:[#allocation2 + $0x10] sm:$0xff] %v1668
    %1685 = vst [vmem:[#allocation2 + $0x18] sm:$0xff] %v1669
    %1686 = vst [vmem:[#allocation2 + $0x20] sm:$0xff] %v1670
    %1687 = vst [vmem:[#allocation2 + $0x28] sm:$0xff] %v1671
    %1688 = vst [vmem:[#allocation2 + $0x30] sm:$0xff] %v1672
    %1689 = vst [vmem:[#allocation2 + $0x38] sm:$0xff] %v1673
    %1690 = vst [vmem:[#allocation2 + $0x40] sm:$0xff] %v1674
    %1691 = vst [vmem:[#allocation2 + $0x48] sm:$0xff] %v1675
    %1692 = vst [vmem:[#allocation2 + $0x50] sm:$0xff] %v1676
    %1693 = vst [vmem:[#allocation2 + $0x58] sm:$0xff] %v1677
    %1694 = vst [vmem:[#allocation2 + $0x60] sm:$0xff] %v1678
    %1695 = vst [vmem:[#allocation2 + $0x68] sm:$0xff] %v1679
    %1696 = vst [vmem:[#allocation2 + $0x70] sm:$0xff] %v1680
    %1697 = vst [vmem:[#allocation2 + $0x78] sm:$0xff] %v1681
    %v1698 = vld [vmem:[#allocation10] sm:$0xff]
    %v1699 = vld [vmem:[#allocation10 + $0x8] sm:$0xff]
    %v1700 = vld [vmem:[#allocation10 + $0x10] sm:$0xff]
    %v1701 = vld [vmem:[#allocation10 + $0x18] sm:$0xff]
    %v1702 = vld [vmem:[#allocation10 + $0x20] sm:$0xff]
    %v1703 = vld [vmem:[#allocation10 + $0x28] sm:$0xff]
    %v1704 = vld [vmem:[#allocation10 + $0x30] sm:$0xff]
    %v1705 = vld [vmem:[#allocation10 + $0x38] sm:$0xff]
    %v1706 = vld [vmem:[#allocation2] sm:$0xff]
    %v1707 = vld [vmem:[#allocation2 + $0x8] sm:$0xff]
    %v1708 = vld [vmem:[%s281] sm:$0xff]
    %v1709 = vld [vmem:[%s281 + $0x8] sm:$0xff]
    %v1710 = vxor.u32 %v1706, 2147483648
    %v1711 = vxor.u32 %v1709, 2147483648
    %v1712 = vmul.f32 %v1710, 1.442695
    %v1713 = vpow.pop %v1712
    %v1714 = vmul.f32 %v1711, 1.442695
    %v1715 = vpow.pop %v1714
    %v1716 = vadd.f32 %v1713, 1.0
    %v1717 = vadd.f32 %v1715, 1.0
    %v1718 = vrcp.pop %v1716
    %v1719 = vmul.f32 1.0, %v1718
    %v1720 = vrcp.pop %v1717
    %v1721 = vmul.f32 1.0, %v1720
    %v1722 = vtanh.pop %v1706
    %v1723 = vtanh.pop %v1709
    %v1724 = vmul.f32 %v1719, 0.0
    %v1725 = vmul.f32 %v1721, 0.0
    %1728 = vrot.lane.b32.xlu0 %v1722, 64
    %v1729 = vpop.permute.xlu0 %1728
    %1730 = vrot.lane.b32.xlu0 %v1723, 64
    %v1731 = vpop.permute.xlu0 %1730
    %v1734 = vmul.f32 %v1719, %v1729
    %v1735 = vmul.f32 %v1721, %v1731
    %1738 = vrot.lane.b32.xlu0 %v1734, 32
    %v1739 = vpop.permute.xlu0 %1738
    %1740 = vrot.lane.b32.xlu0 %v1735, 32
    %v1741 = vpop.permute.xlu0 %1740
    %v1744 = vadd.f32 %v1724, %v1739
    %v1745 = vadd.f32 %v1725, %v1741
    %v1746 = vtanh.pop %v1744
    %v1747 = vtanh.pop %v1745
    %1750 = vrot.lane.b32.xlu0 %v1746, 64
    %v1751 = vpop.permute.xlu0 %1750
    %1752 = vrot.lane.b32.xlu0 %v1747, 64
    %v1753 = vpop.permute.xlu0 %1752
    %v1756 = vmul.f32 %v1719, %v1751
    %v1757 = vmul.f32 %v1721, %v1753
    %1760 = vrot.lane.b32.xlu0 %v1756, 32
    %v1761 = vpop.permute.xlu0 %1760
    %1762 = vrot.lane.b32.xlu0 %v1757, 32
    %v1763 = vpop.permute.xlu0 %1762
    %v1764 = vsel %vm118, %v1761, 0
    %v1766 = vsel %vm118, %v1763, 0
    %1768 = vmatprep.subr.mxu0 0.0
    %1769 = vmatpush1.msra.mxu0 0.0
    %1770 = vmatprep.subr.mxu0 0.0
    %1771 = vmatpush1.msra.mxu0 0.0
    %1772 = vmatprep.subr.mxu0 0.0
    %1773 = vmatpush1.msra.mxu0 0.0
    %1774 = vmatprep.subr.mxu0 0.0
    %1775 = vmatpush1.msra.mxu0 0.0
    %1776 = vmatprep.subr.mxu0 0.0
    %1777 = vmatpush1.msra.mxu0 0.0
    %1778 = vmatprep.subr.mxu0 0.0
    %1779 = vmatpush1.msra.mxu0 0.0
    %1780 = vmatprep.subr.mxu0 0.0
    %1781 = vmatpush1.msra.mxu0 0.0
    %1782 = vmatprep.subr.mxu0 0.0
    %1783 = vmatpush1.msra.mxu0 0.0
    %1784 = vmatprep.subr.mxu0 0.0
    %1785 = vmatpush1.msra.mxu0 0.0
    %1786 = vmatprep.subr.mxu0 0.0
    %1787 = vmatpush1.msra.mxu0 0.0
    %1788 = vmatprep.subr.mxu0 0.0
    %1789 = vmatpush1.msra.mxu0 0.0
    %1790 = vmatprep.subr.mxu0 0.0
    %1791 = vmatpush1.msra.mxu0 0.0
    %1792 = vmatprep.subr.mxu0 %v1705
    %1793 = vmatpush1.msra.mxu0 %v1704
    %1794 = vmatprep.subr.mxu0 %v1703
    %1795 = vmatpush1.msra.mxu0 %v1702
    %1796 = vmatprep.subr.mxu0 %v1701
    %1797 = vmatpush1.msra.mxu0 %v1700
    %1798 = vmatprep.subr.mxu0 %v1699
    %1799 = vmatpush1.msra.mxu0 %v1698
    %1800 = vmatprep.subr.mxu0 0.0
    %1801 = vmatpush2.msra.mxu0 0.0
    %1802 = vmatprep.subr.mxu0 0.0
    %1803 = vmatpush2.msra.mxu0 0.0
    %1804 = vmatprep.subr.mxu0 0.0
    %1805 = vmatpush2.msra.mxu0 0.0
    %1806 = vmatprep.subr.mxu0 0.0
    %1807 = vmatpush2.msra.mxu0 0.0
    %1808 = vmatprep.subr.mxu0 0.0
    %1809 = vmatpush2.msra.mxu0 0.0
    %1810 = vmatprep.subr.mxu0 0.0
    %1811 = vmatpush2.msra.mxu0 0.0
    %1812 = vmatprep.subr.mxu0 0.0
    %1813 = vmatpush2.msra.mxu0 0.0
    %1814 = vmatprep.subr.mxu0 0.0
    %1815 = vmatpush2.msra.mxu0 0.0
    %1816 = vmatprep.subr.mxu0 0.0
    %1817 = vmatpush2.msra.mxu0 0.0
    %1818 = vmatprep.subr.mxu0 0.0
    %1819 = vmatpush2.msra.mxu0 0.0
    %1820 = vmatprep.subr.mxu0 0.0
    %1821 = vmatpush2.msra.mxu0 0.0
    %1822 = vmatprep.subr.mxu0 0.0
    %1823 = vmatpush2.msra.mxu0 0.0
    %1824 = vmatprep.subr.mxu0 0.0
    %1825 = vmatpush2.msra.mxu0 0.0
    %1826 = vmatprep.subr.mxu0 0.0
    %1827 = vmatpush2.msra.mxu0 0.0
    %1828 = vmatprep.subr.mxu0 0.0
    %1829 = vmatpush2.msra.mxu0 0.0
    %1830 = vmatprep.subr.mxu0 0.0
    %1831 = vmatpush2.msra.mxu0 0.0
    %1832 = vmatprep.mubr.f32.mxu0 0.0
    %1833 = vmatmul.mubr.f32.gmra.mxu0 %v1764
    %v1834 = vpop.f32.mrf.mxu0
    %v1835 = vadd.f32 0.0, %v1834
    %v1836 = vpop.f32.mrf.mxu0
    %1837 = vmatprep.mubr.f32.mxu0 0.0
    %1838 = vmatmul.mubr.f32.gmra.mxu0 %v1766
    %v1839 = vpop.f32.mrf.mxu0
    %v1840 = vpop.f32.mrf.mxu0
    %v1841 = vadd.f32 0.0, %v1840
    %1842 = vdwg.mxu0
    %v1843 = vld [vmem:[%s421] sm:$0xff]
    %v1844 = vld [vmem:[%s421 + $0x8] sm:$0xff]
    %v1845 = vld [vmem:[%s423] sm:$0xff]
    %v1846 = vld [vmem:[%s423 + $0x8] sm:$0xff]
    %v1847 = vadd.f32 %v1843, %v1835
    %v1848 = vadd.f32 %v1846, %v1841
    %v1849 = vxor.u32 %v1847, 2147483648
    %v1850 = vxor.u32 %v1848, 2147483648
    %v1851 = vmul.f32 %v1849, 1.442695
    %v1852 = vpow.pop %v1851
    %v1853 = vmul.f32 %v1850, 1.442695
    %v1854 = vpow.pop %v1853
    %v1855 = vadd.f32 %v1852, 1.0
    %v1856 = vadd.f32 %v1854, 1.0
    %v1857 = vrcp.pop %v1855
    %v1858 = vmul.f32 1.0, %v1857
    %v1859 = vrcp.pop %v1856
    %v1860 = vmul.f32 1.0, %v1859
    %v1861 = vtanh.pop %v1847
    %v1862 = vtanh.pop %v1848
    %v1863 = vmul.f32 %v1858, %v1744
    %v1864 = vmul.f32 %v1860, %v1745
    %1867 = vrot.lane.b32.xlu0 %v1861, 64
    %v1868 = vpop.permute.xlu0 %1867
    %1869 = vrot.lane.b32.xlu0 %v1862, 64
    %v1870 = vpop.permute.xlu0 %1869
    %v1873 = vmul.f32 %v1858, %v1868
    %v1874 = vmul.f32 %v1860, %v1870
    %1877 = vrot.lane.b32.xlu0 %v1873, 32
    %v1878 = vpop.permute.xlu0 %1877
    %1879 = vrot.lane.b32.xlu0 %v1874, 32
    %v1880 = vpop.permute.xlu0 %1879
    %v1883 = vadd.f32 %v1863, %v1878
    %v1884 = vadd.f32 %v1864, %v1880
    %v1885 = vtanh.pop %v1883
    %v1886 = vtanh.pop %v1884
    %1889 = vrot.lane.b32.xlu0 %v1885, 64
    %v1890 = vpop.permute.xlu0 %1889
    %1891 = vrot.lane.b32.xlu0 %v1886, 64
    %v1892 = vpop.permute.xlu0 %1891
    %v1895 = vmul.f32 %v1858, %v1890
    %v1896 = vmul.f32 %v1860, %v1892
    %1899 = vrot.lane.b32.xlu0 %v1895, 32
    %v1900 = vpop.permute.xlu0 %1899
    %1901 = vrot.lane.b32.xlu0 %v1896, 32
    %v1902 = vpop.permute.xlu0 %1901
    %v1903 = vsel %vm118, %v1900, 0
    %v1905 = vsel %vm118, %v1902, 0
    %1907 = vmatprep.subr.mxu0 0.0
    %1908 = vmatpush1.msra.mxu0 0.0
    %1909 = vmatprep.subr.mxu0 0.0
    %1910 = vmatpush1.msra.mxu0 0.0
    %1911 = vmatprep.subr.mxu0 0.0
    %1912 = vmatpush1.msra.mxu0 0.0
    %1913 = vmatprep.subr.mxu0 0.0
    %1914 = vmatpush1.msra.mxu0 0.0
    %1915 = vmatprep.subr.mxu0 0.0
    %1916 = vmatpush1.msra.mxu0 0.0
    %1917 = vmatprep.subr.mxu0 0.0
    %1918 = vmatpush1.msra.mxu0 0.0
    %1919 = vmatprep.subr.mxu0 0.0
    %1920 = vmatpush1.msra.mxu0 0.0
    %1921 = vmatprep.subr.mxu0 0.0
    %1922 = vmatpush1.msra.mxu0 0.0
    %1923 = vmatprep.subr.mxu0 0.0
    %1924 = vmatpush1.msra.mxu0 0.0
    %1925 = vmatprep.subr.mxu0 0.0
    %1926 = vmatpush1.msra.mxu0 0.0
    %1927 = vmatprep.subr.mxu0 0.0
    %1928 = vmatpush1.msra.mxu0 0.0
    %1929 = vmatprep.subr.mxu0 0.0
    %1930 = vmatpush1.msra.mxu0 0.0
    %1931 = vmatprep.subr.mxu0 %v1705
    %1932 = vmatpush1.msra.mxu0 %v1704
    %1933 = vmatprep.subr.mxu0 %v1703
    %1934 = vmatpush1.msra.mxu0 %v1702
    %1935 = vmatprep.subr.mxu0 %v1701
    %1936 = vmatpush1.msra.mxu0 %v1700
    %1937 = vmatprep.subr.mxu0 %v1699
    %1938 = vmatpush1.msra.mxu0 %v1698
    %1939 = vmatprep.subr.mxu0 0.0
    %1940 = vmatpush2.msra.mxu0 0.0
    %1941 = vmatprep.subr.mxu0 0.0
    %1942 = vmatpush2.msra.mxu0 0.0
    %1943 = vmatprep.subr.mxu0 0.0
    %1944 = vmatpush2.msra.mxu0 0.0
    %1945 = vmatprep.subr.mxu0 0.0
    %1946 = vmatpush2.msra.mxu0 0.0
    %1947 = vmatprep.subr.mxu0 0.0
    %1948 = vmatpush2.msra.mxu0 0.0
    %1949 = vmatprep.subr.mxu0 0.0
    %1950 = vmatpush2.msra.mxu0 0.0
    %1951 = vmatprep.subr.mxu0 0.0
    %1952 = vmatpush2.msra.mxu0 0.0
    %1953 = vmatprep.subr.mxu0 0.0
    %1954 = vmatpush2.msra.mxu0 0.0
    %1955 = vmatprep.subr.mxu0 0.0
    %1956 = vmatpush2.msra.mxu0 0.0
    %1957 = vmatprep.subr.mxu0 0.0
    %1958 = vmatpush2.msra.mxu0 0.0
    %1959 = vmatprep.subr.mxu0 0.0
    %1960 = vmatpush2.msra.mxu0 0.0
    %1961 = vmatprep.subr.mxu0 0.0
    %1962 = vmatpush2.msra.mxu0 0.0
    %1963 = vmatprep.subr.mxu0 0.0
    %1964 = vmatpush2.msra.mxu0 0.0
    %1965 = vmatprep.subr.mxu0 0.0
    %1966 = vmatpush2.msra.mxu0 0.0
    %1967 = vmatprep.subr.mxu0 0.0
    %1968 = vmatpush2.msra.mxu0 0.0
    %1969 = vmatprep.subr.mxu0 0.0
    %1970 = vmatpush2.msra.mxu0 0.0
    %1971 = vmatprep.mubr.f32.mxu0 0.0
    %1972 = vmatmul.mubr.f32.gmra.mxu0 %v1903
    %v1973 = vpop.f32.mrf.mxu0
    %v1974 = vadd.f32 0.0, %v1973
    %v1975 = vpop.f32.mrf.mxu0
    %1976 = vmatprep.mubr.f32.mxu0 0.0
    %1977 = vmatmul.mubr.f32.gmra.mxu0 %v1905
    %v1978 = vpop.f32.mrf.mxu0
    %v1979 = vpop.f32.mrf.mxu0
    %v1980 = vadd.f32 0.0, %v1979
    %1981 = vdwg.mxu0
    %v1982 = vld [vmem:[%s566] sm:$0xff]
    %v1983 = vld [vmem:[%s566 + $0x8] sm:$0xff]
    %v1984 = vld [vmem:[%s568] sm:$0xff]
    %v1985 = vld [vmem:[%s568 + $0x8] sm:$0xff]
    %v1986 = vadd.f32 %v1982, %v1974
    %v1987 = vadd.f32 %v1985, %v1980
    %v1988 = vxor.u32 %v1986, 2147483648
    %v1989 = vxor.u32 %v1987, 2147483648
    %v1990 = vmul.f32 %v1988, 1.442695
    %v1991 = vpow.pop %v1990
    %v1992 = vmul.f32 %v1989, 1.442695
    %v1993 = vpow.pop %v1992
    %v1994 = vadd.f32 %v1991, 1.0
    %v1995 = vadd.f32 %v1993, 1.0
    %v1996 = vrcp.pop %v1994
    %v1997 = vmul.f32 1.0, %v1996
    %v1998 = vrcp.pop %v1995
    %v1999 = vmul.f32 1.0, %v1998
    %v2000 = vtanh.pop %v1986
    %v2001 = vtanh.pop %v1987
    %v2002 = vmul.f32 %v1997, %v1883
    %v2003 = vmul.f32 %v1999, %v1884
    %2006 = vrot.lane.b32.xlu0 %v2000, 64
    %v2007 = vpop.permute.xlu0 %2006
    %2008 = vrot.lane.b32.xlu0 %v2001, 64
    %v2009 = vpop.permute.xlu0 %2008
    %v2012 = vmul.f32 %v1997, %v2007
    %v2013 = vmul.f32 %v1999, %v2009
    %2016 = vrot.lane.b32.xlu0 %v2012, 32
    %v2017 = vpop.permute.xlu0 %2016
    %2018 = vrot.lane.b32.xlu0 %v2013, 32
    %v2019 = vpop.permute.xlu0 %2018
    %v2022 = vadd.f32 %v2002, %v2017
    %v2023 = vadd.f32 %v2003, %v2019
    %v2024 = vtanh.pop %v2022
    %v2025 = vtanh.pop %v2023
    %2028 = vrot.lane.b32.xlu0 %v2024, 64
    %v2029 = vpop.permute.xlu0 %2028
    %2030 = vrot.lane.b32.xlu0 %v2025, 64
    %v2031 = vpop.permute.xlu0 %2030
    %v2034 = vmul.f32 %v1997, %v2029
    %v2035 = vmul.f32 %v1999, %v2031
    %2038 = vrot.lane.b32.xlu0 %v2034, 32
    %v2039 = vpop.permute.xlu0 %2038
    %2040 = vrot.lane.b32.xlu0 %v2035, 32
    %v2041 = vpop.permute.xlu0 %2040
    %v2042 = vsel %vm118, %v2039, 0
    %v2044 = vsel %vm118, %v2041, 0
    %2046 = vmatprep.subr.mxu0 0.0
    %2047 = vmatpush1.msra.mxu0 0.0
    %2048 = vmatprep.subr.mxu0 0.0
    %2049 = vmatpush1.msra.mxu0 0.0
    %2050 = vmatprep.subr.mxu0 0.0
    %2051 = vmatpush1.msra.mxu0 0.0
    %2052 = vmatprep.subr.mxu0 0.0
    %2053 = vmatpush1.msra.mxu0 0.0
    %2054 = vmatprep.subr.mxu0 0.0
    %2055 = vmatpush1.msra.mxu0 0.0
    %2056 = vmatprep.subr.mxu0 0.0
    %2057 = vmatpush1.msra.mxu0 0.0
    %2058 = vmatprep.subr.mxu0 0.0
    %2059 = vmatpush1.msra.mxu0 0.0
    %2060 = vmatprep.subr.mxu0 0.0
    %2061 = vmatpush1.msra.mxu0 0.0
    %2062 = vmatprep.subr.mxu0 0.0
    %2063 = vmatpush1.msra.mxu0 0.0
    %2064 = vmatprep.subr.mxu0 0.0
    %2065 = vmatpush1.msra.mxu0 0.0
    %2066 = vmatprep.subr.mxu0 0.0
    %2067 = vmatpush1.msra.mxu0 0.0
    %2068 = vmatprep.subr.mxu0 0.0
    %2069 = vmatpush1.msra.mxu0 0.0
    %2070 = vmatprep.subr.mxu0 %v1705
    %2071 = vmatpush1.msra.mxu0 %v1704
    %2072 = vmatprep.subr.mxu0 %v1703
    %2073 = vmatpush1.msra.mxu0 %v1702
    %2074 = vmatprep.subr.mxu0 %v1701
    %2075 = vmatpush1.msra.mxu0 %v1700
    %2076 = vmatprep.subr.mxu0 %v1699
    %2077 = vmatpush1.msra.mxu0 %v1698
    %2078 = vmatprep.subr.mxu0 0.0
    %2079 = vmatpush2.msra.mxu0 0.0
    %2080 = vmatprep.subr.mxu0 0.0
    %2081 = vmatpush2.msra.mxu0 0.0
    %2082 = vmatprep.subr.mxu0 0.0
    %2083 = vmatpush2.msra.mxu0 0.0
    %2084 = vmatprep.subr.mxu0 0.0
    %2085 = vmatpush2.msra.mxu0 0.0
    %2086 = vmatprep.subr.mxu0 0.0
    %2087 = vmatpush2.msra.mxu0 0.0
    %2088 = vmatprep.subr.mxu0 0.0
    %2089 = vmatpush2.msra.mxu0 0.0
    %2090 = vmatprep.subr.mxu0 0.0
    %2091 = vmatpush2.msra.mxu0 0.0
    %2092 = vmatprep.subr.mxu0 0.0
    %2093 = vmatpush2.msra.mxu0 0.0
    %2094 = vmatprep.subr.mxu0 0.0
    %2095 = vmatpush2.msra.mxu0 0.0
    %2096 = vmatprep.subr.mxu0 0.0
    %2097 = vmatpush2.msra.mxu0 0.0
    %2098 = vmatprep.subr.mxu0 0.0
    %2099 = vmatpush2.msra.mxu0 0.0
    %2100 = vmatprep.subr.mxu0 0.0
    %2101 = vmatpush2.msra.mxu0 0.0
    %2102 = vmatprep.subr.mxu0 0.0
    %2103 = vmatpush2.msra.mxu0 0.0
    %2104 = vmatprep.subr.mxu0 0.0
    %2105 = vmatpush2.msra.mxu0 0.0
    %2106 = vmatprep.subr.mxu0 0.0
    %2107 = vmatpush2.msra.mxu0 0.0
    %2108 = vmatprep.subr.mxu0 0.0
    %2109 = vmatpush2.msra.mxu0 0.0
    %2110 = vmatprep.mubr.f32.mxu0 0.0
    %2111 = vmatmul.mubr.f32.gmra.mxu0 %v2042
    %v2112 = vpop.f32.mrf.mxu0
    %v2113 = vadd.f32 0.0, %v2112
    %v2114 = vpop.f32.mrf.mxu0
    %2115 = vmatprep.mubr.f32.mxu0 0.0
    %2116 = vmatmul.mubr.f32.gmra.mxu0 %v2044
    %v2117 = vpop.f32.mrf.mxu0
    %v2118 = vpop.f32.mrf.mxu0
    %v2119 = vadd.f32 0.0, %v2118
    %2120 = vdwg.mxu0
    %v2121 = vld [vmem:[%s711] sm:$0xff]
    %v2122 = vld [vmem:[%s711 + $0x8] sm:$0xff]
    %v2123 = vld [vmem:[%s713] sm:$0xff]
    %v2124 = vld [vmem:[%s713 + $0x8] sm:$0xff]
    %v2125 = vadd.f32 %v2121, %v2113
    %v2126 = vadd.f32 %v2124, %v2119
    %v2127 = vxor.u32 %v2125, 2147483648
    %v2128 = vxor.u32 %v2126, 2147483648
    %v2129 = vmul.f32 %v2127, 1.442695
    %v2130 = vpow.pop %v2129
    %v2131 = vmul.f32 %v2128, 1.442695
    %v2132 = vpow.pop %v2131
    %v2133 = vadd.f32 %v2130, 1.0
    %v2134 = vadd.f32 %v2132, 1.0
    %v2135 = vrcp.pop %v2133
    %v2136 = vmul.f32 1.0, %v2135
    %v2137 = vrcp.pop %v2134
    %v2138 = vmul.f32 1.0, %v2137
    %v2139 = vtanh.pop %v2125
    %v2140 = vtanh.pop %v2126
    %v2141 = vmul.f32 %v2136, %v2022
    %v2142 = vmul.f32 %v2138, %v2023
    %2145 = vrot.lane.b32.xlu0 %v2139, 64
    %v2146 = vpop.permute.xlu0 %2145
    %2147 = vrot.lane.b32.xlu0 %v2140, 64
    %v2148 = vpop.permute.xlu0 %2147
    %v2151 = vmul.f32 %v2136, %v2146
    %v2152 = vmul.f32 %v2138, %v2148
    %2155 = vrot.lane.b32.xlu0 %v2151, 32
    %v2156 = vpop.permute.xlu0 %2155
    %2157 = vrot.lane.b32.xlu0 %v2152, 32
    %v2158 = vpop.permute.xlu0 %2157
    %v2161 = vadd.f32 %v2141, %v2156
    %v2162 = vadd.f32 %v2142, %v2158
    %v2163 = vtanh.pop %v2161
    %v2164 = vtanh.pop %v2162
    %2167 = vrot.lane.b32.xlu0 %v2163, 64
    %v2168 = vpop.permute.xlu0 %2167
    %2169 = vrot.lane.b32.xlu0 %v2164, 64
    %v2170 = vpop.permute.xlu0 %2169
    %v2173 = vmul.f32 %v2136, %v2168
    %v2174 = vmul.f32 %v2138, %v2170
    %2177 = vrot.lane.b32.xlu0 %v2173, 32
    %v2178 = vpop.permute.xlu0 %2177
    %2179 = vrot.lane.b32.xlu0 %v2174, 32
    %v2180 = vpop.permute.xlu0 %2179
    %v2181 = vsel %vm118, %v2178, 0
    %v2183 = vsel %vm118, %v2180, 0
    %2185 = vmatprep.subr.mxu0 0.0
    %2186 = vmatpush1.msra.mxu0 0.0
    %2187 = vmatprep.subr.mxu0 0.0
    %2188 = vmatpush1.msra.mxu0 0.0
    %2189 = vmatprep.subr.mxu0 0.0
    %2190 = vmatpush1.msra.mxu0 0.0
    %2191 = vmatprep.subr.mxu0 0.0
    %2192 = vmatpush1.msra.mxu0 0.0
    %2193 = vmatprep.subr.mxu0 0.0
    %2194 = vmatpush1.msra.mxu0 0.0
    %2195 = vmatprep.subr.mxu0 0.0
    %2196 = vmatpush1.msra.mxu0 0.0
    %2197 = vmatprep.subr.mxu0 0.0
    %2198 = vmatpush1.msra.mxu0 0.0
    %2199 = vmatprep.subr.mxu0 0.0
    %2200 = vmatpush1.msra.mxu0 0.0
    %2201 = vmatprep.subr.mxu0 0.0
    %2202 = vmatpush1.msra.mxu0 0.0
    %2203 = vmatprep.subr.mxu0 0.0
    %2204 = vmatpush1.msra.mxu0 0.0
    %2205 = vmatprep.subr.mxu0 0.0
    %2206 = vmatpush1.msra.mxu0 0.0
    %2207 = vmatprep.subr.mxu0 0.0
    %2208 = vmatpush1.msra.mxu0 0.0
    %2209 = vmatprep.subr.mxu0 %v1705
    %2210 = vmatpush1.msra.mxu0 %v1704
    %2211 = vmatprep.subr.mxu0 %v1703
    %2212 = vmatpush1.msra.mxu0 %v1702
    %2213 = vmatprep.subr.mxu0 %v1701
    %2214 = vmatpush1.msra.mxu0 %v1700
    %2215 = vmatprep.subr.mxu0 %v1699
    %2216 = vmatpush1.msra.mxu0 %v1698
    %2217 = vmatprep.subr.mxu0 0.0
    %2218 = vmatpush2.msra.mxu0 0.0
    %2219 = vmatprep.subr.mxu0 0.0
    %2220 = vmatpush2.msra.mxu0 0.0
    %2221 = vmatprep.subr.mxu0 0.0
    %2222 = vmatpush2.msra.mxu0 0.0
    %2223 = vmatprep.subr.mxu0 0.0
    %2224 = vmatpush2.msra.mxu0 0.0
    %2225 = vmatprep.subr.mxu0 0.0
    %2226 = vmatpush2.msra.mxu0 0.0
    %2227 = vmatprep.subr.mxu0 0.0
    %2228 = vmatpush2.msra.mxu0 0.0
    %2229 = vmatprep.subr.mxu0 0.0
    %2230 = vmatpush2.msra.mxu0 0.0
    %2231 = vmatprep.subr.mxu0 0.0
    %2232 = vmatpush2.msra.mxu0 0.0
    %2233 = vmatprep.subr.mxu0 0.0
    %2234 = vmatpush2.msra.mxu0 0.0
    %2235 = vmatprep.subr.mxu0 0.0
    %2236 = vmatpush2.msra.mxu0 0.0
    %2237 = vmatprep.subr.mxu0 0.0
    %2238 = vmatpush2.msra.mxu0 0.0
    %2239 = vmatprep.subr.mxu0 0.0
    %2240 = vmatpush2.msra.mxu0 0.0
    %2241 = vmatprep.subr.mxu0 0.0
    %2242 = vmatpush2.msra.mxu0 0.0
    %2243 = vmatprep.subr.mxu0 0.0
    %2244 = vmatpush2.msra.mxu0 0.0
    %2245 = vmatprep.subr.mxu0 0.0
    %2246 = vmatpush2.msra.mxu0 0.0
    %2247 = vmatprep.subr.mxu0 0.0
    %2248 = vmatpush2.msra.mxu0 0.0
    %2249 = vmatprep.mubr.f32.mxu0 0.0
    %2250 = vmatmul.mubr.f32.gmra.mxu0 %v2181
    %v2251 = vpop.f32.mrf.mxu0
    %v2252 = vadd.f32 0.0, %v2251
    %v2253 = vpop.f32.mrf.mxu0
    %2254 = vmatprep.mubr.f32.mxu0 0.0
    %2255 = vmatmul.mubr.f32.gmra.mxu0 %v2183
    %v2256 = vpop.f32.mrf.mxu0
    %v2257 = vpop.f32.mrf.mxu0
    %v2258 = vadd.f32 0.0, %v2257
    %2259 = vdwg.mxu0
    %v2260 = vadd.f32 %v2123, %v2252
    %v2261 = vadd.f32 %v2122, %v2258
    %v2262 = vxor.u32 %v2260, 2147483648
    %v2263 = vxor.u32 %v2261, 2147483648
    %v2264 = vmul.f32 %v2262, 1.442695
    %v2265 = vpow.pop %v2264
    %v2266 = vmul.f32 %v2263, 1.442695
    %v2267 = vpow.pop %v2266
    %v2268 = vadd.f32 %v2265, 1.0
    %v2269 = vadd.f32 %v2267, 1.0
    %v2270 = vrcp.pop %v2268
    %v2271 = vmul.f32 1.0, %v2270
    %v2272 = vrcp.pop %v2269
    %v2273 = vmul.f32 1.0, %v2272
    %v2274 = vtanh.pop %v2260
    %v2275 = vtanh.pop %v2261
    %v2276 = vmul.f32 %v2271, %v2161
    %v2277 = vmul.f32 %v2273, %v2162
    %2280 = vrot.lane.b32.xlu0 %v2274, 64
    %v2281 = vpop.permute.xlu0 %2280
    %2282 = vrot.lane.b32.xlu0 %v2275, 64
    %v2283 = vpop.permute.xlu0 %2282
    %v2286 = vmul.f32 %v2271, %v2281
    %v2287 = vmul.f32 %v2273, %v2283
    %2290 = vrot.lane.b32.xlu0 %v2286, 32
    %v2291 = vpop.permute.xlu0 %2290
    %2292 = vrot.lane.b32.xlu0 %v2287, 32
    %v2293 = vpop.permute.xlu0 %2292
    %v2296 = vadd.f32 %v2276, %v2291
    %v2297 = vadd.f32 %v2277, %v2293
    %v2298 = vtanh.pop %v2296
    %v2299 = vtanh.pop %v2297
    %2302 = vrot.lane.b32.xlu0 %v2298, 64
    %v2303 = vpop.permute.xlu0 %2302
    %2304 = vrot.lane.b32.xlu0 %v2299, 64
    %v2305 = vpop.permute.xlu0 %2304
    %v2308 = vmul.f32 %v2271, %v2303
    %v2309 = vmul.f32 %v2273, %v2305
    %2312 = vrot.lane.b32.xlu0 %v2308, 32
    %v2313 = vpop.permute.xlu0 %2312
    %2314 = vrot.lane.b32.xlu0 %v2309, 32
    %v2315 = vpop.permute.xlu0 %2314
    %v2316 = vsel %vm118, %v2313, 0
    %v2318 = vsel %vm118, %v2315, 0
    %2320 = vmatprep.subr.mxu0 0.0
    %2321 = vmatpush1.msra.mxu0 0.0
    %2322 = vmatprep.subr.mxu0 0.0
    %2323 = vmatpush1.msra.mxu0 0.0
    %2324 = vmatprep.subr.mxu0 0.0
    %2325 = vmatpush1.msra.mxu0 0.0
    %2326 = vmatprep.subr.mxu0 0.0
    %2327 = vmatpush1.msra.mxu0 0.0
    %2328 = vmatprep.subr.mxu0 0.0
    %2329 = vmatpush1.msra.mxu0 0.0
    %2330 = vmatprep.subr.mxu0 0.0
    %2331 = vmatpush1.msra.mxu0 0.0
    %2332 = vmatprep.subr.mxu0 0.0
    %2333 = vmatpush1.msra.mxu0 0.0
    %2334 = vmatprep.subr.mxu0 0.0
    %2335 = vmatpush1.msra.mxu0 0.0
    %2336 = vmatprep.subr.mxu0 0.0
    %2337 = vmatpush1.msra.mxu0 0.0
    %2338 = vmatprep.subr.mxu0 0.0
    %2339 = vmatpush1.msra.mxu0 0.0
    %2340 = vmatprep.subr.mxu0 0.0
    %2341 = vmatpush1.msra.mxu0 0.0
    %2342 = vmatprep.subr.mxu0 0.0
    %2343 = vmatpush1.msra.mxu0 0.0
    %2344 = vmatprep.subr.mxu0 %v1705
    %2345 = vmatpush1.msra.mxu0 %v1704
    %2346 = vmatprep.subr.mxu0 %v1703
    %2347 = vmatpush1.msra.mxu0 %v1702
    %2348 = vmatprep.subr.mxu0 %v1701
    %2349 = vmatpush1.msra.mxu0 %v1700
    %2350 = vmatprep.subr.mxu0 %v1699
    %2351 = vmatpush1.msra.mxu0 %v1698
    %2352 = vmatprep.subr.mxu0 0.0
    %2353 = vmatpush2.msra.mxu0 0.0
    %2354 = vmatprep.subr.mxu0 0.0
    %2355 = vmatpush2.msra.mxu0 0.0
    %2356 = vmatprep.subr.mxu0 0.0
    %2357 = vmatpush2.msra.mxu0 0.0
    %2358 = vmatprep.subr.mxu0 0.0
    %2359 = vmatpush2.msra.mxu0 0.0
    %2360 = vmatprep.subr.mxu0 0.0
    %2361 = vmatpush2.msra.mxu0 0.0
    %2362 = vmatprep.subr.mxu0 0.0
    %2363 = vmatpush2.msra.mxu0 0.0
    %2364 = vmatprep.subr.mxu0 0.0
    %2365 = vmatpush2.msra.mxu0 0.0
    %2366 = vmatprep.subr.mxu0 0.0
    %2367 = vmatpush2.msra.mxu0 0.0
    %2368 = vmatprep.subr.mxu0 0.0
    %2369 = vmatpush2.msra.mxu0 0.0
    %2370 = vmatprep.subr.mxu0 0.0
    %2371 = vmatpush2.msra.mxu0 0.0
    %2372 = vmatprep.subr.mxu0 0.0
    %2373 = vmatpush2.msra.mxu0 0.0
    %2374 = vmatprep.subr.mxu0 0.0
    %2375 = vmatpush2.msra.mxu0 0.0
    %2376 = vmatprep.subr.mxu0 0.0
    %2377 = vmatpush2.msra.mxu0 0.0
    %2378 = vmatprep.subr.mxu0 0.0
    %2379 = vmatpush2.msra.mxu0 0.0
    %2380 = vmatprep.subr.mxu0 0.0
    %2381 = vmatpush2.msra.mxu0 0.0
    %2382 = vmatprep.subr.mxu0 0.0
    %2383 = vmatpush2.msra.mxu0 0.0
    %2384 = vmatprep.mubr.f32.mxu0 0.0
    %2385 = vmatmul.mubr.f32.gmra.mxu0 %v2316
    %v2386 = vpop.f32.mrf.mxu0
    %v2387 = vadd.f32 0.0, %v2386
    %v2388 = vpop.f32.mrf.mxu0
    %2389 = vmatprep.mubr.f32.mxu0 0.0
    %2390 = vmatmul.mubr.f32.gmra.mxu0 %v2318
    %v2391 = vpop.f32.mrf.mxu0
    %v2392 = vpop.f32.mrf.mxu0
    %v2393 = vadd.f32 0.0, %v2392
    %2394 = vdwg.mxu0
    %v2395 = vadd.f32 %v1984, %v2387
    %v2396 = vadd.f32 %v1983, %v2393
    %v2397 = vxor.u32 %v2395, 2147483648
    %v2398 = vxor.u32 %v2396, 2147483648
    %v2399 = vmul.f32 %v2397, 1.442695
    %v2400 = vpow.pop %v2399
    %v2401 = vmul.f32 %v2398, 1.442695
    %v2402 = vpow.pop %v2401
    %v2403 = vadd.f32 %v2400, 1.0
    %v2404 = vadd.f32 %v2402, 1.0
    %v2405 = vrcp.pop %v2403
    %v2406 = vmul.f32 1.0, %v2405
    %v2407 = vrcp.pop %v2404
    %v2408 = vmul.f32 1.0, %v2407
    %v2409 = vtanh.pop %v2395
    %v2410 = vtanh.pop %v2396
    %v2411 = vmul.f32 %v2406, %v2296
    %v2412 = vmul.f32 %v2408, %v2297
    %2415 = vrot.lane.b32.xlu0 %v2409, 64
    %v2416 = vpop.permute.xlu0 %2415
    %2417 = vrot.lane.b32.xlu0 %v2410, 64
    %v2418 = vpop.permute.xlu0 %2417
    %v2421 = vmul.f32 %v2406, %v2416
    %v2422 = vmul.f32 %v2408, %v2418
    %2425 = vrot.lane.b32.xlu0 %v2421, 32
    %v2426 = vpop.permute.xlu0 %2425
    %2427 = vrot.lane.b32.xlu0 %v2422, 32
    %v2428 = vpop.permute.xlu0 %2427
    %v2431 = vadd.f32 %v2411, %v2426
    %v2432 = vadd.f32 %v2412, %v2428
    %v2433 = vtanh.pop %v2431
    %v2434 = vtanh.pop %v2432
    %2437 = vrot.lane.b32.xlu0 %v2433, 64
    %v2438 = vpop.permute.xlu0 %2437
    %2439 = vrot.lane.b32.xlu0 %v2434, 64
    %v2440 = vpop.permute.xlu0 %2439
    %v2443 = vmul.f32 %v2406, %v2438
    %v2444 = vmul.f32 %v2408, %v2440
    %2447 = vrot.lane.b32.xlu0 %v2443, 32
    %v2448 = vpop.permute.xlu0 %2447
    %2449 = vrot.lane.b32.xlu0 %v2444, 32
    %v2450 = vpop.permute.xlu0 %2449
    %v2451 = vsel %vm118, %v2448, 0
    %v2453 = vsel %vm118, %v2450, 0
    %2455 = vmatprep.subr.mxu0 0.0
    %2456 = vmatpush1.msra.mxu0 0.0
    %2457 = vmatprep.subr.mxu0 0.0
    %2458 = vmatpush1.msra.mxu0 0.0
    %2459 = vmatprep.subr.mxu0 0.0
    %2460 = vmatpush1.msra.mxu0 0.0
    %2461 = vmatprep.subr.mxu0 0.0
    %2462 = vmatpush1.msra.mxu0 0.0
    %2463 = vmatprep.subr.mxu0 0.0
    %2464 = vmatpush1.msra.mxu0 0.0
    %2465 = vmatprep.subr.mxu0 0.0
    %2466 = vmatpush1.msra.mxu0 0.0
    %2467 = vmatprep.subr.mxu0 0.0
    %2468 = vmatpush1.msra.mxu0 0.0
    %2469 = vmatprep.subr.mxu0 0.0
    %2470 = vmatpush1.msra.mxu0 0.0
    %2471 = vmatprep.subr.mxu0 0.0
    %2472 = vmatpush1.msra.mxu0 0.0
    %2473 = vmatprep.subr.mxu0 0.0
    %2474 = vmatpush1.msra.mxu0 0.0
    %2475 = vmatprep.subr.mxu0 0.0
    %2476 = vmatpush1.msra.mxu0 0.0
    %2477 = vmatprep.subr.mxu0 0.0
    %2478 = vmatpush1.msra.mxu0 0.0
    %2479 = vmatprep.subr.mxu0 %v1705
    %2480 = vmatpush1.msra.mxu0 %v1704
    %2481 = vmatprep.subr.mxu0 %v1703
    %2482 = vmatpush1.msra.mxu0 %v1702
    %2483 = vmatprep.subr.mxu0 %v1701
    %2484 = vmatpush1.msra.mxu0 %v1700
    %2485 = vmatprep.subr.mxu0 %v1699
    %2486 = vmatpush1.msra.mxu0 %v1698
    %2487 = vmatprep.subr.mxu0 0.0
    %2488 = vmatpush2.msra.mxu0 0.0
    %2489 = vmatprep.subr.mxu0 0.0
    %2490 = vmatpush2.msra.mxu0 0.0
    %2491 = vmatprep.subr.mxu0 0.0
    %2492 = vmatpush2.msra.mxu0 0.0
    %2493 = vmatprep.subr.mxu0 0.0
    %2494 = vmatpush2.msra.mxu0 0.0
    %2495 = vmatprep.subr.mxu0 0.0
    %2496 = vmatpush2.msra.mxu0 0.0
    %2497 = vmatprep.subr.mxu0 0.0
    %2498 = vmatpush2.msra.mxu0 0.0
    %2499 = vmatprep.subr.mxu0 0.0
    %2500 = vmatpush2.msra.mxu0 0.0
    %2501 = vmatprep.subr.mxu0 0.0
    %2502 = vmatpush2.msra.mxu0 0.0
    %2503 = vmatprep.subr.mxu0 0.0
    %2504 = vmatpush2.msra.mxu0 0.0
    %2505 = vmatprep.subr.mxu0 0.0
    %2506 = vmatpush2.msra.mxu0 0.0
    %2507 = vmatprep.subr.mxu0 0.0
    %2508 = vmatpush2.msra.mxu0 0.0
    %2509 = vmatprep.subr.mxu0 0.0
    %2510 = vmatpush2.msra.mxu0 0.0
    %2511 = vmatprep.subr.mxu0 0.0
    %2512 = vmatpush2.msra.mxu0 0.0
    %2513 = vmatprep.subr.mxu0 0.0
    %2514 = vmatpush2.msra.mxu0 0.0
    %2515 = vmatprep.subr.mxu0 0.0
    %2516 = vmatpush2.msra.mxu0 0.0
    %2517 = vmatprep.subr.mxu0 0.0
    %2518 = vmatpush2.msra.mxu0 0.0
    %2519 = vmatprep.mubr.f32.mxu0 0.0
    %2520 = vmatmul.mubr.f32.gmra.mxu0 %v2451
    %v2521 = vpop.f32.mrf.mxu0
    %v2522 = vadd.f32 0.0, %v2521
    %v2523 = vpop.f32.mrf.mxu0
    %2524 = vmatprep.mubr.f32.mxu0 0.0
    %2525 = vmatmul.mubr.f32.gmra.mxu0 %v2453
    %v2526 = vpop.f32.mrf.mxu0
    %v2527 = vpop.f32.mrf.mxu0
    %v2528 = vadd.f32 0.0, %v2527
    %2529 = vdwg.mxu0
    %v2530 = vadd.f32 %v1845, %v2522
    %v2531 = vadd.f32 %v1844, %v2528
    %v2532 = vxor.u32 %v2530, 2147483648
    %v2533 = vxor.u32 %v2531, 2147483648
    %v2534 = vmul.f32 %v2532, 1.442695
    %v2535 = vpow.pop %v2534
    %v2536 = vmul.f32 %v2533, 1.442695
    %v2537 = vpow.pop %v2536
    %v2538 = vadd.f32 %v2535, 1.0
    %v2539 = vadd.f32 %v2537, 1.0
    %v2540 = vrcp.pop %v2538
    %v2541 = vmul.f32 1.0, %v2540
    %v2542 = vrcp.pop %v2539
    %v2543 = vmul.f32 1.0, %v2542
    %v2544 = vtanh.pop %v2530
    %v2545 = vtanh.pop %v2531
    %v2546 = vmul.f32 %v2541, %v2431
    %v2547 = vmul.f32 %v2543, %v2432
    %2550 = vrot.lane.b32.xlu0 %v2544, 64
    %v2551 = vpop.permute.xlu0 %2550
    %2552 = vrot.lane.b32.xlu0 %v2545, 64
    %v2553 = vpop.permute.xlu0 %2552
    %v2556 = vmul.f32 %v2541, %v2551
    %v2557 = vmul.f32 %v2543, %v2553
    %2560 = vrot.lane.b32.xlu0 %v2556, 32
    %v2561 = vpop.permute.xlu0 %2560
    %2562 = vrot.lane.b32.xlu0 %v2557, 32
    %v2563 = vpop.permute.xlu0 %2562
    %v2566 = vadd.f32 %v2546, %v2561
    %v2567 = vadd.f32 %v2547, %v2563
    %v2568 = vtanh.pop %v2566
    %v2569 = vtanh.pop %v2567
    %2572 = vrot.lane.b32.xlu0 %v2568, 64
    %v2573 = vpop.permute.xlu0 %2572
    %2574 = vrot.lane.b32.xlu0 %v2569, 64
    %v2575 = vpop.permute.xlu0 %2574
    %v2578 = vmul.f32 %v2541, %v2573
    %v2579 = vmul.f32 %v2543, %v2575
    %2582 = vrot.lane.b32.xlu0 %v2578, 32
    %v2583 = vpop.permute.xlu0 %2582
    %2584 = vrot.lane.b32.xlu0 %v2579, 32
    %v2585 = vpop.permute.xlu0 %2584
    %v2586 = vsel %vm118, %v2583, 0
    %v2588 = vsel %vm118, %v2585, 0
    %2590 = vmatprep.subr.mxu0 0.0
    %2591 = vmatpush1.msra.mxu0 0.0
    %2592 = vmatprep.subr.mxu0 0.0
    %2593 = vmatpush1.msra.mxu0 0.0
    %2594 = vmatprep.subr.mxu0 0.0
    %2595 = vmatpush1.msra.mxu0 0.0
    %2596 = vmatprep.subr.mxu0 0.0
    %2597 = vmatpush1.msra.mxu0 0.0
    %2598 = vmatprep.subr.mxu0 0.0
    %2599 = vmatpush1.msra.mxu0 0.0
    %2600 = vmatprep.subr.mxu0 0.0
    %2601 = vmatpush1.msra.mxu0 0.0
    %2602 = vmatprep.subr.mxu0 0.0
    %2603 = vmatpush1.msra.mxu0 0.0
    %2604 = vmatprep.subr.mxu0 0.0
    %2605 = vmatpush1.msra.mxu0 0.0
    %2606 = vmatprep.subr.mxu0 0.0
    %2607 = vmatpush1.msra.mxu0 0.0
    %2608 = vmatprep.subr.mxu0 0.0
    %2609 = vmatpush1.msra.mxu0 0.0
    %2610 = vmatprep.subr.mxu0 0.0
    %2611 = vmatpush1.msra.mxu0 0.0
    %2612 = vmatprep.subr.mxu0 0.0
    %2613 = vmatpush1.msra.mxu0 0.0
    %2614 = vmatprep.subr.mxu0 %v1705
    %2615 = vmatpush1.msra.mxu0 %v1704
    %2616 = vmatprep.subr.mxu0 %v1703
    %2617 = vmatpush1.msra.mxu0 %v1702
    %2618 = vmatprep.subr.mxu0 %v1701
    %2619 = vmatpush1.msra.mxu0 %v1700
    %2620 = vmatprep.subr.mxu0 %v1699
    %2621 = vmatpush1.msra.mxu0 %v1698
    %2622 = vmatprep.subr.mxu0 0.0
    %2623 = vmatpush2.msra.mxu0 0.0
    %2624 = vmatprep.subr.mxu0 0.0
    %2625 = vmatpush2.msra.mxu0 0.0
    %2626 = vmatprep.subr.mxu0 0.0
    %2627 = vmatpush2.msra.mxu0 0.0
    %2628 = vmatprep.subr.mxu0 0.0
    %2629 = vmatpush2.msra.mxu0 0.0
    %2630 = vmatprep.subr.mxu0 0.0
    %2631 = vmatpush2.msra.mxu0 0.0
    %2632 = vmatprep.subr.mxu0 0.0
    %2633 = vmatpush2.msra.mxu0 0.0
    %2634 = vmatprep.subr.mxu0 0.0
    %2635 = vmatpush2.msra.mxu0 0.0
    %2636 = vmatprep.subr.mxu0 0.0
    %2637 = vmatpush2.msra.mxu0 0.0
    %2638 = vmatprep.subr.mxu0 0.0
    %2639 = vmatpush2.msra.mxu0 0.0
    %2640 = vmatprep.subr.mxu0 0.0
    %2641 = vmatpush2.msra.mxu0 0.0
    %2642 = vmatprep.subr.mxu0 0.0
    %2643 = vmatpush2.msra.mxu0 0.0
    %2644 = vmatprep.subr.mxu0 0.0
    %2645 = vmatpush2.msra.mxu0 0.0
    %2646 = vmatprep.subr.mxu0 0.0
    %2647 = vmatpush2.msra.mxu0 0.0
    %2648 = vmatprep.subr.mxu0 0.0
    %2649 = vmatpush2.msra.mxu0 0.0
    %2650 = vmatprep.subr.mxu0 0.0
    %2651 = vmatpush2.msra.mxu0 0.0
    %2652 = vmatprep.subr.mxu0 0.0
    %2653 = vmatpush2.msra.mxu0 0.0
    %2654 = vmatprep.mubr.f32.mxu0 0.0
    %2655 = vmatmul.mubr.f32.gmra.mxu0 %v2586
    %v2656 = vpop.f32.mrf.mxu0
    %v2657 = vadd.f32 0.0, %v2656
    %v2658 = vpop.f32.mrf.mxu0
    %2659 = vmatprep.mubr.f32.mxu0 0.0
    %2660 = vmatmul.mubr.f32.gmra.mxu0 %v2588
    %v2661 = vpop.f32.mrf.mxu0
    %v2662 = vpop.f32.mrf.mxu0
    %v2663 = vadd.f32 0.0, %v2662
    %2664 = vdwg.mxu0
    %v2665 = vadd.f32 %v1708, %v2657
    %v2666 = vadd.f32 %v1707, %v2663
    %v2667 = vxor.u32 %v2665, 2147483648
    %v2668 = vxor.u32 %v2666, 2147483648
    %v2669 = vmul.f32 %v2667, 1.442695
    %v2670 = vpow.pop %v2669
    %v2671 = vmul.f32 %v2668, 1.442695
    %v2672 = vpow.pop %v2671
    %v2673 = vadd.f32 %v2670, 1.0
    %v2674 = vadd.f32 %v2672, 1.0
    %v2675 = vrcp.pop %v2673
    %v2676 = vmul.f32 1.0, %v2675
    %v2677 = vrcp.pop %v2674
    %v2678 = vmul.f32 1.0, %v2677
    %v2679 = vtanh.pop %v2665
    %v2680 = vtanh.pop %v2666
    %v2681 = vmul.f32 %v2676, %v2566
    %v2682 = vmul.f32 %v2678, %v2567
    %2685 = vrot.lane.b32.xlu0 %v2679, 64
    %v2686 = vpop.permute.xlu0 %2685
    %2687 = vrot.lane.b32.xlu0 %v2680, 64
    %v2688 = vpop.permute.xlu0 %2687
    %v2691 = vmul.f32 %v2676, %v2686
    %v2692 = vmul.f32 %v2678, %v2688
    %2695 = vrot.lane.b32.xlu0 %v2691, 32
    %v2696 = vpop.permute.xlu0 %2695
    %2697 = vrot.lane.b32.xlu0 %v2692, 32
    %v2698 = vpop.permute.xlu0 %2697
    %v2701 = vadd.f32 %v2681, %v2696
    %v2702 = vadd.f32 %v2682, %v2698
    %v2703 = vtanh.pop %v2701
    %v2704 = vtanh.pop %v2702
    %2707 = vrot.lane.b32.xlu0 %v2703, 64
    %v2708 = vpop.permute.xlu0 %2707
    %2709 = vrot.lane.b32.xlu0 %v2704, 64
    %v2710 = vpop.permute.xlu0 %2709
    %v2713 = vmul.f32 %v2676, %v2708
    %v2714 = vmul.f32 %v2678, %v2710
    %2717 = vrot.lane.b32.xlu0 %v2714, 64
    %v2718 = vpop.permute.xlu0 %2717
    %2721 = vrot.lane.b32.xlu0 %v2713, 96
    %v2722 = vpop.permute.xlu0 %2721
    %v2724 = vsel %vm118, %v1761, %v2718
    %vm2725 = vcmask 523264
    %v2726 = vsel %vm2725, %v2724, %v2722
    %vm2727 = vcmask 785408
    %v2728 = vsel %vm2727, %v2726, %v1757
    %v2729 = vld [vmem:[%s8] sm:$0xff]
    %v2730 = vld [vmem:[%s8 + $0x8] sm:$0xff]
    %v2731 = vld [vmem:[%s8 + $0x10] sm:$0xff]
    %v2732 = vld [vmem:[%s8 + $0x18] sm:$0xff]
    %v2733 = vld [vmem:[%s8 + $0x20] sm:$0xff]
    %v2734 = vld [vmem:[%s8 + $0x28] sm:$0xff]
    %v2735 = vld [vmem:[%s8 + $0x30] sm:$0xff]
    %v2736 = vld [vmem:[%s8 + $0x38] sm:$0xff]
    %v2737 = vld [vmem:[%s8 + $0x40] sm:$0xff]
    %v2738 = vld [vmem:[%s8 + $0x48] sm:$0xff]
    %v2739 = vld [vmem:[%s8 + $0x50] sm:$0xff]
    %v2740 = vld [vmem:[%s8 + $0x58] sm:$0xff]
    %v2741 = vld [vmem:[%s8 + $0x60] sm:$0xff]
    %v2742 = vld [vmem:[%s8 + $0x68] sm:$0xff]
    %v2743 = vld [vmem:[%s8 + $0x70] sm:$0xff]
    %v2744 = vld [vmem:[%s8 + $0x78] sm:$0xff]
    %v2745 = vld [vmem:[%s9] sm:$0x1]
    %v2747 = vlaneseq
    %v2748 = vshrl.u32 %v2747, 7
    %v2749 = vsub.s32 0, %v2748
    %v2750 = vrot.slane %v2745, %v2749
    %2752 = vmatprep.subr.mxu0 0.0
    %2753 = vmatpush1.msra.mxu0 %v2744
    %2754 = vmatprep.subr.mxu0 0.0
    %2755 = vmatpush1.msra.mxu0 %v2743
    %2756 = vmatprep.subr.mxu0 0.0
    %2757 = vmatpush1.msra.mxu0 %v2742
    %2758 = vmatprep.subr.mxu0 0.0
    %2759 = vmatpush1.msra.mxu0 %v2741
    %2760 = vmatprep.subr.mxu0 0.0
    %2761 = vmatpush1.msra.mxu0 %v2740
    %2762 = vmatprep.subr.mxu0 0.0
    %2763 = vmatpush1.msra.mxu0 %v2739
    %2764 = vmatprep.subr.mxu0 0.0
    %2765 = vmatpush1.msra.mxu0 %v2738
    %2766 = vmatprep.subr.mxu0 0.0
    %2767 = vmatpush1.msra.mxu0 %v2737
    %2768 = vmatprep.subr.mxu0 0.0
    %2769 = vmatpush1.msra.mxu0 %v2736
    %2770 = vmatprep.subr.mxu0 0.0
    %2771 = vmatpush1.msra.mxu0 %v2735
    %2772 = vmatprep.subr.mxu0 0.0
    %2773 = vmatpush1.msra.mxu0 %v2734
    %2774 = vmatprep.subr.mxu0 0.0
    %2775 = vmatpush1.msra.mxu0 %v2733
    %2776 = vmatprep.subr.mxu0 0.0
    %2777 = vmatpush1.msra.mxu0 %v2732
    %2778 = vmatprep.subr.mxu0 0.0
    %2779 = vmatpush1.msra.mxu0 %v2731
    %2780 = vmatprep.subr.mxu0 0.0
    %2781 = vmatpush1.msra.mxu0 %v2730
    %2782 = vmatprep.subr.mxu0 0.0
    %2783 = vmatpush1.msra.mxu0 %v2729
    %2784 = vmatprep.subr.mxu0 0.0
    %2785 = vmatpush2.msra.mxu0 0.0
    %2786 = vmatprep.subr.mxu0 0.0
    %2787 = vmatpush2.msra.mxu0 0.0
    %2788 = vmatprep.subr.mxu0 0.0
    %2789 = vmatpush2.msra.mxu0 0.0
    %2790 = vmatprep.subr.mxu0 0.0
    %2791 = vmatpush2.msra.mxu0 0.0
    %2792 = vmatprep.subr.mxu0 0.0
    %2793 = vmatpush2.msra.mxu0 0.0
    %2794 = vmatprep.subr.mxu0 0.0
    %2795 = vmatpush2.msra.mxu0 0.0
    %2796 = vmatprep.subr.mxu0 0.0
    %2797 = vmatpush2.msra.mxu0 0.0
    %2798 = vmatprep.subr.mxu0 0.0
    %2799 = vmatpush2.msra.mxu0 0.0
    %2800 = vmatprep.subr.mxu0 0.0
    %2801 = vmatpush2.msra.mxu0 0.0
    %2802 = vmatprep.subr.mxu0 0.0
    %2803 = vmatpush2.msra.mxu0 0.0
    %2804 = vmatprep.subr.mxu0 0.0
    %2805 = vmatpush2.msra.mxu0 0.0
    %2806 = vmatprep.subr.mxu0 0.0
    %2807 = vmatpush2.msra.mxu0 0.0
    %2808 = vmatprep.subr.mxu0 0.0
    %2809 = vmatpush2.msra.mxu0 0.0
    %2810 = vmatprep.subr.mxu0 0.0
    %2811 = vmatpush2.msra.mxu0 0.0
    %2812 = vmatprep.subr.mxu0 0.0
    %2813 = vmatpush2.msra.mxu0 0.0
    %2814 = vmatprep.subr.mxu0 0.0
    %2815 = vmatpush2.msra.mxu0 0.0
    %2816 = vmatprep.mubr.f32.mxu0 0.0
    %2817 = vmatmul.mubr.f32.gmra.mxu0 %v2728
    %v2818 = vpop.f32.mrf.mxu0
    %v2819 = vadd.f32 %v2750, %v2818
    %v2820 = vpop.f32.mrf.mxu0
    %2821 = vdwg.mxu0
    %vm2822 = vcmask 15360
    %2823 = vst.msk [vmem:[%s10] sm:$0xff] %vm2822, %v2819
    // Predicated region
    $region58: #{tpu_custom_call.1} parent=1 // pred_check
      _
    $region59: #{tpu_custom_call.1} parent=1 // pred_check_branch
      %2825 = sbr.rel (0) target = $region61
    $region60: #{tpu_custom_call.1} parent=1 // pred_region
      _
    $region61: #{tpu_custom_call.1} parent=1 // pred_fallthru
      _
    // Predicated region
    $region62: #{tpu_custom_call.1} parent=1 // pred_check
      _
    $region63: #{tpu_custom_call.1} parent=1 // pred_check_branch
      %2827 = sbr.rel (0) target = $region65
    $region64: #{tpu_custom_call.1} parent=1 // pred_region
      _
    $region65: #{tpu_custom_call.1} parent=1 // pred_fallthru
      _
    %2828 = vsyncpa [#allocation6], 1
    %2829 = vsyncpa [#allocation8], 1
    %2830 = vsyncpa [#allocation11], 1

</llo_original>
